<compile_context>
chip_gen: v7x
topology: tpu7x:2x2x1
jax: 0.10.0
libtpu: 0.0.40
codegen_flags: <defaults>
</compile_context>

<pallas_src>
import functools

import jax
import jax.numpy as jnp
from jax.experimental import pallas as pl
from jax.experimental.pallas import tpu as pltpu


def _round_up(n, m):
    return ((n + m - 1) // m) * m


def _chip_kind():
    try:
        return jax.devices()[0].device_kind.lower()
    except Exception:
        return ""


def _const_spec(shape):
    """Full-array BlockSpec for an operand that is constant across the grid.
    Single-buffered when the installed JAX supports pipeline_mode."""
    index_map = lambda i: (0, 0)
    try:
        return pl.BlockSpec(shape, index_map,
                            pipeline_mode=pl.Buffered(buffer_count=1))
    except (TypeError, AttributeError):
        return pl.BlockSpec(shape, index_map)


def mlp_kernel(x_ref, w1_ref, b1_ref, w2_ref, b2_ref, w3_ref, b3_ref, o_ref,
               *, h1_chunk, act_dtype):
    # In-kernel f32 -> bf16 cast of the activations (halves x HBM traffic vs a
    # wrapper-side cast).
    xb = x_ref[...].astype(jnp.bfloat16)
    tile_m = x_ref.shape[0]
    h1_dim = w1_ref.shape[1]
    h2_dim = w2_ref.shape[1]
    n_chunks = h1_dim // h1_chunk

    # Chunked layer-1 + layer-2: never materialize the full (tile_m, h1_dim) h1.
    # Static Python loop -> static (free) ref-view slices and independent chains
    # the LLO scheduler can interleave (EUP tanh under MXU matmul).
    acc = jnp.zeros((tile_m, h2_dim), jnp.float32)
    for c in range(n_chunks):
        c0 = c * h1_chunk
        pre1 = jnp.dot(xb, w1_ref[:, c0:c0 + h1_chunk],
                       preferred_element_type=jnp.float32)
        pre1 = pre1 + b1_ref[:, c0:c0 + h1_chunk]
        h1c = jnp.tanh(pre1.astype(act_dtype)).astype(jnp.bfloat16)
        acc = acc + jnp.dot(h1c, w2_ref[c0:c0 + h1_chunk, :],
                            preferred_element_type=jnp.float32)

    # Layer 2 bias + tanh.
    h2 = jnp.tanh((acc + b2_ref[...]).astype(act_dtype))

    # Layer 3: 512 -> 1 is a degenerate matmul; use a VPU broadcast multiply +
    # lane-axis reduction (XLU) with W3 stored as a (1, 512) row.
    y = jnp.sum(h2 * w3_ref[...], axis=-1, keepdims=True) + b3_ref[...]
    o_ref[...] = y.astype(o_ref.dtype)


def dnn_forward(x, params, *, tm=512, h1_chunk=512):
    """x: (batch, n_in) float32.  params: see prepare_params (bf16 matmul weights,
    f32 biases, W3 stored as a (1, 512) row).  Returns (batch, 1) float32."""
    w1, b1, w2, b2, w3, b3 = (
        params["w1"], params["b1"], params["w2"],
        params["b2"], params["w3"], params["b3"],
    )
    batch, n_in = x.shape
    h1_dim, h2_dim = w1.shape[1], w2.shape[1]
    if h1_dim % h1_chunk != 0:
        h1_chunk = h1_dim  # fall back to a single chunk

    # Per-generation knobs: bf16 VPU/EUP exists on v6e/v7x only; VMEM budget is
    # 64 MiB/TC on v7x (keep headroom), 128 MiB on v4/v5e/v6e.
    kind = _chip_kind()
    use_bf16_act = any(t in kind for t in ("v6", "v7", "7x"))
    if any(t in kind for t in ("v4", "v5", "v6")):
        vmem_limit = 100 * 1024 * 1024
    else:
        vmem_limit = 48 * 1024 * 1024

    # Divisor-friendly batch tiling: at most 7 padded rows per tile (8-sublane
    # grain), capped at tm rows per grid step.
    n_tiles = pl.cdiv(batch, tm)
    tile_m = _round_up(pl.cdiv(batch, n_tiles), 8)
    n_tiles = pl.cdiv(batch, tile_m)
    padded = n_tiles * tile_m

    xp = x if padded == batch else jnp.pad(x, ((0, padded - batch), (0, 0)))

    kernel = functools.partial(
        mlp_kernel,
        h1_chunk=h1_chunk,
        act_dtype=jnp.bfloat16 if use_bf16_act else jnp.float32,
    )

    out = pl.pallas_call(
        kernel,
        out_shape=jax.ShapeDtypeStruct((padded, 1), jnp.float32),
        grid_spec=pltpu.PrefetchScalarGridSpec(
            num_scalar_prefetch=0,
            grid=(n_tiles,),
            in_specs=[
                pl.BlockSpec((tile_m, n_in), lambda i: (i, 0)),  # x tile (f32)
                _const_spec((n_in, h1_dim)),                     # W1 (bf16)
                _const_spec((1, h1_dim)),                        # b1 (f32)
                _const_spec((h1_dim, h2_dim)),                   # W2 (bf16)
                _const_spec((1, h2_dim)),                        # b2 (f32)
                _const_spec((1, h2_dim)),                        # W3 row (f32)
                _const_spec((1, 1)),                             # b3 (f32)
            ],
            out_specs=pl.BlockSpec((tile_m, 1), lambda i: (i, 0)),
        ),
        compiler_params=pltpu.CompilerParams(
            dimension_semantics=("parallel",),   # shard batch grid across TCs on v7x
            vmem_limit_bytes=vmem_limit,
        ),
    )(xp, w1, b1, w2, b2, w3, b3)
    return out[:batch]


def init_params(key, n_in):
    """Deterministic f32 parameters with PyTorch Linear-like init
    (uniform(-1/sqrt(fan_in), 1/sqrt(fan_in))), stored as (in, out)."""
    def linear(k, fan_in, fan_out):
        kw, kb = jax.random.split(k)
        bound = 1.0 / jnp.sqrt(jnp.float32(fan_in))
        w = jax.random.uniform(kw, (fan_in, fan_out), jnp.float32, -bound, bound)
        b = jax.random.uniform(kb, (1, fan_out), jnp.float32, -bound, bound)
        return w, b

    k1, k2, k3 = jax.random.split(key, 3)
    w1, b1 = linear(k1, n_in, 2048)
    w2, b2 = linear(k2, 2048, 512)
    w3, b3 = linear(k3, 512, 1)
    return {"w1": w1, "b1": b1, "w2": w2, "b2": b2, "w3": w3, "b3": b3}


def prepare_params(p):
    """Kernel-side layout: bf16 MXU weights (f32 accumulation in-kernel),
    f32 biases, W3 reshaped from (512, 1) to a (1, 512) row for the lane reduce."""
    return {
        "w1": p["w1"].astype(jnp.bfloat16),
        "b1": p["b1"],
        "w2": p["w2"].astype(jnp.bfloat16),
        "b2": p["b2"],
        "w3": p["w3"].reshape(1, -1),
        "b3": p["b3"],
    }


def dnn_reference_f32(x, p):
    h1 = jnp.tanh(x @ p["w1"] + p["b1"])
    h2 = jnp.tanh(h1 @ p["w2"] + p["b2"])
    return h2 @ p["w3"] + p["b3"]


def dnn_reference_mixed(x, p, use_bf16_act):
    """Plain-JAX reference matching the kernel's mixed precision."""
    xb = x.astype(jnp.bfloat16)
    w1 = p["w1"].astype(jnp.bfloat16)
    w2 = p["w2"].astype(jnp.bfloat16)
    pre1 = jnp.dot(xb, w1, preferred_element_type=jnp.float32) + p["b1"]
    if use_bf16_act:
        h1 = jnp.tanh(pre1.astype(jnp.bfloat16))
    else:
        h1 = jnp.tanh(pre1).astype(jnp.bfloat16)
    pre2 = jnp.dot(h1, w2, preferred_element_type=jnp.float32) + p["b2"]
    h2 = jnp.tanh(pre2.astype(jnp.bfloat16)) if use_bf16_act else jnp.tanh(pre2)
    y = jnp.sum(h2.astype(jnp.float32) * p["w3"].reshape(1, -1),
                axis=-1, keepdims=True) + p["b3"]
    return y


if __name__ == "__main__":
    key = jax.random.PRNGKey(0)
    k_param, k_x1, k_x2 = jax.random.split(key, 3)

    n_in = 32
    params_f32 = init_params(k_param, n_in)
    params = prepare_params(params_f32)
    use_bf16_act = any(t in _chip_kind() for t in ("v6", "v7", "7x"))

    # Case 1: small, non-multiple-of-8 batch (single grid step + padding path).
    x_small = jax.random.normal(k_x1, (10, n_in), jnp.float32)
    out_small = jax.block_until_ready(dnn_forward(x_small, params))
    assert out_small.shape == (10, 1)
    ref_m = dnn_reference_mixed(x_small, params_f32, use_bf16_act)
    ref_f = dnn_reference_f32(x_small, params_f32)
    assert jnp.allclose(out_small, ref_m, atol=1e-2, rtol=1e-2), \
        "small batch: mismatch vs mixed-precision reference"
    assert jnp.allclose(out_small, ref_f, atol=5e-2, rtol=5e-2), \
        "small batch: mismatch vs f32 reference"

    # Case 2: ragged multi-tile batch (exercises divisor-friendly tiling and the
    # multi-step pipelined grid).
    x_big = jax.random.normal(k_x2, (700, n_in), jnp.float32)
    out_big = jax.block_until_ready(dnn_forward(x_big, params))
    assert out_big.shape == (700, 1)
    ref_m2 = dnn_reference_mixed(x_big, params_f32, use_bf16_act)
    ref_f2 = dnn_reference_f32(x_big, params_f32)
    assert jnp.allclose(out_big, ref_m2, atol=1e-2, rtol=1e-2), \
        "multi-tile batch: mismatch vs mixed-precision reference"
    assert jnp.allclose(out_big, ref_f2, atol=5e-2, rtol=5e-2), \
        "multi-tile batch: mismatch vs f32 reference"

    print("KERNEL_OK")
</pallas_src>

<mosaic_0001>
module attributes {stable_mosaic.version = 11 : i64} {
  func.func @mlp_kernel(%arg0: i32, %arg1: memref<16x32xf32, #tpu.memory_space<vmem>>, %arg2: memref<32x2048xbf16, #tpu.memory_space<vmem>>, %arg3: memref<1x2048xf32, #tpu.memory_space<vmem>>, %arg4: memref<2048x512xbf16, #tpu.memory_space<vmem>>, %arg5: memref<1x512xf32, #tpu.memory_space<vmem>>, %arg6: memref<1x512xf32, #tpu.memory_space<vmem>>, %arg7: memref<1x1xf32, #tpu.memory_space<vmem>>, %arg8: memref<16x1xf32, #tpu.memory_space<vmem>>) attributes {dimension_semantics = [#tpu.dimension_semantics<parallel>], iteration_bounds = array<i64: 1>, scalar_prefetch = 0 : i64, scratch_operands = 0 : i64, tpu.core_type = #tpu.core_type<tc>, window_params = [{transform_indices = @transform_0, window_bounds = array<i64: 16, 32>}, {pipeline_mode = #tpu.pipeline_mode<synchronous>, transform_indices = @transform_1, window_bounds = array<i64: 32, 2048>}, {pipeline_mode = #tpu.pipeline_mode<synchronous>, transform_indices = @transform_2, window_bounds = array<i64: 1, 2048>}, {pipeline_mode = #tpu.pipeline_mode<synchronous>, transform_indices = @transform_3, window_bounds = array<i64: 2048, 512>}, {pipeline_mode = #tpu.pipeline_mode<synchronous>, transform_indices = @transform_4, window_bounds = array<i64: 1, 512>}, {pipeline_mode = #tpu.pipeline_mode<synchronous>, transform_indices = @transform_5, window_bounds = array<i64: 1, 512>}, {pipeline_mode = #tpu.pipeline_mode<synchronous>, transform_indices = @transform_6, window_bounds = array<i64: 1, 1>}, {transform_indices = @transform_7, window_bounds = array<i64: 16, 1>}]} {
    %c0 = arith.constant 0 : index
    %c0_0 = arith.constant 0 : index
    %0 = vector.load %arg1[%c0, %c0_0] : memref<16x32xf32, #tpu.memory_space<vmem>>, vector<16x32xf32>
    %1 = arith.truncf %0 : vector<16x32xf32> to vector<16x32xbf16>
    %cst = arith.constant 0.000000e+00 : f32
    %2 = vector.broadcast %cst : f32 to vector<16x512xf32>
    %c0_1 = arith.constant 0 : index
    %c0_2 = arith.constant 0 : index
    %3 = vector.load %arg2[%c0_1, %c0_2] : memref<32x2048xbf16, #tpu.memory_space<vmem>>, vector<32x512xbf16>
    %cst_3 = arith.constant dense<0.000000e+00> : vector<16x512xf32>
    %4 = tpu.matmul %1, %3, %cst_3 {dimension_numbers = #tpu.dot_dimension_numbers<[1], [0], [0], [1], [0, 0, 1, 1], [], []>} : vector<16x32xbf16>, vector<32x512xbf16>, vector<16x512xf32> -> vector<16x512xf32>
    %c0_4 = arith.constant 0 : index
    %c0_5 = arith.constant 0 : index
    %5 = vector.load %arg3[%c0_4, %c0_5] : memref<1x2048xf32, #tpu.memory_space<vmem>>, vector<1x512xf32>
    %6 = vector.broadcast %5 : vector<1x512xf32> to vector<16x512xf32>
    %7 = arith.addf %4, %6 : vector<16x512xf32>
    %8 = math.tanh %7 : vector<16x512xf32>
    %9 = arith.truncf %8 : vector<16x512xf32> to vector<16x512xbf16>
    %c0_6 = arith.constant 0 : index
    %c0_7 = arith.constant 0 : index
    %10 = vector.load %arg4[%c0_6, %c0_7] : memref<2048x512xbf16, #tpu.memory_space<vmem>>, vector<512x512xbf16>
    %cst_8 = arith.constant dense<0.000000e+00> : vector<16x512xf32>
    %11 = tpu.matmul %9, %10, %cst_8 {dimension_numbers = #tpu.dot_dimension_numbers<[1], [0], [0], [1], [0, 0, 1, 1], [], []>} : vector<16x512xbf16>, vector<512x512xbf16>, vector<16x512xf32> -> vector<16x512xf32>
    %12 = arith.addf %2, %11 : vector<16x512xf32>
    %c0_9 = arith.constant 0 : index
    %c512 = arith.constant 512 : index
    %13 = vector.load %arg2[%c0_9, %c512] : memref<32x2048xbf16, #tpu.memory_space<vmem>>, vector<32x512xbf16>
    %cst_10 = arith.constant dense<0.000000e+00> : vector<16x512xf32>
    %14 = tpu.matmul %1, %13, %cst_10 {dimension_numbers = #tpu.dot_dimension_numbers<[1], [0], [0], [1], [0, 0, 1, 1], [], []>} : vector<16x32xbf16>, vector<32x512xbf16>, vector<16x512xf32> -> vector<16x512xf32>
    %c0_11 = arith.constant 0 : index
    %c512_12 = arith.constant 512 : index
    %15 = vector.load %arg3[%c0_11, %c512_12] : memref<1x2048xf32, #tpu.memory_space<vmem>>, vector<1x512xf32>
    %16 = vector.broadcast %15 : vector<1x512xf32> to vector<16x512xf32>
    %17 = arith.addf %14, %16 : vector<16x512xf32>
    %18 = math.tanh %17 : vector<16x512xf32>
    %19 = arith.truncf %18 : vector<16x512xf32> to vector<16x512xbf16>
    %c512_13 = arith.constant 512 : index
    %c0_14 = arith.constant 0 : index
    %20 = vector.load %arg4[%c512_13, %c0_14] : memref<2048x512xbf16, #tpu.memory_space<vmem>>, vector<512x512xbf16>
    %cst_15 = arith.constant dense<0.000000e+00> : vector<16x512xf32>
    %21 = tpu.matmul %19, %20, %cst_15 {dimension_numbers = #tpu.dot_dimension_numbers<[1], [0], [0], [1], [0, 0, 1, 1], [], []>} : vector<16x512xbf16>, vector<512x512xbf16>, vector<16x512xf32> -> vector<16x512xf32>
    %22 = arith.addf %12, %21 : vector<16x512xf32>
    %c0_16 = arith.constant 0 : index
    %c1024 = arith.constant 1024 : index
    %23 = vector.load %arg2[%c0_16, %c1024] : memref<32x2048xbf16, #tpu.memory_space<vmem>>, vector<32x512xbf16>
    %cst_17 = arith.constant dense<0.000000e+00> : vector<16x512xf32>
    %24 = tpu.matmul %1, %23, %cst_17 {dimension_numbers = #tpu.dot_dimension_numbers<[1], [0], [0], [1], [0, 0, 1, 1], [], []>} : vector<16x32xbf16>, vector<32x512xbf16>, vector<16x512xf32> -> vector<16x512xf32>
    %c0_18 = arith.constant 0 : index
    %c1024_19 = arith.constant 1024 : index
    %25 = vector.load %arg3[%c0_18, %c1024_19] : memref<1x2048xf32, #tpu.memory_space<vmem>>, vector<1x512xf32>
    %26 = vector.broadcast %25 : vector<1x512xf32> to vector<16x512xf32>
    %27 = arith.addf %24, %26 : vector<16x512xf32>
    %28 = math.tanh %27 : vector<16x512xf32>
    %29 = arith.truncf %28 : vector<16x512xf32> to vector<16x512xbf16>
    %c1024_20 = arith.constant 1024 : index
    %c0_21 = arith.constant 0 : index
    %30 = vector.load %arg4[%c1024_20, %c0_21] : memref<2048x512xbf16, #tpu.memory_space<vmem>>, vector<512x512xbf16>
    %cst_22 = arith.constant dense<0.000000e+00> : vector<16x512xf32>
    %31 = tpu.matmul %29, %30, %cst_22 {dimension_numbers = #tpu.dot_dimension_numbers<[1], [0], [0], [1], [0, 0, 1, 1], [], []>} : vector<16x512xbf16>, vector<512x512xbf16>, vector<16x512xf32> -> vector<16x512xf32>
    %32 = arith.addf %22, %31 : vector<16x512xf32>
    %c0_23 = arith.constant 0 : index
    %c1536 = arith.constant 1536 : index
    %33 = vector.load %arg2[%c0_23, %c1536] : memref<32x2048xbf16, #tpu.memory_space<vmem>>, vector<32x512xbf16>
    %cst_24 = arith.constant dense<0.000000e+00> : vector<16x512xf32>
    %34 = tpu.matmul %1, %33, %cst_24 {dimension_numbers = #tpu.dot_dimension_numbers<[1], [0], [0], [1], [0, 0, 1, 1], [], []>} : vector<16x32xbf16>, vector<32x512xbf16>, vector<16x512xf32> -> vector<16x512xf32>
    %c0_25 = arith.constant 0 : index
    %c1536_26 = arith.constant 1536 : index
    %35 = vector.load %arg3[%c0_25, %c1536_26] : memref<1x2048xf32, #tpu.memory_space<vmem>>, vector<1x512xf32>
    %36 = vector.broadcast %35 : vector<1x512xf32> to vector<16x512xf32>
    %37 = arith.addf %34, %36 : vector<16x512xf32>
    %38 = math.tanh %37 : vector<16x512xf32>
    %39 = arith.truncf %38 : vector<16x512xf32> to vector<16x512xbf16>
    %c1536_27 = arith.constant 1536 : index
    %c0_28 = arith.constant 0 : index
    %40 = vector.load %arg4[%c1536_27, %c0_28] : memref<2048x512xbf16, #tpu.memory_space<vmem>>, vector<512x512xbf16>
    %cst_29 = arith.constant dense<0.000000e+00> : vector<16x512xf32>
    %41 = tpu.matmul %39, %40, %cst_29 {dimension_numbers = #tpu.dot_dimension_numbers<[1], [0], [0], [1], [0, 0, 1, 1], [], []>} : vector<16x512xbf16>, vector<512x512xbf16>, vector<16x512xf32> -> vector<16x512xf32>
    %42 = arith.addf %32, %41 : vector<16x512xf32>
    %c0_30 = arith.constant 0 : index
    %c0_31 = arith.constant 0 : index
    %43 = vector.load %arg5[%c0_30, %c0_31] : memref<1x512xf32, #tpu.memory_space<vmem>>, vector<1x512xf32>
    %44 = vector.broadcast %43 : vector<1x512xf32> to vector<16x512xf32>
    %45 = arith.addf %42, %44 : vector<16x512xf32>
    %46 = math.tanh %45 : vector<16x512xf32>
    %c0_32 = arith.constant 0 : index
    %c0_33 = arith.constant 0 : index
    %47 = vector.load %arg6[%c0_32, %c0_33] : memref<1x512xf32, #tpu.memory_space<vmem>>, vector<1x512xf32>
    %48 = vector.broadcast %47 : vector<1x512xf32> to vector<16x512xf32>
    %49 = arith.mulf %46, %48 : vector<16x512xf32>
    %cst_34 = arith.constant dense<0.000000e+00> : vector<16xf32>
    %50 = vector.multi_reduction <add>, %49, %cst_34 [1] : vector<16x512xf32> to vector<16xf32>
    %51 = vector.shape_cast %50 : vector<16xf32> to vector<16x1xf32>
    %c0_35 = arith.constant 0 : index
    %c0_36 = arith.constant 0 : index
    %52 = vector.load %arg7[%c0_35, %c0_36] : memref<1x1xf32, #tpu.memory_space<vmem>>, vector<1x1xf32>
    %53 = vector.broadcast %52 : vector<1x1xf32> to vector<16x1xf32>
    %54 = arith.addf %51, %53 : vector<16x1xf32>
    %c0_37 = arith.constant 0 : index
    %c0_38 = arith.constant 0 : index
    %55 = vector.load %arg8[%c0_37, %c0_38] : memref<16x1xf32, #tpu.memory_space<vmem>>, vector<16x1xf32>
    tpu.vector_store %arg8[%c0_37, %c0_38], %54 {strides = array<i32>} : memref<16x1xf32, #tpu.memory_space<vmem>>, vector<16x1xf32>,
    return
  }
  func.func @transform_0(%arg0: i32) -> (i32, i32) {
    %c0_i32 = arith.constant 0 : i32
    %c0_i32_0 = arith.constant 0 : i32
    return %arg0, %c0_i32 : i32, i32
  }
  func.func @transform_1(%arg0: i32) -> (i32, i32) {
    %c0_i32 = arith.constant 0 : i32
    %c0_i32_0 = arith.constant 0 : i32
    %c0_i32_1 = arith.constant 0 : i32
    return %c0_i32, %c0_i32_0 : i32, i32
  }
  func.func @transform_2(%arg0: i32) -> (i32, i32) {
    %c0_i32 = arith.constant 0 : i32
    %c0_i32_0 = arith.constant 0 : i32
    %c0_i32_1 = arith.constant 0 : i32
    return %c0_i32, %c0_i32_0 : i32, i32
  }
  func.func @transform_3(%arg0: i32) -> (i32, i32) {
    %c0_i32 = arith.constant 0 : i32
    %c0_i32_0 = arith.constant 0 : i32
    %c0_i32_1 = arith.constant 0 : i32
    return %c0_i32, %c0_i32_0 : i32, i32
  }
  func.func @transform_4(%arg0: i32) -> (i32, i32) {
    %c0_i32 = arith.constant 0 : i32
    %c0_i32_0 = arith.constant 0 : i32
    %c0_i32_1 = arith.constant 0 : i32
    return %c0_i32, %c0_i32_0 : i32, i32
  }
  func.func @transform_5(%arg0: i32) -> (i32, i32) {
    %c0_i32 = arith.constant 0 : i32
    %c0_i32_0 = arith.constant 0 : i32
    %c0_i32_1 = arith.constant 0 : i32
    return %c0_i32, %c0_i32_0 : i32, i32
  }
  func.func @transform_6(%arg0: i32) -> (i32, i32) {
    %c0_i32 = arith.constant 0 : i32
    %c0_i32_0 = arith.constant 0 : i32
    %c0_i32_1 = arith.constant 0 : i32
    return %c0_i32, %c0_i32_0 : i32, i32
  }
  func.func @transform_7(%arg0: i32) -> (i32, i32) {
    %c0_i32 = arith.constant 0 : i32
    %c0_i32_0 = arith.constant 0 : i32
    return %arg0, %c0_i32 : i32, i32
  }
}

</mosaic_0001>

<llo_original>
// kernel: tpu_custom_call.1
$region0: #{tpu_custom_call.1}
  #allocation0 [shape = 'u32[]', space=smem, size = 0x4, offset = 0x4, fixed_abs, tag = 'smem constant byte address 0x4 - core index']
  #allocation1 [shape = 'u32[144,128]{1,0:T(1,128)}', space=vmem, size = 0x12000, scoped, tag = 'internal scratch']
  #allocation2 [shape = 'f32[1,1]{1,0:T(1,128)S(1)}', space=vmem, size = 0x200, scoped, tag = 'scoped memory for tpu_custom_call.1']
  %s0 = inlined_call_operand.hbm [shape: f32[16,32], index: 0, kind: input, shape index: {}]
  %s1 = inlined_call_operand.hbm [shape: bf16[32,2048], index: 1, kind: input, shape index: {}]
  %s2 = inlined_call_operand.hbm [shape: f32[1,2048], index: 2, kind: input, shape index: {}]
  %s3 = inlined_call_operand.hbm [shape: bf16[2048,512], index: 3, kind: input, shape index: {}]
  %s4 = inlined_call_operand.hbm [shape: f32[1,512], index: 4, kind: input, shape index: {}]
  %s5 = inlined_call_operand.hbm [shape: f32[1,512], index: 5, kind: input, shape index: {}]
  %s6 = inlined_call_operand.<no memory space> [shape: f32[1,1], index: 6, kind: input, shape index: {}]
  %s7 = inlined_call_operand.vmem [shape: f32[16,1], index: 7, kind: output, shape index: {}]
  %s8 = sld [smem:[#allocation0]]
  $region62: #{tpu_custom_call.1} parent=0
    _
  %s10 = ssub.s32 1, %s8
  %s11 = scalar_select 0, %s10, %s8
  %v12 = vstv %s6
  %13 = vst [vmem:[#allocation2] sm:$0x1] %v12
  $region1: #{tpu_custom_call.1} parent=0
    #allocation3 [shape = 'u8[8192]{0}', space=vmem, size = 0x2000, scoped, tag = 'input window, operand 0, single buffered']
    #allocation4 [shape = 's32[1]{0}', space=sflag, size = 0x4, scoped, tag = 'scoped memory for tpu_custom_call.1']
    #allocation5 [shape = 'u8[131072]{0}', space=vmem, size = 0x20000, scoped, tag = 'input window, operand 1, single buffered']
    #allocation6 [shape = 's32[1]{0}', space=sflag, size = 0x4, scoped, tag = 'scoped memory for tpu_custom_call.1']
    #allocation7 [shape = 'u8[8192]{0}', space=vmem, size = 0x2000, scoped, tag = 'input window, operand 2, single buffered']
    #allocation8 [shape = 'u8[2097152]{0}', space=vmem, size = 0x200000, scoped, tag = 'input window, operand 3, single buffered']
    #allocation9 [shape = 's32[1]{0}', space=sflag, size = 0x4, scoped, tag = 'scoped memory for tpu_custom_call.1']
    #allocation10 [shape = 'u8[2048]{0}', space=vmem, size = 0x800, scoped, tag = 'input window, operand 4, single buffered']
    #allocation11 [shape = 'u8[2048]{0}', space=vmem, size = 0x800, scoped, tag = 'input window, operand 5, single buffered']
    #allocation12 [shape = 's32[1]{0}', space=sflag, size = 0x4, scoped, tag = 'scoped memory for tpu_custom_call.1']
    %14 = vsyncpa [#allocation4], 0
    %15 = vsyncpa [#allocation6], 0
    %16 = vsyncpa [#allocation9], 0
    %17 = vsyncpa [#allocation12], 0
    // Predicated region
    $region2: #{tpu_custom_call.1} parent=1 // pred_check
      _
    $region3: #{tpu_custom_call.1} parent=1 // pred_check_branch
      %19 = sbr.rel (0) target = $region5
    $region4: #{tpu_custom_call.1} parent=1 // pred_region
      %s21 = ssub.s32 256, 256
      %22 = vsyncadd [#allocation4], %s21
      %s23 = sshll.u32 [#allocation3], 4
      %s24 = int_to_ptr.vmem [resolvable:$true] %s23
      %29 = dma.hbm_to_vmem [thread:$0]  %s0, 256, %s24, [#allocation4], 128, 128, 8
    $region5: #{tpu_custom_call.1} parent=1 // pred_fallthru
      _
    // Predicated region
    $region6: #{tpu_custom_call.1} parent=1 // pred_check
      _
    $region7: #{tpu_custom_call.1} parent=1 // pred_check_branch
      %31 = sbr.rel (0) target = $region9
    $region8: #{tpu_custom_call.1} parent=1 // pred_region
      %s33 = ssub.s32 4096, 4096
      %34 = vsyncadd [#allocation6], %s33
      %s35 = sshll.u32 [#allocation5], 4
      %s36 = int_to_ptr.vmem [resolvable:$true] %s35
      %41 = dma.hbm_to_vmem [thread:$0]  %s1, 4096, %s36, [#allocation6], 1024, 1024, 64
    $region9: #{tpu_custom_call.1} parent=1 // pred_fallthru
      _
    // Predicated region
    $region10: #{tpu_custom_call.1} parent=1 // pred_check
      _
    $region11: #{tpu_custom_call.1} parent=1 // pred_check_branch
      %43 = sbr.rel (0) target = $region13
    $region12: #{tpu_custom_call.1} parent=1 // pred_region
      %s45 = ssub.s32 256, 256
      %46 = vsyncadd [#allocation6], %s45
      %s48 = sshll.u32 [#allocation7], 4
      %s49 = int_to_ptr.vmem [resolvable:$true] %s48
      %51 = dma.hbm_to_vmem [thread:$0]  %s2, 256, %s49, [#allocation6]
    $region13: #{tpu_custom_call.1} parent=1 // pred_fallthru
      _
    // Predicated region
    $region14: #{tpu_custom_call.1} parent=1 // pred_check
      _
    $region15: #{tpu_custom_call.1} parent=1 // pred_check_branch
      %53 = sbr.rel (0) target = $region17
    $region16: #{tpu_custom_call.1} parent=1 // pred_region
      %s55 = ssub.s32 65536, 65536
      %56 = vsyncadd [#allocation9], %s55
      %s57 = sshll.u32 [#allocation8], 4
      %s58 = int_to_ptr.vmem [resolvable:$true] %s57
      %63 = dma.hbm_to_vmem [thread:$0]  %s3, 65536, %s58, [#allocation9], 256, 256, 16
    $region17: #{tpu_custom_call.1} parent=1 // pred_fallthru
      _
    // Predicated region
    $region18: #{tpu_custom_call.1} parent=1 // pred_check
      _
    $region19: #{tpu_custom_call.1} parent=1 // pred_check_branch
      %65 = sbr.rel (0) target = $region21
    $region20: #{tpu_custom_call.1} parent=1 // pred_region
      %s67 = ssub.s32 64, 64
      %68 = vsyncadd [#allocation9], %s67
      %s70 = sshll.u32 [#allocation10], 4
      %s71 = int_to_ptr.vmem [resolvable:$true] %s70
      %73 = dma.hbm_to_vmem [thread:$0]  %s4, 64, %s71, [#allocation9]
    $region21: #{tpu_custom_call.1} parent=1 // pred_fallthru
      _
    // Predicated region
    $region22: #{tpu_custom_call.1} parent=1 // pred_check
      _
    $region23: #{tpu_custom_call.1} parent=1 // pred_check_branch
      %75 = sbr.rel (0) target = $region25
    $region24: #{tpu_custom_call.1} parent=1 // pred_region
      %s77 = ssub.s32 64, 64
      %78 = vsyncadd [#allocation12], %s77
      %s80 = sshll.u32 [#allocation11], 4
      %s81 = int_to_ptr.vmem [resolvable:$true] %s80
      %83 = dma.hbm_to_vmem [thread:$0]  %s5, 64, %s81, [#allocation12]
    $region25: #{tpu_custom_call.1} parent=1 // pred_fallthru
      _
    // Predicated region
    $region26: #{tpu_custom_call.1} parent=1 // pred_check
      _
    $region27: #{tpu_custom_call.1} parent=1 // pred_check_branch
      %85 = sbr.rel (0) target = $region29
    $region28: #{tpu_custom_call.1} parent=1 // pred_region
      _
    $region29: #{tpu_custom_call.1} parent=1 // pred_fallthru
      _
    // Predicated region
    $region30: #{tpu_custom_call.1} parent=1 // pred_check
      _
    $region31: #{tpu_custom_call.1} parent=1 // pred_check_branch
      %87 = sbr.rel (0) target = $region33
    $region32: #{tpu_custom_call.1} parent=1 // pred_region
      %88 = dma.done [#allocation4], 256
    $region33: #{tpu_custom_call.1} parent=1 // pred_fallthru
      _
    // Predicated region
    $region34: #{tpu_custom_call.1} parent=1 // pred_check
      _
    $region35: #{tpu_custom_call.1} parent=1 // pred_check_branch
      %90 = sbr.rel (0) target = $region37
    $region36: #{tpu_custom_call.1} parent=1 // pred_region
      %91 = dma.done [#allocation6], 4096
    $region37: #{tpu_custom_call.1} parent=1 // pred_fallthru
      _
    // Predicated region
    $region38: #{tpu_custom_call.1} parent=1 // pred_check
      _
    $region39: #{tpu_custom_call.1} parent=1 // pred_check_branch
      %93 = sbr.rel (0) target = $region41
    $region40: #{tpu_custom_call.1} parent=1 // pred_region
      %94 = dma.done [#allocation6], 256
    $region41: #{tpu_custom_call.1} parent=1 // pred_fallthru
      _
    // Predicated region
    $region42: #{tpu_custom_call.1} parent=1 // pred_check
      _
    $region43: #{tpu_custom_call.1} parent=1 // pred_check_branch
      %96 = sbr.rel (0) target = $region45
    $region44: #{tpu_custom_call.1} parent=1 // pred_region
      %97 = dma.done [#allocation9], 65536
    $region45: #{tpu_custom_call.1} parent=1 // pred_fallthru
      _
    // Predicated region
    $region46: #{tpu_custom_call.1} parent=1 // pred_check
      _
    $region47: #{tpu_custom_call.1} parent=1 // pred_check_branch
      %99 = sbr.rel (0) target = $region49
    $region48: #{tpu_custom_call.1} parent=1 // pred_region
      %100 = dma.done [#allocation9], 64
    $region49: #{tpu_custom_call.1} parent=1 // pred_fallthru
      _
    // Predicated region
    $region50: #{tpu_custom_call.1} parent=1 // pred_check
      _
    $region51: #{tpu_custom_call.1} parent=1 // pred_check_branch
      %102 = sbr.rel (0) target = $region53
    $region52: #{tpu_custom_call.1} parent=1 // pred_region
      %103 = dma.done [#allocation12], 64
    $region53: #{tpu_custom_call.1} parent=1 // pred_fallthru
      _
    %v105 = vld [vmem:[#allocation3] sm:$0xff]
    %v106 = vld [vmem:[#allocation3 + $0x8] sm:$0xff]
    %v107 = vpack.c.bf16 %v106, %v105
    %v108 = vld [vmem:[#allocation5] sm:$0xff]
    %v109 = vld [vmem:[#allocation5 + $0x8] sm:$0xff]
    %v110 = vld [vmem:[#allocation5 + $0x40] sm:$0xff]
    %v111 = vld [vmem:[#allocation5 + $0x48] sm:$0xff]
    %v112 = vld [vmem:[#allocation5 + $0x80] sm:$0xff]
    %v113 = vld [vmem:[#allocation5 + $0x88] sm:$0xff]
    %v114 = vld [vmem:[#allocation5 + $0xc0] sm:$0xff]
    %v115 = vld [vmem:[#allocation5 + $0xc8] sm:$0xff]
    %v116 = vld [vmem:[#allocation7] sm:$0xf]
    %v118 = vlaneseq
    %v119 = vshrl.u32 %v118, 7
    %v120 = vsub.s32 0, %v119
    %v121 = vrot.slane %v116, %v120
    %v122 = vlaneseq
    %v123 = vshrl.u32 %v122, 7
    %v124 = vsub.s32 1, %v123
    %v125 = vrot.slane %v116, %v124
    %v126 = vlaneseq
    %v127 = vshrl.u32 %v126, 7
    %v128 = vsub.s32 2, %v127
    %v129 = vrot.slane %v116, %v128
    %v130 = vlaneseq
    %v131 = vshrl.u32 %v130, 7
    %v132 = vsub.s32 3, %v131
    %v133 = vrot.slane %v116, %v132
    %v146 = vunpack.c.l.b16 %v108
    %v147 = vunpack.c.h.b16 %v108
    %v148 = vunpack.c.l.b16 %v109
    %v149 = vunpack.c.h.b16 %v109
    %v150 = vunpack.c.l.b16 %v110
    %v151 = vunpack.c.h.b16 %v110
    %v152 = vunpack.c.l.b16 %v111
    %v153 = vunpack.c.h.b16 %v111
    %v154 = vunpack.c.l.b16 %v112
    %v155 = vunpack.c.h.b16 %v112
    %v156 = vunpack.c.l.b16 %v113
    %v157 = vunpack.c.h.b16 %v113
    %v158 = vunpack.c.l.b16 %v114
    %v159 = vunpack.c.h.b16 %v114
    %v160 = vunpack.c.l.b16 %v115
    %v161 = vunpack.c.h.b16 %v115
    %v162 = vpack.c.b16 %v150, %v146
    %v163 = vpack.c.b16 %v151, %v147
    %v164 = vpack.c.b16 %v152, %v148
    %v165 = vpack.c.b16 %v153, %v149
    %v166 = vpack.c.b16 %v158, %v154
    %v167 = vpack.c.b16 %v159, %v155
    %v168 = vpack.c.b16 %v160, %v156
    %v169 = vpack.c.b16 %v161, %v157
    %vm178 = vcmask 261120
    %v180 = vsel %vm178, %v107, 0
    %182 = vmatprep.subr.bf16.mxu0 %v163
    %183 = vmatpush1.bf16.msra.mxu0 %v162
    %184 = vmatprep.subr.bf16.mxu0 %v167
    %185 = vmatpush1.bf16.msra.mxu0 %v166
    %186 = vmatprep.subr.bf16.mxu0 0
    %187 = vmatpush1.bf16.msra.mxu0 0
    %188 = vmatprep.subr.bf16.mxu0 0
    %189 = vmatpush1.bf16.msra.mxu0 0
    %190 = vmatprep.subr.bf16.mxu0 0
    %191 = vmatpush1.bf16.msra.mxu0 0
    %192 = vmatprep.subr.bf16.mxu0 0
    %193 = vmatpush1.bf16.msra.mxu0 0
    %194 = vmatprep.subr.bf16.mxu0 0
    %195 = vmatpush1.bf16.msra.mxu0 0
    %196 = vmatprep.subr.bf16.mxu0 0
    %197 = vmatpush1.bf16.msra.mxu0 0
    %198 = vmatprep.subr.bf16.mxu0 0
    %199 = vmatpush1.bf16.msra.mxu0 0
    %200 = vmatprep.subr.bf16.mxu0 0
    %201 = vmatpush1.bf16.msra.mxu0 0
    %202 = vmatprep.subr.bf16.mxu0 0
    %203 = vmatpush1.bf16.msra.mxu0 0
    %204 = vmatprep.subr.bf16.mxu0 0
    %205 = vmatpush1.bf16.msra.mxu0 0
    %206 = vmatprep.subr.bf16.mxu0 0
    %207 = vmatpush1.bf16.msra.mxu0 0
    %208 = vmatprep.subr.bf16.mxu0 0
    %209 = vmatpush1.bf16.msra.mxu0 0
    %210 = vmatprep.subr.bf16.mxu0 0
    %211 = vmatpush1.bf16.msra.mxu0 0
    %212 = vmatprep.subr.bf16.mxu0 0
    %213 = vmatpush1.bf16.msra.mxu0 0
    %214 = vmatprep.mubr.bf16.mxu0 0
    %215 = vmatmul.mubr.bf16.gmra.mrb[0].mxu0 %v180
    %v216 = vpop.f32.mrb[0].mxu0
    %v217 = vadd.f32 %v121, %v216
    %v218 = vpop.f32.mrb[0].mxu0
    %v219 = vadd.f32 %v125, %v218
    %v220 = vpop.f32.mrb[0].mxu0
    %v221 = vadd.f32 %v121, %v220
    %v222 = vpop.f32.mrb[0].mxu0
    %v223 = vadd.f32 %v125, %v222
    %224 = vdwg.mxu0
    %225 = vmatprep.subr.bf16.mxu0 %v165
    %226 = vmatpush1.bf16.msra.mxu0 %v164
    %227 = vmatprep.subr.bf16.mxu0 %v169
    %228 = vmatpush1.bf16.msra.mxu0 %v168
    %229 = vmatprep.subr.bf16.mxu0 0
    %230 = vmatpush1.bf16.msra.mxu0 0
    %231 = vmatprep.subr.bf16.mxu0 0
    %232 = vmatpush1.bf16.msra.mxu0 0
    %233 = vmatprep.subr.bf16.mxu0 0
    %234 = vmatpush1.bf16.msra.mxu0 0
    %235 = vmatprep.subr.bf16.mxu0 0
    %236 = vmatpush1.bf16.msra.mxu0 0
    %237 = vmatprep.subr.bf16.mxu0 0
    %238 = vmatpush1.bf16.msra.mxu0 0
    %239 = vmatprep.subr.bf16.mxu0 0
    %240 = vmatpush1.bf16.msra.mxu0 0
    %241 = vmatprep.subr.bf16.mxu0 0
    %242 = vmatpush1.bf16.msra.mxu0 0
    %243 = vmatprep.subr.bf16.mxu0 0
    %244 = vmatpush1.bf16.msra.mxu0 0
    %245 = vmatprep.subr.bf16.mxu0 0
    %246 = vmatpush1.bf16.msra.mxu0 0
    %247 = vmatprep.subr.bf16.mxu0 0
    %248 = vmatpush1.bf16.msra.mxu0 0
    %249 = vmatprep.subr.bf16.mxu0 0
    %250 = vmatpush1.bf16.msra.mxu0 0
    %251 = vmatprep.subr.bf16.mxu0 0
    %252 = vmatpush1.bf16.msra.mxu0 0
    %253 = vmatprep.subr.bf16.mxu0 0
    %254 = vmatpush1.bf16.msra.mxu0 0
    %255 = vmatprep.subr.bf16.mxu0 0
    %256 = vmatpush1.bf16.msra.mxu0 0
    %257 = vmatprep.mubr.bf16.mxu0 0
    %258 = vmatmul.mubr.bf16.gmra.mrb[0].mxu0 %v180
    %v259 = vpop.f32.mrb[0].mxu0
    %v260 = vadd.f32 %v129, %v259
    %v261 = vpop.f32.mrb[0].mxu0
    %v262 = vadd.f32 %v133, %v261
    %v263 = vpop.f32.mrb[0].mxu0
    %v264 = vadd.f32 %v129, %v263
    %v265 = vpop.f32.mrb[0].mxu0
    %v266 = vadd.f32 %v133, %v265
    %267 = vdwg.mxu0
    %v268 = vtanh.pop %v217
    %v269 = vtanh.pop %v219
    %v270 = vtanh.pop %v260
    %v271 = vtanh.pop %v262
    %v272 = vtanh.pop %v221
    %v273 = vtanh.pop %v223
    %v274 = vtanh.pop %v264
    %v275 = vtanh.pop %v266
    %v276 = vpack.c.bf16 %v272, %v268
    %v277 = vpack.c.bf16 %v273, %v269
    %v278 = vpack.c.bf16 %v274, %v270
    %v279 = vpack.c.bf16 %v275, %v271
    %v280 = vld [vmem:[#allocation8] sm:$0xff]
    %v281 = vld [vmem:[#allocation8 + $0x8] sm:$0xff]
    %v282 = vld [vmem:[#allocation8 + $0x10] sm:$0xff]
    %v283 = vld [vmem:[#allocation8 + $0x18] sm:$0xff]
    %v284 = vld [vmem:[#allocation8 + $0x20] sm:$0xff]
    %v285 = vld [vmem:[#allocation8 + $0x28] sm:$0xff]
    %v286 = vld [vmem:[#allocation8 + $0x30] sm:$0xff]
    %v287 = vld [vmem:[#allocation8 + $0x38] sm:$0xff]
    %v288 = vld [vmem:[#allocation8 + $0x40] sm:$0xff]
    %v289 = vld [vmem:[#allocation8 + $0x48] sm:$0xff]
    %v290 = vld [vmem:[#allocation8 + $0x50] sm:$0xff]
    %v291 = vld [vmem:[#allocation8 + $0x58] sm:$0xff]
    %v292 = vld [vmem:[#allocation8 + $0x60] sm:$0xff]
    %v293 = vld [vmem:[#allocation8 + $0x68] sm:$0xff]
    %v294 = vld [vmem:[#allocation8 + $0x70] sm:$0xff]
    %v295 = vld [vmem:[#allocation8 + $0x78] sm:$0xff]
    %v296 = vld [vmem:[#allocation8 + $0x80] sm:$0xff]
    %v297 = vld [vmem:[#allocation8 + $0x88] sm:$0xff]
    %v298 = vld [vmem:[#allocation8 + $0x90] sm:$0xff]
    %v299 = vld [vmem:[#allocation8 + $0x98] sm:$0xff]
    %v300 = vld [vmem:[#allocation8 + $0xa0] sm:$0xff]
    %v301 = vld [vmem:[#allocation8 + $0xa8] sm:$0xff]
    %v302 = vld [vmem:[#allocation8 + $0xb0] sm:$0xff]
    %v303 = vld [vmem:[#allocation8 + $0xb8] sm:$0xff]
    %v304 = vld [vmem:[#allocation8 + $0xc0] sm:$0xff]
    %v305 = vld [vmem:[#allocation8 + $0xc8] sm:$0xff]
    %v306 = vld [vmem:[#allocation8 + $0xd0] sm:$0xff]
    %v307 = vld [vmem:[#allocation8 + $0xd8] sm:$0xff]
    %v308 = vld [vmem:[#allocation8 + $0xe0] sm:$0xff]
    %v309 = vld [vmem:[#allocation8 + $0xe8] sm:$0xff]
    %v310 = vld [vmem:[#allocation8 + $0xf0] sm:$0xff]
    %v311 = vld [vmem:[#allocation8 + $0xf8] sm:$0xff]
    %v312 = vld [vmem:[#allocation8 + $0x100] sm:$0xff]
    %v313 = vld [vmem:[#allocation8 + $0x108] sm:$0xff]
    %v314 = vld [vmem:[#allocation8 + $0x110] sm:$0xff]
    %v315 = vld [vmem:[#allocation8 + $0x118] sm:$0xff]
    %v316 = vld [vmem:[#allocation8 + $0x120] sm:$0xff]
    %v317 = vld [vmem:[#allocation8 + $0x128] sm:$0xff]
    %v318 = vld [vmem:[#allocation8 + $0x130] sm:$0xff]
    %v319 = vld [vmem:[#allocation8 + $0x138] sm:$0xff]
    %v320 = vld [vmem:[#allocation8 + $0x140] sm:$0xff]
    %v321 = vld [vmem:[#allocation8 + $0x148] sm:$0xff]
    %v322 = vld [vmem:[#allocation8 + $0x150] sm:$0xff]
    %v323 = vld [vmem:[#allocation8 + $0x158] sm:$0xff]
    %v324 = vld [vmem:[#allocation8 + $0x160] sm:$0xff]
    %v325 = vld [vmem:[#allocation8 + $0x168] sm:$0xff]
    %v326 = vld [vmem:[#allocation8 + $0x170] sm:$0xff]
    %v327 = vld [vmem:[#allocation8 + $0x178] sm:$0xff]
    %v328 = vld [vmem:[#allocation8 + $0x180] sm:$0xff]
    %v329 = vld [vmem:[#allocation8 + $0x188] sm:$0xff]
    %v330 = vld [vmem:[#allocation8 + $0x190] sm:$0xff]
    %v331 = vld [vmem:[#allocation8 + $0x198] sm:$0xff]
    %v332 = vld [vmem:[#allocation8 + $0x1a0] sm:$0xff]
    %v333 = vld [vmem:[#allocation8 + $0x1a8] sm:$0xff]
    %v334 = vld [vmem:[#allocation8 + $0x1b0] sm:$0xff]
    %v335 = vld [vmem:[#allocation8 + $0x1b8] sm:$0xff]
    %v336 = vld [vmem:[#allocation8 + $0x1c0] sm:$0xff]
    %v337 = vld [vmem:[#allocation8 + $0x1c8] sm:$0xff]
    %v338 = vld [vmem:[#allocation8 + $0x1d0] sm:$0xff]
    %v339 = vld [vmem:[#allocation8 + $0x1d8] sm:$0xff]
    %v340 = vld [vmem:[#allocation8 + $0x1e0] sm:$0xff]
    %v341 = vld [vmem:[#allocation8 + $0x1e8] sm:$0xff]
    %v342 = vld [vmem:[#allocation8 + $0x1f0] sm:$0xff]
    %v343 = vld [vmem:[#allocation8 + $0x1f8] sm:$0xff]
    %v344 = vld [vmem:[#allocation8 + $0x200] sm:$0xff]
    %v345 = vld [vmem:[#allocation8 + $0x208] sm:$0xff]
    %v346 = vld [vmem:[#allocation8 + $0x210] sm:$0xff]
    %v347 = vld [vmem:[#allocation8 + $0x218] sm:$0xff]
    %v348 = vld [vmem:[#allocation8 + $0x220] sm:$0xff]
    %v349 = vld [vmem:[#allocation8 + $0x228] sm:$0xff]
    %v350 = vld [vmem:[#allocation8 + $0x230] sm:$0xff]
    %v351 = vld [vmem:[#allocation8 + $0x238] sm:$0xff]
    %v352 = vld [vmem:[#allocation8 + $0x240] sm:$0xff]
    %v353 = vld [vmem:[#allocation8 + $0x248] sm:$0xff]
    %v354 = vld [vmem:[#allocation8 + $0x250] sm:$0xff]
    %v355 = vld [vmem:[#allocation8 + $0x258] sm:$0xff]
    %v356 = vld [vmem:[#allocation8 + $0x260] sm:$0xff]
    %v357 = vld [vmem:[#allocation8 + $0x268] sm:$0xff]
    %v358 = vld [vmem:[#allocation8 + $0x270] sm:$0xff]
    %v359 = vld [vmem:[#allocation8 + $0x278] sm:$0xff]
    %v360 = vld [vmem:[#allocation8 + $0x280] sm:$0xff]
    %v361 = vld [vmem:[#allocation8 + $0x288] sm:$0xff]
    %v362 = vld [vmem:[#allocation8 + $0x290] sm:$0xff]
    %v363 = vld [vmem:[#allocation8 + $0x298] sm:$0xff]
    %v364 = vld [vmem:[#allocation8 + $0x2a0] sm:$0xff]
    %v365 = vld [vmem:[#allocation8 + $0x2a8] sm:$0xff]
    %v366 = vld [vmem:[#allocation8 + $0x2b0] sm:$0xff]
    %v367 = vld [vmem:[#allocation8 + $0x2b8] sm:$0xff]
    %v368 = vld [vmem:[#allocation8 + $0x2c0] sm:$0xff]
    %v369 = vld [vmem:[#allocation8 + $0x2c8] sm:$0xff]
    %v370 = vld [vmem:[#allocation8 + $0x2d0] sm:$0xff]
    %v371 = vld [vmem:[#allocation8 + $0x2d8] sm:$0xff]
    %v372 = vld [vmem:[#allocation8 + $0x2e0] sm:$0xff]
    %v373 = vld [vmem:[#allocation8 + $0x2e8] sm:$0xff]
    %v374 = vld [vmem:[#allocation8 + $0x2f0] sm:$0xff]
    %v375 = vld [vmem:[#allocation8 + $0x2f8] sm:$0xff]
    %v376 = vld [vmem:[#allocation8 + $0x300] sm:$0xff]
    %v377 = vld [vmem:[#allocation8 + $0x308] sm:$0xff]
    %v378 = vld [vmem:[#allocation8 + $0x310] sm:$0xff]
    %v379 = vld [vmem:[#allocation8 + $0x318] sm:$0xff]
    %v380 = vld [vmem:[#allocation8 + $0x320] sm:$0xff]
    %v381 = vld [vmem:[#allocation8 + $0x328] sm:$0xff]
    %v382 = vld [vmem:[#allocation8 + $0x330] sm:$0xff]
    %v383 = vld [vmem:[#allocation8 + $0x338] sm:$0xff]
    %v384 = vld [vmem:[#allocation8 + $0x340] sm:$0xff]
    %v385 = vld [vmem:[#allocation8 + $0x348] sm:$0xff]
    %v386 = vld [vmem:[#allocation8 + $0x350] sm:$0xff]
    %v387 = vld [vmem:[#allocation8 + $0x358] sm:$0xff]
    %v388 = vld [vmem:[#allocation8 + $0x360] sm:$0xff]
    %v389 = vld [vmem:[#allocation8 + $0x368] sm:$0xff]
    %v390 = vld [vmem:[#allocation8 + $0x370] sm:$0xff]
    %v391 = vld [vmem:[#allocation8 + $0x378] sm:$0xff]
    %v392 = vld [vmem:[#allocation8 + $0x380] sm:$0xff]
    %v393 = vld [vmem:[#allocation8 + $0x388] sm:$0xff]
    %v394 = vld [vmem:[#allocation8 + $0x390] sm:$0xff]
    %v395 = vld [vmem:[#allocation8 + $0x398] sm:$0xff]
    %v396 = vld [vmem:[#allocation8 + $0x3a0] sm:$0xff]
    %v397 = vld [vmem:[#allocation8 + $0x3a8] sm:$0xff]
    %v398 = vld [vmem:[#allocation8 + $0x3b0] sm:$0xff]
    %v399 = vld [vmem:[#allocation8 + $0x3b8] sm:$0xff]
    %v400 = vld [vmem:[#allocation8 + $0x3c0] sm:$0xff]
    %v401 = vld [vmem:[#allocation8 + $0x3c8] sm:$0xff]
    %v402 = vld [vmem:[#allocation8 + $0x3d0] sm:$0xff]
    %v403 = vld [vmem:[#allocation8 + $0x3d8] sm:$0xff]
    %v404 = vld [vmem:[#allocation8 + $0x3e0] sm:$0xff]
    %v405 = vld [vmem:[#allocation8 + $0x3e8] sm:$0xff]
    %v406 = vld [vmem:[#allocation8 + $0x3f0] sm:$0xff]
    %v407 = vld [vmem:[#allocation8 + $0x3f8] sm:$0xff]
    %v408 = vld [vmem:[#allocation5 + $0x10] sm:$0xff]
    %v409 = vld [vmem:[#allocation5 + $0x18] sm:$0xff]
    %v410 = vld [vmem:[#allocation5 + $0x50] sm:$0xff]
    %v411 = vld [vmem:[#allocation5 + $0x58] sm:$0xff]
    %v412 = vld [vmem:[#allocation5 + $0x90] sm:$0xff]
    %v413 = vld [vmem:[#allocation5 + $0x98] sm:$0xff]
    %v414 = vld [vmem:[#allocation5 + $0xd0] sm:$0xff]
    %v415 = vld [vmem:[#allocation5 + $0xd8] sm:$0xff]
    %v416 = vld [vmem:[#allocation7 + $0x4] sm:$0xf]
    %v418 = vlaneseq
    %v419 = vshrl.u32 %v418, 7
    %v420 = vsub.s32 0, %v419
    %v421 = vrot.slane %v416, %v420
    %v422 = vlaneseq
    %v423 = vshrl.u32 %v422, 7
    %v424 = vsub.s32 1, %v423
    %v425 = vrot.slane %v416, %v424
    %v426 = vlaneseq
    %v427 = vshrl.u32 %v426, 7
    %v428 = vsub.s32 2, %v427
    %v429 = vrot.slane %v416, %v428
    %v430 = vlaneseq
    %v431 = vshrl.u32 %v430, 7
    %v432 = vsub.s32 3, %v431
    %v433 = vrot.slane %v416, %v432
    %v446 = vunpack.c.l.b16 %v408
    %v447 = vunpack.c.h.b16 %v408
    %v448 = vunpack.c.l.b16 %v409
    %v449 = vunpack.c.h.b16 %v409
    %v450 = vunpack.c.l.b16 %v410
    %v451 = vunpack.c.h.b16 %v410
    %v452 = vunpack.c.l.b16 %v411
    %v453 = vunpack.c.h.b16 %v411
    %v454 = vunpack.c.l.b16 %v412
    %v455 = vunpack.c.h.b16 %v412
    %v456 = vunpack.c.l.b16 %v413
    %v457 = vunpack.c.h.b16 %v413
    %v458 = vunpack.c.l.b16 %v414
    %v459 = vunpack.c.h.b16 %v414
    %v460 = vunpack.c.l.b16 %v415
    %v461 = vunpack.c.h.b16 %v415
    %v462 = vpack.c.b16 %v450, %v446
    %v463 = vpack.c.b16 %v451, %v447
    %v464 = vpack.c.b16 %v452, %v448
    %v465 = vpack.c.b16 %v453, %v449
    %v466 = vpack.c.b16 %v458, %v454
    %v467 = vpack.c.b16 %v459, %v455
    %v468 = vpack.c.b16 %v460, %v456
    %v469 = vpack.c.b16 %v461, %v457
    %478 = vmatprep.subr.bf16.mxu0 %v463
    %479 = vmatpush1.bf16.msra.mxu0 %v462
    %480 = vmatprep.subr.bf16.mxu0 %v467
    %481 = vmatpush1.bf16.msra.mxu0 %v466
    %482 = vmatprep.subr.bf16.mxu0 0
    %483 = vmatpush1.bf16.msra.mxu0 0
    %484 = vmatprep.subr.bf16.mxu0 0
    %485 = vmatpush1.bf16.msra.mxu0 0
    %486 = vmatprep.subr.bf16.mxu0 0
    %487 = vmatpush1.bf16.msra.mxu0 0
    %488 = vmatprep.subr.bf16.mxu0 0
    %489 = vmatpush1.bf16.msra.mxu0 0
    %490 = vmatprep.subr.bf16.mxu0 0
    %491 = vmatpush1.bf16.msra.mxu0 0
    %492 = vmatprep.subr.bf16.mxu0 0
    %493 = vmatpush1.bf16.msra.mxu0 0
    %494 = vmatprep.subr.bf16.mxu0 0
    %495 = vmatpush1.bf16.msra.mxu0 0
    %496 = vmatprep.subr.bf16.mxu0 0
    %497 = vmatpush1.bf16.msra.mxu0 0
    %498 = vmatprep.subr.bf16.mxu0 0
    %499 = vmatpush1.bf16.msra.mxu0 0
    %500 = vmatprep.subr.bf16.mxu0 0
    %501 = vmatpush1.bf16.msra.mxu0 0
    %502 = vmatprep.subr.bf16.mxu0 0
    %503 = vmatpush1.bf16.msra.mxu0 0
    %504 = vmatprep.subr.bf16.mxu0 0
    %505 = vmatpush1.bf16.msra.mxu0 0
    %506 = vmatprep.subr.bf16.mxu0 0
    %507 = vmatpush1.bf16.msra.mxu0 0
    %508 = vmatprep.subr.bf16.mxu0 0
    %509 = vmatpush1.bf16.msra.mxu0 0
    %510 = vmatprep.mubr.bf16.mxu0 0
    %511 = vmatmul.mubr.bf16.gmra.mrb[0].mxu0 %v180
    %v512 = vpop.f32.mrb[0].mxu0
    %v513 = vadd.f32 %v421, %v512
    %v514 = vpop.f32.mrb[0].mxu0
    %v515 = vadd.f32 %v425, %v514
    %v516 = vpop.f32.mrb[0].mxu0
    %v517 = vadd.f32 %v421, %v516
    %v518 = vpop.f32.mrb[0].mxu0
    %v519 = vadd.f32 %v425, %v518
    %520 = vdwg.mxu0
    %521 = vmatprep.subr.bf16.mxu0 %v465
    %522 = vmatpush1.bf16.msra.mxu0 %v464
    %523 = vmatprep.subr.bf16.mxu0 %v469
    %524 = vmatpush1.bf16.msra.mxu0 %v468
    %525 = vmatprep.subr.bf16.mxu0 0
    %526 = vmatpush1.bf16.msra.mxu0 0
    %527 = vmatprep.subr.bf16.mxu0 0
    %528 = vmatpush1.bf16.msra.mxu0 0
    %529 = vmatprep.subr.bf16.mxu0 0
    %530 = vmatpush1.bf16.msra.mxu0 0
    %531 = vmatprep.subr.bf16.mxu0 0
    %532 = vmatpush1.bf16.msra.mxu0 0
    %533 = vmatprep.subr.bf16.mxu0 0
    %534 = vmatpush1.bf16.msra.mxu0 0
    %535 = vmatprep.subr.bf16.mxu0 0
    %536 = vmatpush1.bf16.msra.mxu0 0
    %537 = vmatprep.subr.bf16.mxu0 0
    %538 = vmatpush1.bf16.msra.mxu0 0
    %539 = vmatprep.subr.bf16.mxu0 0
    %540 = vmatpush1.bf16.msra.mxu0 0
    %541 = vmatprep.subr.bf16.mxu0 0
    %542 = vmatpush1.bf16.msra.mxu0 0
    %543 = vmatprep.subr.bf16.mxu0 0
    %544 = vmatpush1.bf16.msra.mxu0 0
    %545 = vmatprep.subr.bf16.mxu0 0
    %546 = vmatpush1.bf16.msra.mxu0 0
    %547 = vmatprep.subr.bf16.mxu0 0
    %548 = vmatpush1.bf16.msra.mxu0 0
    %549 = vmatprep.subr.bf16.mxu0 0
    %550 = vmatpush1.bf16.msra.mxu0 0
    %551 = vmatprep.subr.bf16.mxu0 0
    %552 = vmatpush1.bf16.msra.mxu0 0
    %553 = vmatprep.mubr.bf16.mxu0 0
    %554 = vmatmul.mubr.bf16.gmra.mrb[0].mxu0 %v180
    %v555 = vpop.f32.mrb[0].mxu0
    %v556 = vadd.f32 %v429, %v555
    %v557 = vpop.f32.mrb[0].mxu0
    %v558 = vadd.f32 %v433, %v557
    %v559 = vpop.f32.mrb[0].mxu0
    %v560 = vadd.f32 %v429, %v559
    %v561 = vpop.f32.mrb[0].mxu0
    %v562 = vadd.f32 %v433, %v561
    %563 = vdwg.mxu0
    %v564 = vtanh.pop %v513
    %v565 = vtanh.pop %v515
    %v566 = vtanh.pop %v556
    %v567 = vtanh.pop %v558
    %v568 = vtanh.pop %v517
    %v569 = vtanh.pop %v519
    %v570 = vtanh.pop %v560
    %v571 = vtanh.pop %v562
    %v572 = vpack.c.bf16 %v568, %v564
    %v573 = vpack.c.bf16 %v569, %v565
    %v574 = vpack.c.bf16 %v570, %v566
    %v575 = vpack.c.bf16 %v571, %v567
    %v576 = vld [vmem:[#allocation8 + $0x400] sm:$0xff]
    %v577 = vld [vmem:[#allocation8 + $0x408] sm:$0xff]
    %v578 = vld [vmem:[#allocation8 + $0x410] sm:$0xff]
    %v579 = vld [vmem:[#allocation8 + $0x418] sm:$0xff]
    %v580 = vld [vmem:[#allocation8 + $0x420] sm:$0xff]
    %v581 = vld [vmem:[#allocation8 + $0x428] sm:$0xff]
    %v582 = vld [vmem:[#allocation8 + $0x430] sm:$0xff]
    %v583 = vld [vmem:[#allocation8 + $0x438] sm:$0xff]
    %v584 = vld [vmem:[#allocation8 + $0x440] sm:$0xff]
    %v585 = vld [vmem:[#allocation8 + $0x448] sm:$0xff]
    %v586 = vld [vmem:[#allocation8 + $0x450] sm:$0xff]
    %v587 = vld [vmem:[#allocation8 + $0x458] sm:$0xff]
    %v588 = vld [vmem:[#allocation8 + $0x460] sm:$0xff]
    %v589 = vld [vmem:[#allocation8 + $0x468] sm:$0xff]
    %v590 = vld [vmem:[#allocation8 + $0x470] sm:$0xff]
    %v591 = vld [vmem:[#allocation8 + $0x478] sm:$0xff]
    %v592 = vld [vmem:[#allocation8 + $0x480] sm:$0xff]
    %v593 = vld [vmem:[#allocation8 + $0x488] sm:$0xff]
    %v594 = vld [vmem:[#allocation8 + $0x490] sm:$0xff]
    %v595 = vld [vmem:[#allocation8 + $0x498] sm:$0xff]
    %v596 = vld [vmem:[#allocation8 + $0x4a0] sm:$0xff]
    %v597 = vld [vmem:[#allocation8 + $0x4a8] sm:$0xff]
    %v598 = vld [vmem:[#allocation8 + $0x4b0] sm:$0xff]
    %v599 = vld [vmem:[#allocation8 + $0x4b8] sm:$0xff]
    %v600 = vld [vmem:[#allocation8 + $0x4c0] sm:$0xff]
    %v601 = vld [vmem:[#allocation8 + $0x4c8] sm:$0xff]
    %v602 = vld [vmem:[#allocation8 + $0x4d0] sm:$0xff]
    %v603 = vld [vmem:[#allocation8 + $0x4d8] sm:$0xff]
    %v604 = vld [vmem:[#allocation8 + $0x4e0] sm:$0xff]
    %v605 = vld [vmem:[#allocation8 + $0x4e8] sm:$0xff]
    %v606 = vld [vmem:[#allocation8 + $0x4f0] sm:$0xff]
    %v607 = vld [vmem:[#allocation8 + $0x4f8] sm:$0xff]
    %v608 = vld [vmem:[#allocation8 + $0x500] sm:$0xff]
    %v609 = vld [vmem:[#allocation8 + $0x508] sm:$0xff]
    %v610 = vld [vmem:[#allocation8 + $0x510] sm:$0xff]
    %v611 = vld [vmem:[#allocation8 + $0x518] sm:$0xff]
    %v612 = vld [vmem:[#allocation8 + $0x520] sm:$0xff]
    %v613 = vld [vmem:[#allocation8 + $0x528] sm:$0xff]
    %v614 = vld [vmem:[#allocation8 + $0x530] sm:$0xff]
    %v615 = vld [vmem:[#allocation8 + $0x538] sm:$0xff]
    %v616 = vld [vmem:[#allocation8 + $0x540] sm:$0xff]
    %v617 = vld [vmem:[#allocation8 + $0x548] sm:$0xff]
    %v618 = vld [vmem:[#allocation8 + $0x550] sm:$0xff]
    %v619 = vld [vmem:[#allocation8 + $0x558] sm:$0xff]
    %v620 = vld [vmem:[#allocation8 + $0x560] sm:$0xff]
    %v621 = vld [vmem:[#allocation8 + $0x568] sm:$0xff]
    %v622 = vld [vmem:[#allocation8 + $0x570] sm:$0xff]
    %v623 = vld [vmem:[#allocation8 + $0x578] sm:$0xff]
    %v624 = vld [vmem:[#allocation8 + $0x580] sm:$0xff]
    %v625 = vld [vmem:[#allocation8 + $0x588] sm:$0xff]
    %v626 = vld [vmem:[#allocation8 + $0x590] sm:$0xff]
    %v627 = vld [vmem:[#allocation8 + $0x598] sm:$0xff]
    %v628 = vld [vmem:[#allocation8 + $0x5a0] sm:$0xff]
    %v629 = vld [vmem:[#allocation8 + $0x5a8] sm:$0xff]
    %v630 = vld [vmem:[#allocation8 + $0x5b0] sm:$0xff]
    %v631 = vld [vmem:[#allocation8 + $0x5b8] sm:$0xff]
    %v632 = vld [vmem:[#allocation8 + $0x5c0] sm:$0xff]
    %v633 = vld [vmem:[#allocation8 + $0x5c8] sm:$0xff]
    %v634 = vld [vmem:[#allocation8 + $0x5d0] sm:$0xff]
    %v635 = vld [vmem:[#allocation8 + $0x5d8] sm:$0xff]
    %v636 = vld [vmem:[#allocation8 + $0x5e0] sm:$0xff]
    %v637 = vld [vmem:[#allocation8 + $0x5e8] sm:$0xff]
    %v638 = vld [vmem:[#allocation8 + $0x5f0] sm:$0xff]
    %v639 = vld [vmem:[#allocation8 + $0x5f8] sm:$0xff]
    %v640 = vld [vmem:[#allocation8 + $0x600] sm:$0xff]
    %v641 = vld [vmem:[#allocation8 + $0x608] sm:$0xff]
    %v642 = vld [vmem:[#allocation8 + $0x610] sm:$0xff]
    %v643 = vld [vmem:[#allocation8 + $0x618] sm:$0xff]
    %v644 = vld [vmem:[#allocation8 + $0x620] sm:$0xff]
    %v645 = vld [vmem:[#allocation8 + $0x628] sm:$0xff]
    %v646 = vld [vmem:[#allocation8 + $0x630] sm:$0xff]
    %v647 = vld [vmem:[#allocation8 + $0x638] sm:$0xff]
    %v648 = vld [vmem:[#allocation8 + $0x640] sm:$0xff]
    %v649 = vld [vmem:[#allocation8 + $0x648] sm:$0xff]
    %v650 = vld [vmem:[#allocation8 + $0x650] sm:$0xff]
    %v651 = vld [vmem:[#allocation8 + $0x658] sm:$0xff]
    %v652 = vld [vmem:[#allocation8 + $0x660] sm:$0xff]
    %v653 = vld [vmem:[#allocation8 + $0x668] sm:$0xff]
    %v654 = vld [vmem:[#allocation8 + $0x670] sm:$0xff]
    %v655 = vld [vmem:[#allocation8 + $0x678] sm:$0xff]
    %v656 = vld [vmem:[#allocation8 + $0x680] sm:$0xff]
    %v657 = vld [vmem:[#allocation8 + $0x688] sm:$0xff]
    %v658 = vld [vmem:[#allocation8 + $0x690] sm:$0xff]
    %v659 = vld [vmem:[#allocation8 + $0x698] sm:$0xff]
    %v660 = vld [vmem:[#allocation8 + $0x6a0] sm:$0xff]
    %v661 = vld [vmem:[#allocation8 + $0x6a8] sm:$0xff]
    %v662 = vld [vmem:[#allocation8 + $0x6b0] sm:$0xff]
    %v663 = vld [vmem:[#allocation8 + $0x6b8] sm:$0xff]
    %v664 = vld [vmem:[#allocation8 + $0x6c0] sm:$0xff]
    %v665 = vld [vmem:[#allocation8 + $0x6c8] sm:$0xff]
    %v666 = vld [vmem:[#allocation8 + $0x6d0] sm:$0xff]
    %v667 = vld [vmem:[#allocation8 + $0x6d8] sm:$0xff]
    %v668 = vld [vmem:[#allocation8 + $0x6e0] sm:$0xff]
    %v669 = vld [vmem:[#allocation8 + $0x6e8] sm:$0xff]
    %v670 = vld [vmem:[#allocation8 + $0x6f0] sm:$0xff]
    %v671 = vld [vmem:[#allocation8 + $0x6f8] sm:$0xff]
    %v672 = vld [vmem:[#allocation8 + $0x700] sm:$0xff]
    %v673 = vld [vmem:[#allocation8 + $0x708] sm:$0xff]
    %v674 = vld [vmem:[#allocation8 + $0x710] sm:$0xff]
    %v675 = vld [vmem:[#allocation8 + $0x718] sm:$0xff]
    %v676 = vld [vmem:[#allocation8 + $0x720] sm:$0xff]
    %v677 = vld [vmem:[#allocation8 + $0x728] sm:$0xff]
    %v678 = vld [vmem:[#allocation8 + $0x730] sm:$0xff]
    %v679 = vld [vmem:[#allocation8 + $0x738] sm:$0xff]
    %v680 = vld [vmem:[#allocation8 + $0x740] sm:$0xff]
    %v681 = vld [vmem:[#allocation8 + $0x748] sm:$0xff]
    %v682 = vld [vmem:[#allocation8 + $0x750] sm:$0xff]
    %v683 = vld [vmem:[#allocation8 + $0x758] sm:$0xff]
    %v684 = vld [vmem:[#allocation8 + $0x760] sm:$0xff]
    %v685 = vld [vmem:[#allocation8 + $0x768] sm:$0xff]
    %v686 = vld [vmem:[#allocation8 + $0x770] sm:$0xff]
    %v687 = vld [vmem:[#allocation8 + $0x778] sm:$0xff]
    %v688 = vld [vmem:[#allocation8 + $0x780] sm:$0xff]
    %v689 = vld [vmem:[#allocation8 + $0x788] sm:$0xff]
    %v690 = vld [vmem:[#allocation8 + $0x790] sm:$0xff]
    %v691 = vld [vmem:[#allocation8 + $0x798] sm:$0xff]
    %v692 = vld [vmem:[#allocation8 + $0x7a0] sm:$0xff]
    %v693 = vld [vmem:[#allocation8 + $0x7a8] sm:$0xff]
    %v694 = vld [vmem:[#allocation8 + $0x7b0] sm:$0xff]
    %v695 = vld [vmem:[#allocation8 + $0x7b8] sm:$0xff]
    %v696 = vld [vmem:[#allocation8 + $0x7c0] sm:$0xff]
    %v697 = vld [vmem:[#allocation8 + $0x7c8] sm:$0xff]
    %v698 = vld [vmem:[#allocation8 + $0x7d0] sm:$0xff]
    %v699 = vld [vmem:[#allocation8 + $0x7d8] sm:$0xff]
    %v700 = vld [vmem:[#allocation8 + $0x7e0] sm:$0xff]
    %v701 = vld [vmem:[#allocation8 + $0x7e8] sm:$0xff]
    %v702 = vld [vmem:[#allocation8 + $0x7f0] sm:$0xff]
    %v703 = vld [vmem:[#allocation8 + $0x7f8] sm:$0xff]
    %v832 = vunpack.c.l.b16 %v576
    %v833 = vunpack.c.h.b16 %v576
    %v834 = vunpack.c.l.b16 %v577
    %v835 = vunpack.c.h.b16 %v577
    %v836 = vunpack.c.l.b16 %v578
    %v837 = vunpack.c.h.b16 %v578
    %v838 = vunpack.c.l.b16 %v579
    %v839 = vunpack.c.h.b16 %v579
    %v840 = vunpack.c.l.b16 %v580
    %v841 = vunpack.c.h.b16 %v580
    %v842 = vunpack.c.l.b16 %v581
    %v843 = vunpack.c.h.b16 %v581
    %v844 = vunpack.c.l.b16 %v582
    %v845 = vunpack.c.h.b16 %v582
    %v846 = vunpack.c.l.b16 %v583
    %v847 = vunpack.c.h.b16 %v583
    %v848 = vunpack.c.l.b16 %v584
    %v849 = vunpack.c.h.b16 %v584
    %v850 = vunpack.c.l.b16 %v585
    %v851 = vunpack.c.h.b16 %v585
    %v852 = vunpack.c.l.b16 %v586
    %v853 = vunpack.c.h.b16 %v586
    %v854 = vunpack.c.l.b16 %v587
    %v855 = vunpack.c.h.b16 %v587
    %v856 = vunpack.c.l.b16 %v588
    %v857 = vunpack.c.h.b16 %v588
    %v858 = vunpack.c.l.b16 %v589
    %v859 = vunpack.c.h.b16 %v589
    %v860 = vunpack.c.l.b16 %v590
    %v861 = vunpack.c.h.b16 %v590
    %v862 = vunpack.c.l.b16 %v591
    %v863 = vunpack.c.h.b16 %v591
    %v864 = vunpack.c.l.b16 %v592
    %v865 = vunpack.c.h.b16 %v592
    %v866 = vunpack.c.l.b16 %v593
    %v867 = vunpack.c.h.b16 %v593
    %v868 = vunpack.c.l.b16 %v594
    %v869 = vunpack.c.h.b16 %v594
    %v870 = vunpack.c.l.b16 %v595
    %v871 = vunpack.c.h.b16 %v595
    %v872 = vunpack.c.l.b16 %v596
    %v873 = vunpack.c.h.b16 %v596
    %v874 = vunpack.c.l.b16 %v597
    %v875 = vunpack.c.h.b16 %v597
    %v876 = vunpack.c.l.b16 %v598
    %v877 = vunpack.c.h.b16 %v598
    %v878 = vunpack.c.l.b16 %v599
    %v879 = vunpack.c.h.b16 %v599
    %v880 = vunpack.c.l.b16 %v600
    %v881 = vunpack.c.h.b16 %v600
    %v882 = vunpack.c.l.b16 %v601
    %v883 = vunpack.c.h.b16 %v601
    %v884 = vunpack.c.l.b16 %v602
    %v885 = vunpack.c.h.b16 %v602
    %v886 = vunpack.c.l.b16 %v603
    %v887 = vunpack.c.h.b16 %v603
    %v888 = vunpack.c.l.b16 %v604
    %v889 = vunpack.c.h.b16 %v604
    %v890 = vunpack.c.l.b16 %v605
    %v891 = vunpack.c.h.b16 %v605
    %v892 = vunpack.c.l.b16 %v606
    %v893 = vunpack.c.h.b16 %v606
    %v894 = vunpack.c.l.b16 %v607
    %v895 = vunpack.c.h.b16 %v607
    %v896 = vunpack.c.l.b16 %v608
    %v897 = vunpack.c.h.b16 %v608
    %v898 = vunpack.c.l.b16 %v609
    %v899 = vunpack.c.h.b16 %v609
    %v900 = vunpack.c.l.b16 %v610
    %v901 = vunpack.c.h.b16 %v610
    %v902 = vunpack.c.l.b16 %v611
    %v903 = vunpack.c.h.b16 %v611
    %v904 = vunpack.c.l.b16 %v612
    %v905 = vunpack.c.h.b16 %v612
    %v906 = vunpack.c.l.b16 %v613
    %v907 = vunpack.c.h.b16 %v613
    %v908 = vunpack.c.l.b16 %v614
    %v909 = vunpack.c.h.b16 %v614
    %v910 = vunpack.c.l.b16 %v615
    %v911 = vunpack.c.h.b16 %v615
    %v912 = vunpack.c.l.b16 %v616
    %v913 = vunpack.c.h.b16 %v616
    %v914 = vunpack.c.l.b16 %v617
    %v915 = vunpack.c.h.b16 %v617
    %v916 = vunpack.c.l.b16 %v618
    %v917 = vunpack.c.h.b16 %v618
    %v918 = vunpack.c.l.b16 %v619
    %v919 = vunpack.c.h.b16 %v619
    %v920 = vunpack.c.l.b16 %v620
    %v921 = vunpack.c.h.b16 %v620
    %v922 = vunpack.c.l.b16 %v621
    %v923 = vunpack.c.h.b16 %v621
    %v924 = vunpack.c.l.b16 %v622
    %v925 = vunpack.c.h.b16 %v622
    %v926 = vunpack.c.l.b16 %v623
    %v927 = vunpack.c.h.b16 %v623
    %v928 = vunpack.c.l.b16 %v624
    %v929 = vunpack.c.h.b16 %v624
    %v930 = vunpack.c.l.b16 %v625
    %v931 = vunpack.c.h.b16 %v625
    %v932 = vunpack.c.l.b16 %v626
    %v933 = vunpack.c.h.b16 %v626
    %v934 = vunpack.c.l.b16 %v627
    %v935 = vunpack.c.h.b16 %v627
    %v936 = vunpack.c.l.b16 %v628
    %v937 = vunpack.c.h.b16 %v628
    %v938 = vunpack.c.l.b16 %v629
    %v939 = vunpack.c.h.b16 %v629
    %v940 = vunpack.c.l.b16 %v630
    %v941 = vunpack.c.h.b16 %v630
    %v942 = vunpack.c.l.b16 %v631
    %v943 = vunpack.c.h.b16 %v631
    %v944 = vunpack.c.l.b16 %v632
    %v945 = vunpack.c.h.b16 %v632
    %v946 = vunpack.c.l.b16 %v633
    %v947 = vunpack.c.h.b16 %v633
    %v948 = vunpack.c.l.b16 %v634
    %v949 = vunpack.c.h.b16 %v634
    %v950 = vunpack.c.l.b16 %v635
    %v951 = vunpack.c.h.b16 %v635
    %v952 = vunpack.c.l.b16 %v636
    %v953 = vunpack.c.h.b16 %v636
    %v954 = vunpack.c.l.b16 %v637
    %v955 = vunpack.c.h.b16 %v637
    %v956 = vunpack.c.l.b16 %v638
    %v957 = vunpack.c.h.b16 %v638
    %v958 = vunpack.c.l.b16 %v639
    %v959 = vunpack.c.h.b16 %v639
    %v960 = vunpack.c.l.b16 %v640
    %v961 = vunpack.c.h.b16 %v640
    %v962 = vunpack.c.l.b16 %v641
    %v963 = vunpack.c.h.b16 %v641
    %v964 = vunpack.c.l.b16 %v642
    %v965 = vunpack.c.h.b16 %v642
    %v966 = vunpack.c.l.b16 %v643
    %v967 = vunpack.c.h.b16 %v643
    %v968 = vunpack.c.l.b16 %v644
    %v969 = vunpack.c.h.b16 %v644
    %v970 = vunpack.c.l.b16 %v645
    %v971 = vunpack.c.h.b16 %v645
    %v972 = vunpack.c.l.b16 %v646
    %v973 = vunpack.c.h.b16 %v646
    %v974 = vunpack.c.l.b16 %v647
    %v975 = vunpack.c.h.b16 %v647
    %v976 = vunpack.c.l.b16 %v648
    %v977 = vunpack.c.h.b16 %v648
    %v978 = vunpack.c.l.b16 %v649
    %v979 = vunpack.c.h.b16 %v649
    %v980 = vunpack.c.l.b16 %v650
    %v981 = vunpack.c.h.b16 %v650
    %v982 = vunpack.c.l.b16 %v651
    %v983 = vunpack.c.h.b16 %v651
    %v984 = vunpack.c.l.b16 %v652
    %v985 = vunpack.c.h.b16 %v652
    %v986 = vunpack.c.l.b16 %v653
    %v987 = vunpack.c.h.b16 %v653
    %v988 = vunpack.c.l.b16 %v654
    %v989 = vunpack.c.h.b16 %v654
    %v990 = vunpack.c.l.b16 %v655
    %v991 = vunpack.c.h.b16 %v655
    %v992 = vunpack.c.l.b16 %v656
    %v993 = vunpack.c.h.b16 %v656
    %v994 = vunpack.c.l.b16 %v657
    %v995 = vunpack.c.h.b16 %v657
    %v996 = vunpack.c.l.b16 %v658
    %v997 = vunpack.c.h.b16 %v658
    %v998 = vunpack.c.l.b16 %v659
    %v999 = vunpack.c.h.b16 %v659
    %v1000 = vunpack.c.l.b16 %v660
    %v1001 = vunpack.c.h.b16 %v660
    %v1002 = vunpack.c.l.b16 %v661
    %v1003 = vunpack.c.h.b16 %v661
    %v1004 = vunpack.c.l.b16 %v662
    %v1005 = vunpack.c.h.b16 %v662
    %v1006 = vunpack.c.l.b16 %v663
    %v1007 = vunpack.c.h.b16 %v663
    %v1008 = vunpack.c.l.b16 %v664
    %v1009 = vunpack.c.h.b16 %v664
    %v1010 = vunpack.c.l.b16 %v665
    %v1011 = vunpack.c.h.b16 %v665
    %v1012 = vunpack.c.l.b16 %v666
    %v1013 = vunpack.c.h.b16 %v666
    %v1014 = vunpack.c.l.b16 %v667
    %v1015 = vunpack.c.h.b16 %v667
    %v1016 = vunpack.c.l.b16 %v668
    %v1017 = vunpack.c.h.b16 %v668
    %v1018 = vunpack.c.l.b16 %v669
    %v1019 = vunpack.c.h.b16 %v669
    %v1020 = vunpack.c.l.b16 %v670
    %v1021 = vunpack.c.h.b16 %v670
    %v1022 = vunpack.c.l.b16 %v671
    %v1023 = vunpack.c.h.b16 %v671
    %v1024 = vunpack.c.l.b16 %v672
    %v1025 = vunpack.c.h.b16 %v672
    %v1026 = vunpack.c.l.b16 %v673
    %v1027 = vunpack.c.h.b16 %v673
    %v1028 = vunpack.c.l.b16 %v674
    %v1029 = vunpack.c.h.b16 %v674
    %v1030 = vunpack.c.l.b16 %v675
    %v1031 = vunpack.c.h.b16 %v675
    %v1032 = vunpack.c.l.b16 %v676
    %v1033 = vunpack.c.h.b16 %v676
    %v1034 = vunpack.c.l.b16 %v677
    %v1035 = vunpack.c.h.b16 %v677
    %v1036 = vunpack.c.l.b16 %v678
    %v1037 = vunpack.c.h.b16 %v678
    %v1038 = vunpack.c.l.b16 %v679
    %v1039 = vunpack.c.h.b16 %v679
    %v1040 = vunpack.c.l.b16 %v680
    %v1041 = vunpack.c.h.b16 %v680
    %v1042 = vunpack.c.l.b16 %v681
    %v1043 = vunpack.c.h.b16 %v681
    %v1044 = vunpack.c.l.b16 %v682
    %v1045 = vunpack.c.h.b16 %v682
    %v1046 = vunpack.c.l.b16 %v683
    %v1047 = vunpack.c.h.b16 %v683
    %v1048 = vunpack.c.l.b16 %v684
    %v1049 = vunpack.c.h.b16 %v684
    %v1050 = vunpack.c.l.b16 %v685
    %v1051 = vunpack.c.h.b16 %v685
    %v1052 = vunpack.c.l.b16 %v686
    %v1053 = vunpack.c.h.b16 %v686
    %v1054 = vunpack.c.l.b16 %v687
    %v1055 = vunpack.c.h.b16 %v687
    %v1056 = vunpack.c.l.b16 %v688
    %v1057 = vunpack.c.h.b16 %v688
    %v1058 = vunpack.c.l.b16 %v689
    %v1059 = vunpack.c.h.b16 %v689
    %v1060 = vunpack.c.l.b16 %v690
    %v1061 = vunpack.c.h.b16 %v690
    %v1062 = vunpack.c.l.b16 %v691
    %v1063 = vunpack.c.h.b16 %v691
    %v1064 = vunpack.c.l.b16 %v692
    %v1065 = vunpack.c.h.b16 %v692
    %v1066 = vunpack.c.l.b16 %v693
    %v1067 = vunpack.c.h.b16 %v693
    %v1068 = vunpack.c.l.b16 %v694
    %v1069 = vunpack.c.h.b16 %v694
    %v1070 = vunpack.c.l.b16 %v695
    %v1071 = vunpack.c.h.b16 %v695
    %v1072 = vunpack.c.l.b16 %v696
    %v1073 = vunpack.c.h.b16 %v696
    %v1074 = vunpack.c.l.b16 %v697
    %v1075 = vunpack.c.h.b16 %v697
    %v1076 = vunpack.c.l.b16 %v698
    %v1077 = vunpack.c.h.b16 %v698
    %v1078 = vunpack.c.l.b16 %v699
    %v1079 = vunpack.c.h.b16 %v699
    %v1080 = vunpack.c.l.b16 %v700
    %v1081 = vunpack.c.h.b16 %v700
    %v1082 = vunpack.c.l.b16 %v701
    %v1083 = vunpack.c.h.b16 %v701
    %v1084 = vunpack.c.l.b16 %v702
    %v1085 = vunpack.c.h.b16 %v702
    %v1086 = vunpack.c.l.b16 %v703
    %v1087 = vunpack.c.h.b16 %v703
    %v1088 = vpack.c.b16 %v836, %v832
    %v1089 = vpack.c.b16 %v837, %v833
    %v1090 = vpack.c.b16 %v838, %v834
    %v1091 = vpack.c.b16 %v839, %v835
    %v1092 = vpack.c.b16 %v844, %v840
    %v1093 = vpack.c.b16 %v845, %v841
    %v1094 = vpack.c.b16 %v846, %v842
    %v1095 = vpack.c.b16 %v847, %v843
    %v1096 = vpack.c.b16 %v852, %v848
    %v1097 = vpack.c.b16 %v853, %v849
    %v1098 = vpack.c.b16 %v854, %v850
    %v1099 = vpack.c.b16 %v855, %v851
    %v1100 = vpack.c.b16 %v860, %v856
    %v1101 = vpack.c.b16 %v861, %v857
    %v1102 = vpack.c.b16 %v862, %v858
    %v1103 = vpack.c.b16 %v863, %v859
    %v1104 = vpack.c.b16 %v868, %v864
    %v1105 = vpack.c.b16 %v869, %v865
    %v1106 = vpack.c.b16 %v870, %v866
    %v1107 = vpack.c.b16 %v871, %v867
    %v1108 = vpack.c.b16 %v876, %v872
    %v1109 = vpack.c.b16 %v877, %v873
    %v1110 = vpack.c.b16 %v878, %v874
    %v1111 = vpack.c.b16 %v879, %v875
    %v1112 = vpack.c.b16 %v884, %v880
    %v1113 = vpack.c.b16 %v885, %v881
    %v1114 = vpack.c.b16 %v886, %v882
    %v1115 = vpack.c.b16 %v887, %v883
    %v1116 = vpack.c.b16 %v892, %v888
    %v1117 = vpack.c.b16 %v893, %v889
    %v1118 = vpack.c.b16 %v894, %v890
    %v1119 = vpack.c.b16 %v895, %v891
    %v1120 = vpack.c.b16 %v900, %v896
    %v1121 = vpack.c.b16 %v901, %v897
    %v1122 = vpack.c.b16 %v902, %v898
    %v1123 = vpack.c.b16 %v903, %v899
    %v1124 = vpack.c.b16 %v908, %v904
    %v1125 = vpack.c.b16 %v909, %v905
    %v1126 = vpack.c.b16 %v910, %v906
    %v1127 = vpack.c.b16 %v911, %v907
    %v1128 = vpack.c.b16 %v916, %v912
    %v1129 = vpack.c.b16 %v917, %v913
    %v1130 = vpack.c.b16 %v918, %v914
    %v1131 = vpack.c.b16 %v919, %v915
    %v1132 = vpack.c.b16 %v924, %v920
    %v1133 = vpack.c.b16 %v925, %v921
    %v1134 = vpack.c.b16 %v926, %v922
    %v1135 = vpack.c.b16 %v927, %v923
    %v1136 = vpack.c.b16 %v932, %v928
    %v1137 = vpack.c.b16 %v933, %v929
    %v1138 = vpack.c.b16 %v934, %v930
    %v1139 = vpack.c.b16 %v935, %v931
    %v1140 = vpack.c.b16 %v940, %v936
    %v1141 = vpack.c.b16 %v941, %v937
    %v1142 = vpack.c.b16 %v942, %v938
    %v1143 = vpack.c.b16 %v943, %v939
    %v1144 = vpack.c.b16 %v948, %v944
    %v1145 = vpack.c.b16 %v949, %v945
    %v1146 = vpack.c.b16 %v950, %v946
    %v1147 = vpack.c.b16 %v951, %v947
    %v1148 = vpack.c.b16 %v956, %v952
    %v1149 = vpack.c.b16 %v957, %v953
    %v1150 = vpack.c.b16 %v958, %v954
    %v1151 = vpack.c.b16 %v959, %v955
    %v1152 = vpack.c.b16 %v964, %v960
    %v1153 = vpack.c.b16 %v965, %v961
    %v1154 = vpack.c.b16 %v966, %v962
    %v1155 = vpack.c.b16 %v967, %v963
    %v1156 = vpack.c.b16 %v972, %v968
    %v1157 = vpack.c.b16 %v973, %v969
    %v1158 = vpack.c.b16 %v974, %v970
    %v1159 = vpack.c.b16 %v975, %v971
    %v1160 = vpack.c.b16 %v980, %v976
    %v1161 = vpack.c.b16 %v981, %v977
    %v1162 = vpack.c.b16 %v982, %v978
    %v1163 = vpack.c.b16 %v983, %v979
    %v1164 = vpack.c.b16 %v988, %v984
    %v1165 = vpack.c.b16 %v989, %v985
    %v1166 = vpack.c.b16 %v990, %v986
    %v1167 = vpack.c.b16 %v991, %v987
    %v1168 = vpack.c.b16 %v996, %v992
    %v1169 = vpack.c.b16 %v997, %v993
    %v1170 = vpack.c.b16 %v998, %v994
    %v1171 = vpack.c.b16 %v999, %v995
    %v1172 = vpack.c.b16 %v1004, %v1000
    %v1173 = vpack.c.b16 %v1005, %v1001
    %v1174 = vpack.c.b16 %v1006, %v1002
    %v1175 = vpack.c.b16 %v1007, %v1003
    %v1176 = vpack.c.b16 %v1012, %v1008
    %v1177 = vpack.c.b16 %v1013, %v1009
    %v1178 = vpack.c.b16 %v1014, %v1010
    %v1179 = vpack.c.b16 %v1015, %v1011
    %v1180 = vpack.c.b16 %v1020, %v1016
    %v1181 = vpack.c.b16 %v1021, %v1017
    %v1182 = vpack.c.b16 %v1022, %v1018
    %v1183 = vpack.c.b16 %v1023, %v1019
    %v1184 = vpack.c.b16 %v1028, %v1024
    %v1185 = vpack.c.b16 %v1029, %v1025
    %v1186 = vpack.c.b16 %v1030, %v1026
    %v1187 = vpack.c.b16 %v1031, %v1027
    %v1188 = vpack.c.b16 %v1036, %v1032
    %v1189 = vpack.c.b16 %v1037, %v1033
    %v1190 = vpack.c.b16 %v1038, %v1034
    %v1191 = vpack.c.b16 %v1039, %v1035
    %v1192 = vpack.c.b16 %v1044, %v1040
    %v1193 = vpack.c.b16 %v1045, %v1041
    %v1194 = vpack.c.b16 %v1046, %v1042
    %v1195 = vpack.c.b16 %v1047, %v1043
    %v1196 = vpack.c.b16 %v1052, %v1048
    %v1197 = vpack.c.b16 %v1053, %v1049
    %v1198 = vpack.c.b16 %v1054, %v1050
    %v1199 = vpack.c.b16 %v1055, %v1051
    %v1200 = vpack.c.b16 %v1060, %v1056
    %v1201 = vpack.c.b16 %v1061, %v1057
    %v1202 = vpack.c.b16 %v1062, %v1058
    %v1203 = vpack.c.b16 %v1063, %v1059
    %v1204 = vpack.c.b16 %v1068, %v1064
    %v1205 = vpack.c.b16 %v1069, %v1065
    %v1206 = vpack.c.b16 %v1070, %v1066
    %v1207 = vpack.c.b16 %v1071, %v1067
    %v1208 = vpack.c.b16 %v1076, %v1072
    %v1209 = vpack.c.b16 %v1077, %v1073
    %v1210 = vpack.c.b16 %v1078, %v1074
    %v1211 = vpack.c.b16 %v1079, %v1075
    %v1212 = vpack.c.b16 %v1084, %v1080
    %v1213 = vpack.c.b16 %v1085, %v1081
    %v1214 = vpack.c.b16 %v1086, %v1082
    %v1215 = vpack.c.b16 %v1087, %v1083
    %1344 = vmatprep.subr.bf16.mxu0 %v1089
    %1345 = vmatpush1.bf16.msra.mxu0 %v1088
    %1346 = vmatprep.subr.bf16.mxu0 %v1093
    %1347 = vmatpush1.bf16.msra.mxu0 %v1092
    %1348 = vmatprep.subr.bf16.mxu0 %v1097
    %1349 = vmatpush1.bf16.msra.mxu0 %v1096
    %1350 = vmatprep.subr.bf16.mxu0 %v1101
    %1351 = vmatpush1.bf16.msra.mxu0 %v1100
    %1352 = vmatprep.subr.bf16.mxu0 %v1105
    %1353 = vmatpush1.bf16.msra.mxu0 %v1104
    %1354 = vmatprep.subr.bf16.mxu0 %v1109
    %1355 = vmatpush1.bf16.msra.mxu0 %v1108
    %1356 = vmatprep.subr.bf16.mxu0 %v1113
    %1357 = vmatpush1.bf16.msra.mxu0 %v1112
    %1358 = vmatprep.subr.bf16.mxu0 %v1117
    %1359 = vmatpush1.bf16.msra.mxu0 %v1116
    %1360 = vmatprep.subr.bf16.mxu0 %v1121
    %1361 = vmatpush1.bf16.msra.mxu0 %v1120
    %1362 = vmatprep.subr.bf16.mxu0 %v1125
    %1363 = vmatpush1.bf16.msra.mxu0 %v1124
    %1364 = vmatprep.subr.bf16.mxu0 %v1129
    %1365 = vmatpush1.bf16.msra.mxu0 %v1128
    %1366 = vmatprep.subr.bf16.mxu0 %v1133
    %1367 = vmatpush1.bf16.msra.mxu0 %v1132
    %1368 = vmatprep.subr.bf16.mxu0 %v1137
    %1369 = vmatpush1.bf16.msra.mxu0 %v1136
    %1370 = vmatprep.subr.bf16.mxu0 %v1141
    %1371 = vmatpush1.bf16.msra.mxu0 %v1140
    %1372 = vmatprep.subr.bf16.mxu0 %v1145
    %1373 = vmatpush1.bf16.msra.mxu0 %v1144
    %1374 = vmatprep.subr.bf16.mxu0 %v1149
    %1375 = vmatpush1.bf16.msra.mxu0 %v1148
    %1376 = vmatprep.mubr.bf16.mxu0 %v573
    %1377 = vmatmul.mubr.bf16.gmra.mrb[0].mxu0 %v572
    %v1378 = vpop.f32.mrb[0].mxu0
    %v1379 = vadd.f32 0.0, %v1378
    %v1380 = vpop.f32.mrb[0].mxu0
    %v1381 = vadd.f32 0.0, %v1380
    %v1382 = vpop.f32.mrb[0].mxu0
    %v1383 = vadd.f32 0.0, %v1382
    %v1384 = vpop.f32.mrb[0].mxu0
    %v1385 = vadd.f32 0.0, %v1384
    %1386 = vdwg.mxu0
    %1387 = vmatprep.subr.bf16.mxu0 %v1153
    %1388 = vmatpush1.bf16.msra.mxu0 %v1152
    %1389 = vmatprep.subr.bf16.mxu0 %v1157
    %1390 = vmatpush1.bf16.msra.mxu0 %v1156
    %1391 = vmatprep.subr.bf16.mxu0 %v1161
    %1392 = vmatpush1.bf16.msra.mxu0 %v1160
    %1393 = vmatprep.subr.bf16.mxu0 %v1165
    %1394 = vmatpush1.bf16.msra.mxu0 %v1164
    %1395 = vmatprep.subr.bf16.mxu0 %v1169
    %1396 = vmatpush1.bf16.msra.mxu0 %v1168
    %1397 = vmatprep.subr.bf16.mxu0 %v1173
    %1398 = vmatpush1.bf16.msra.mxu0 %v1172
    %1399 = vmatprep.subr.bf16.mxu0 %v1177
    %1400 = vmatpush1.bf16.msra.mxu0 %v1176
    %1401 = vmatprep.subr.bf16.mxu0 %v1181
    %1402 = vmatpush1.bf16.msra.mxu0 %v1180
    %1403 = vmatprep.subr.bf16.mxu0 %v1185
    %1404 = vmatpush1.bf16.msra.mxu0 %v1184
    %1405 = vmatprep.subr.bf16.mxu0 %v1189
    %1406 = vmatpush1.bf16.msra.mxu0 %v1188
    %1407 = vmatprep.subr.bf16.mxu0 %v1193
    %1408 = vmatpush1.bf16.msra.mxu0 %v1192
    %1409 = vmatprep.subr.bf16.mxu0 %v1197
    %1410 = vmatpush1.bf16.msra.mxu0 %v1196
    %1411 = vmatprep.subr.bf16.mxu0 %v1201
    %1412 = vmatpush1.bf16.msra.mxu0 %v1200
    %1413 = vmatprep.subr.bf16.mxu0 %v1205
    %1414 = vmatpush1.bf16.msra.mxu0 %v1204
    %1415 = vmatprep.subr.bf16.mxu0 %v1209
    %1416 = vmatpush1.bf16.msra.mxu0 %v1208
    %1417 = vmatprep.subr.bf16.mxu0 %v1213
    %1418 = vmatpush1.bf16.msra.mxu0 %v1212
    %1419 = vmatprep.mubr.bf16.mxu0 %v575
    %1420 = vmatmul.mubr.bf16.gmra.mrb[0].mxu0 %v574
    %v1421 = vpop.f32.mrb[0].mxu0
    %v1422 = vadd.f32 %v1379, %v1421
    %v1423 = vpop.f32.mrb[0].mxu0
    %v1424 = vadd.f32 %v1381, %v1423
    %v1425 = vpop.f32.mrb[0].mxu0
    %v1426 = vadd.f32 %v1383, %v1425
    %v1427 = vpop.f32.mrb[0].mxu0
    %v1428 = vadd.f32 %v1385, %v1427
    %1429 = vdwg.mxu0
    %1430 = vmatprep.subr.bf16.mxu0 %v1091
    %1431 = vmatpush1.bf16.msra.mxu0 %v1090
    %1432 = vmatprep.subr.bf16.mxu0 %v1095
    %1433 = vmatpush1.bf16.msra.mxu0 %v1094
    %1434 = vmatprep.subr.bf16.mxu0 %v1099
    %1435 = vmatpush1.bf16.msra.mxu0 %v1098
    %1436 = vmatprep.subr.bf16.mxu0 %v1103
    %1437 = vmatpush1.bf16.msra.mxu0 %v1102
    %1438 = vmatprep.subr.bf16.mxu0 %v1107
    %1439 = vmatpush1.bf16.msra.mxu0 %v1106
    %1440 = vmatprep.subr.bf16.mxu0 %v1111
    %1441 = vmatpush1.bf16.msra.mxu0 %v1110
    %1442 = vmatprep.subr.bf16.mxu0 %v1115
    %1443 = vmatpush1.bf16.msra.mxu0 %v1114
    %1444 = vmatprep.subr.bf16.mxu0 %v1119
    %1445 = vmatpush1.bf16.msra.mxu0 %v1118
    %1446 = vmatprep.subr.bf16.mxu0 %v1123
    %1447 = vmatpush1.bf16.msra.mxu0 %v1122
    %1448 = vmatprep.subr.bf16.mxu0 %v1127
    %1449 = vmatpush1.bf16.msra.mxu0 %v1126
    %1450 = vmatprep.subr.bf16.mxu0 %v1131
    %1451 = vmatpush1.bf16.msra.mxu0 %v1130
    %1452 = vmatprep.subr.bf16.mxu0 %v1135
    %1453 = vmatpush1.bf16.msra.mxu0 %v1134
    %1454 = vmatprep.subr.bf16.mxu0 %v1139
    %1455 = vmatpush1.bf16.msra.mxu0 %v1138
    %1456 = vmatprep.subr.bf16.mxu0 %v1143
    %1457 = vmatpush1.bf16.msra.mxu0 %v1142
    %1458 = vmatprep.subr.bf16.mxu0 %v1147
    %1459 = vmatpush1.bf16.msra.mxu0 %v1146
    %1460 = vmatprep.subr.bf16.mxu0 %v1151
    %1461 = vmatpush1.bf16.msra.mxu0 %v1150
    %1462 = vmatprep.mubr.bf16.mxu0 %v573
    %1463 = vmatmul.mubr.bf16.gmra.mrb[0].mxu0 %v572
    %v1464 = vpop.f32.mrb[0].mxu0
    %v1465 = vadd.f32 0.0, %v1464
    %v1466 = vpop.f32.mrb[0].mxu0
    %v1467 = vadd.f32 0.0, %v1466
    %v1468 = vpop.f32.mrb[0].mxu0
    %v1469 = vadd.f32 0.0, %v1468
    %v1470 = vpop.f32.mrb[0].mxu0
    %v1471 = vadd.f32 0.0, %v1470
    %1472 = vdwg.mxu0
    %1473 = vmatprep.subr.bf16.mxu0 %v1155
    %1474 = vmatpush1.bf16.msra.mxu0 %v1154
    %1475 = vmatprep.subr.bf16.mxu0 %v1159
    %1476 = vmatpush1.bf16.msra.mxu0 %v1158
    %1477 = vmatprep.subr.bf16.mxu0 %v1163
    %1478 = vmatpush1.bf16.msra.mxu0 %v1162
    %1479 = vmatprep.subr.bf16.mxu0 %v1167
    %1480 = vmatpush1.bf16.msra.mxu0 %v1166
    %1481 = vmatprep.subr.bf16.mxu0 %v1171
    %1482 = vmatpush1.bf16.msra.mxu0 %v1170
    %1483 = vmatprep.subr.bf16.mxu0 %v1175
    %1484 = vmatpush1.bf16.msra.mxu0 %v1174
    %1485 = vmatprep.subr.bf16.mxu0 %v1179
    %1486 = vmatpush1.bf16.msra.mxu0 %v1178
    %1487 = vmatprep.subr.bf16.mxu0 %v1183
    %1488 = vmatpush1.bf16.msra.mxu0 %v1182
    %1489 = vmatprep.subr.bf16.mxu0 %v1187
    %1490 = vmatpush1.bf16.msra.mxu0 %v1186
    %1491 = vmatprep.subr.bf16.mxu0 %v1191
    %1492 = vmatpush1.bf16.msra.mxu0 %v1190
    %1493 = vmatprep.subr.bf16.mxu0 %v1195
    %1494 = vmatpush1.bf16.msra.mxu0 %v1194
    %1495 = vmatprep.subr.bf16.mxu0 %v1199
    %1496 = vmatpush1.bf16.msra.mxu0 %v1198
    %1497 = vmatprep.subr.bf16.mxu0 %v1203
    %1498 = vmatpush1.bf16.msra.mxu0 %v1202
    %1499 = vmatprep.subr.bf16.mxu0 %v1207
    %1500 = vmatpush1.bf16.msra.mxu0 %v1206
    %1501 = vmatprep.subr.bf16.mxu0 %v1211
    %1502 = vmatpush1.bf16.msra.mxu0 %v1210
    %1503 = vmatprep.subr.bf16.mxu0 %v1215
    %1504 = vmatpush1.bf16.msra.mxu0 %v1214
    %1505 = vmatprep.mubr.bf16.mxu0 %v575
    %1506 = vmatmul.mubr.bf16.gmra.mrb[0].mxu0 %v574
    %v1507 = vpop.f32.mrb[0].mxu0
    %v1508 = vadd.f32 %v1465, %v1507
    %v1509 = vpop.f32.mrb[0].mxu0
    %v1510 = vadd.f32 %v1467, %v1509
    %v1511 = vpop.f32.mrb[0].mxu0
    %v1512 = vadd.f32 %v1469, %v1511
    %v1513 = vpop.f32.mrb[0].mxu0
    %v1514 = vadd.f32 %v1471, %v1513
    %1515 = vdwg.mxu0
    %v1644 = vunpack.c.l.b16 %v280
    %v1645 = vunpack.c.h.b16 %v280
    %v1646 = vunpack.c.l.b16 %v281
    %v1647 = vunpack.c.h.b16 %v281
    %v1648 = vunpack.c.l.b16 %v282
    %v1649 = vunpack.c.h.b16 %v282
    %v1650 = vunpack.c.l.b16 %v283
    %v1651 = vunpack.c.h.b16 %v283
    %v1652 = vunpack.c.l.b16 %v284
    %v1653 = vunpack.c.h.b16 %v284
    %v1654 = vunpack.c.l.b16 %v285
    %v1655 = vunpack.c.h.b16 %v285
    %v1656 = vunpack.c.l.b16 %v286
    %v1657 = vunpack.c.h.b16 %v286
    %v1658 = vunpack.c.l.b16 %v287
    %v1659 = vunpack.c.h.b16 %v287
    %v1660 = vunpack.c.l.b16 %v288
    %v1661 = vunpack.c.h.b16 %v288
    %v1662 = vunpack.c.l.b16 %v289
    %v1663 = vunpack.c.h.b16 %v289
    %v1664 = vunpack.c.l.b16 %v290
    %v1665 = vunpack.c.h.b16 %v290
    %v1666 = vunpack.c.l.b16 %v291
    %v1667 = vunpack.c.h.b16 %v291
    %v1668 = vunpack.c.l.b16 %v292
    %v1669 = vunpack.c.h.b16 %v292
    %v1670 = vunpack.c.l.b16 %v293
    %v1671 = vunpack.c.h.b16 %v293
    %v1672 = vunpack.c.l.b16 %v294
    %v1673 = vunpack.c.h.b16 %v294
    %v1674 = vunpack.c.l.b16 %v295
    %v1675 = vunpack.c.h.b16 %v295
    %v1676 = vunpack.c.l.b16 %v296
    %v1677 = vunpack.c.h.b16 %v296
    %v1678 = vunpack.c.l.b16 %v297
    %v1679 = vunpack.c.h.b16 %v297
    %v1680 = vunpack.c.l.b16 %v298
    %v1681 = vunpack.c.h.b16 %v298
    %v1682 = vunpack.c.l.b16 %v299
    %v1683 = vunpack.c.h.b16 %v299
    %v1684 = vunpack.c.l.b16 %v300
    %v1685 = vunpack.c.h.b16 %v300
    %v1686 = vunpack.c.l.b16 %v301
    %v1687 = vunpack.c.h.b16 %v301
    %v1688 = vunpack.c.l.b16 %v302
    %v1689 = vunpack.c.h.b16 %v302
    %v1690 = vunpack.c.l.b16 %v303
    %v1691 = vunpack.c.h.b16 %v303
    %v1692 = vunpack.c.l.b16 %v304
    %v1693 = vunpack.c.h.b16 %v304
    %v1694 = vunpack.c.l.b16 %v305
    %v1695 = vunpack.c.h.b16 %v305
    %v1696 = vunpack.c.l.b16 %v306
    %v1697 = vunpack.c.h.b16 %v306
    %v1698 = vunpack.c.l.b16 %v307
    %v1699 = vunpack.c.h.b16 %v307
    %v1700 = vunpack.c.l.b16 %v308
    %v1701 = vunpack.c.h.b16 %v308
    %v1702 = vunpack.c.l.b16 %v309
    %v1703 = vunpack.c.h.b16 %v309
    %v1704 = vunpack.c.l.b16 %v310
    %v1705 = vunpack.c.h.b16 %v310
    %v1706 = vunpack.c.l.b16 %v311
    %v1707 = vunpack.c.h.b16 %v311
    %v1708 = vunpack.c.l.b16 %v312
    %v1709 = vunpack.c.h.b16 %v312
    %v1710 = vunpack.c.l.b16 %v313
    %v1711 = vunpack.c.h.b16 %v313
    %v1712 = vunpack.c.l.b16 %v314
    %v1713 = vunpack.c.h.b16 %v314
    %v1714 = vunpack.c.l.b16 %v315
    %v1715 = vunpack.c.h.b16 %v315
    %v1716 = vunpack.c.l.b16 %v316
    %v1717 = vunpack.c.h.b16 %v316
    %v1718 = vunpack.c.l.b16 %v317
    %v1719 = vunpack.c.h.b16 %v317
    %v1720 = vunpack.c.l.b16 %v318
    %v1721 = vunpack.c.h.b16 %v318
    %v1722 = vunpack.c.l.b16 %v319
    %v1723 = vunpack.c.h.b16 %v319
    %v1724 = vunpack.c.l.b16 %v320
    %v1725 = vunpack.c.h.b16 %v320
    %v1726 = vunpack.c.l.b16 %v321
    %v1727 = vunpack.c.h.b16 %v321
    %v1728 = vunpack.c.l.b16 %v322
    %v1729 = vunpack.c.h.b16 %v322
    %v1730 = vunpack.c.l.b16 %v323
    %v1731 = vunpack.c.h.b16 %v323
    %v1732 = vunpack.c.l.b16 %v324
    %v1733 = vunpack.c.h.b16 %v324
    %v1734 = vunpack.c.l.b16 %v325
    %v1735 = vunpack.c.h.b16 %v325
    %v1736 = vunpack.c.l.b16 %v326
    %v1737 = vunpack.c.h.b16 %v326
    %v1738 = vunpack.c.l.b16 %v327
    %v1739 = vunpack.c.h.b16 %v327
    %v1740 = vunpack.c.l.b16 %v328
    %v1741 = vunpack.c.h.b16 %v328
    %v1742 = vunpack.c.l.b16 %v329
    %v1743 = vunpack.c.h.b16 %v329
    %v1744 = vunpack.c.l.b16 %v330
    %v1745 = vunpack.c.h.b16 %v330
    %v1746 = vunpack.c.l.b16 %v331
    %v1747 = vunpack.c.h.b16 %v331
    %v1748 = vunpack.c.l.b16 %v332
    %v1749 = vunpack.c.h.b16 %v332
    %v1750 = vunpack.c.l.b16 %v333
    %v1751 = vunpack.c.h.b16 %v333
    %v1752 = vunpack.c.l.b16 %v334
    %v1753 = vunpack.c.h.b16 %v334
    %v1754 = vunpack.c.l.b16 %v335
    %v1755 = vunpack.c.h.b16 %v335
    %v1756 = vunpack.c.l.b16 %v336
    %v1757 = vunpack.c.h.b16 %v336
    %v1758 = vunpack.c.l.b16 %v337
    %v1759 = vunpack.c.h.b16 %v337
    %v1760 = vunpack.c.l.b16 %v338
    %v1761 = vunpack.c.h.b16 %v338
    %v1762 = vunpack.c.l.b16 %v339
    %v1763 = vunpack.c.h.b16 %v339
    %v1764 = vunpack.c.l.b16 %v340
    %v1765 = vunpack.c.h.b16 %v340
    %v1766 = vunpack.c.l.b16 %v341
    %v1767 = vunpack.c.h.b16 %v341
    %v1768 = vunpack.c.l.b16 %v342
    %v1769 = vunpack.c.h.b16 %v342
    %v1770 = vunpack.c.l.b16 %v343
    %v1771 = vunpack.c.h.b16 %v343
    %v1772 = vunpack.c.l.b16 %v344
    %v1773 = vunpack.c.h.b16 %v344
    %v1774 = vunpack.c.l.b16 %v345
    %v1775 = vunpack.c.h.b16 %v345
    %v1776 = vunpack.c.l.b16 %v346
    %v1777 = vunpack.c.h.b16 %v346
    %v1778 = vunpack.c.l.b16 %v347
    %v1779 = vunpack.c.h.b16 %v347
    %v1780 = vunpack.c.l.b16 %v348
    %v1781 = vunpack.c.h.b16 %v348
    %v1782 = vunpack.c.l.b16 %v349
    %v1783 = vunpack.c.h.b16 %v349
    %v1784 = vunpack.c.l.b16 %v350
    %v1785 = vunpack.c.h.b16 %v350
    %v1786 = vunpack.c.l.b16 %v351
    %v1787 = vunpack.c.h.b16 %v351
    %v1788 = vunpack.c.l.b16 %v352
    %v1789 = vunpack.c.h.b16 %v352
    %v1790 = vunpack.c.l.b16 %v353
    %v1791 = vunpack.c.h.b16 %v353
    %v1792 = vunpack.c.l.b16 %v354
    %v1793 = vunpack.c.h.b16 %v354
    %v1794 = vunpack.c.l.b16 %v355
    %v1795 = vunpack.c.h.b16 %v355
    %v1796 = vunpack.c.l.b16 %v356
    %v1797 = vunpack.c.h.b16 %v356
    %v1798 = vunpack.c.l.b16 %v357
    %v1799 = vunpack.c.h.b16 %v357
    %v1800 = vunpack.c.l.b16 %v358
    %v1801 = vunpack.c.h.b16 %v358
    %v1802 = vunpack.c.l.b16 %v359
    %v1803 = vunpack.c.h.b16 %v359
    %v1804 = vunpack.c.l.b16 %v360
    %v1805 = vunpack.c.h.b16 %v360
    %v1806 = vunpack.c.l.b16 %v361
    %v1807 = vunpack.c.h.b16 %v361
    %v1808 = vunpack.c.l.b16 %v362
    %v1809 = vunpack.c.h.b16 %v362
    %v1810 = vunpack.c.l.b16 %v363
    %v1811 = vunpack.c.h.b16 %v363
    %v1812 = vunpack.c.l.b16 %v364
    %v1813 = vunpack.c.h.b16 %v364
    %v1814 = vunpack.c.l.b16 %v365
    %v1815 = vunpack.c.h.b16 %v365
    %v1816 = vunpack.c.l.b16 %v366
    %v1817 = vunpack.c.h.b16 %v366
    %v1818 = vunpack.c.l.b16 %v367
    %v1819 = vunpack.c.h.b16 %v367
    %v1820 = vunpack.c.l.b16 %v368
    %v1821 = vunpack.c.h.b16 %v368
    %v1822 = vunpack.c.l.b16 %v369
    %v1823 = vunpack.c.h.b16 %v369
    %v1824 = vunpack.c.l.b16 %v370
    %v1825 = vunpack.c.h.b16 %v370
    %v1826 = vunpack.c.l.b16 %v371
    %v1827 = vunpack.c.h.b16 %v371
    %v1828 = vunpack.c.l.b16 %v372
    %v1829 = vunpack.c.h.b16 %v372
    %v1830 = vunpack.c.l.b16 %v373
    %v1831 = vunpack.c.h.b16 %v373
    %v1832 = vunpack.c.l.b16 %v374
    %v1833 = vunpack.c.h.b16 %v374
    %v1834 = vunpack.c.l.b16 %v375
    %v1835 = vunpack.c.h.b16 %v375
    %v1836 = vunpack.c.l.b16 %v376
    %v1837 = vunpack.c.h.b16 %v376
    %v1838 = vunpack.c.l.b16 %v377
    %v1839 = vunpack.c.h.b16 %v377
    %v1840 = vunpack.c.l.b16 %v378
    %v1841 = vunpack.c.h.b16 %v378
    %v1842 = vunpack.c.l.b16 %v379
    %v1843 = vunpack.c.h.b16 %v379
    %v1844 = vunpack.c.l.b16 %v380
    %v1845 = vunpack.c.h.b16 %v380
    %v1846 = vunpack.c.l.b16 %v381
    %v1847 = vunpack.c.h.b16 %v381
    %v1848 = vunpack.c.l.b16 %v382
    %v1849 = vunpack.c.h.b16 %v382
    %v1850 = vunpack.c.l.b16 %v383
    %v1851 = vunpack.c.h.b16 %v383
    %v1852 = vunpack.c.l.b16 %v384
    %v1853 = vunpack.c.h.b16 %v384
    %v1854 = vunpack.c.l.b16 %v385
    %v1855 = vunpack.c.h.b16 %v385
    %v1856 = vunpack.c.l.b16 %v386
    %v1857 = vunpack.c.h.b16 %v386
    %v1858 = vunpack.c.l.b16 %v387
    %v1859 = vunpack.c.h.b16 %v387
    %v1860 = vunpack.c.l.b16 %v388
    %v1861 = vunpack.c.h.b16 %v388
    %v1862 = vunpack.c.l.b16 %v389
    %v1863 = vunpack.c.h.b16 %v389
    %v1864 = vunpack.c.l.b16 %v390
    %v1865 = vunpack.c.h.b16 %v390
    %v1866 = vunpack.c.l.b16 %v391
    %v1867 = vunpack.c.h.b16 %v391
    %v1868 = vunpack.c.l.b16 %v392
    %v1869 = vunpack.c.h.b16 %v392
    %v1870 = vunpack.c.l.b16 %v393
    %v1871 = vunpack.c.h.b16 %v393
    %v1872 = vunpack.c.l.b16 %v394
    %v1873 = vunpack.c.h.b16 %v394
    %v1874 = vunpack.c.l.b16 %v395
    %v1875 = vunpack.c.h.b16 %v395
    %v1876 = vunpack.c.l.b16 %v396
    %v1877 = vunpack.c.h.b16 %v396
    %v1878 = vunpack.c.l.b16 %v397
    %v1879 = vunpack.c.h.b16 %v397
    %v1880 = vunpack.c.l.b16 %v398
    %v1881 = vunpack.c.h.b16 %v398
    %v1882 = vunpack.c.l.b16 %v399
    %v1883 = vunpack.c.h.b16 %v399
    %v1884 = vunpack.c.l.b16 %v400
    %v1885 = vunpack.c.h.b16 %v400
    %v1886 = vunpack.c.l.b16 %v401
    %v1887 = vunpack.c.h.b16 %v401
    %v1888 = vunpack.c.l.b16 %v402
    %v1889 = vunpack.c.h.b16 %v402
    %v1890 = vunpack.c.l.b16 %v403
    %v1891 = vunpack.c.h.b16 %v403
    %v1892 = vunpack.c.l.b16 %v404
    %v1893 = vunpack.c.h.b16 %v404
    %v1894 = vunpack.c.l.b16 %v405
    %v1895 = vunpack.c.h.b16 %v405
    %v1896 = vunpack.c.l.b16 %v406
    %v1897 = vunpack.c.h.b16 %v406
    %v1898 = vunpack.c.l.b16 %v407
    %v1899 = vunpack.c.h.b16 %v407
    %v1900 = vpack.c.b16 %v1648, %v1644
    %v1901 = vpack.c.b16 %v1649, %v1645
    %v1902 = vpack.c.b16 %v1650, %v1646
    %v1903 = vpack.c.b16 %v1651, %v1647
    %v1904 = vpack.c.b16 %v1656, %v1652
    %v1905 = vpack.c.b16 %v1657, %v1653
    %v1906 = vpack.c.b16 %v1658, %v1654
    %v1907 = vpack.c.b16 %v1659, %v1655
    %v1908 = vpack.c.b16 %v1664, %v1660
    %v1909 = vpack.c.b16 %v1665, %v1661
    %v1910 = vpack.c.b16 %v1666, %v1662
    %v1911 = vpack.c.b16 %v1667, %v1663
    %v1912 = vpack.c.b16 %v1672, %v1668
    %v1913 = vpack.c.b16 %v1673, %v1669
    %v1914 = vpack.c.b16 %v1674, %v1670
    %v1915 = vpack.c.b16 %v1675, %v1671
    %v1916 = vpack.c.b16 %v1680, %v1676
    %v1917 = vpack.c.b16 %v1681, %v1677
    %v1918 = vpack.c.b16 %v1682, %v1678
    %v1919 = vpack.c.b16 %v1683, %v1679
    %v1920 = vpack.c.b16 %v1688, %v1684
    %v1921 = vpack.c.b16 %v1689, %v1685
    %v1922 = vpack.c.b16 %v1690, %v1686
    %v1923 = vpack.c.b16 %v1691, %v1687
    %v1924 = vpack.c.b16 %v1696, %v1692
    %v1925 = vpack.c.b16 %v1697, %v1693
    %v1926 = vpack.c.b16 %v1698, %v1694
    %v1927 = vpack.c.b16 %v1699, %v1695
    %v1928 = vpack.c.b16 %v1704, %v1700
    %v1929 = vpack.c.b16 %v1705, %v1701
    %v1930 = vpack.c.b16 %v1706, %v1702
    %v1931 = vpack.c.b16 %v1707, %v1703
    %v1932 = vpack.c.b16 %v1712, %v1708
    %v1933 = vpack.c.b16 %v1713, %v1709
    %v1934 = vpack.c.b16 %v1714, %v1710
    %v1935 = vpack.c.b16 %v1715, %v1711
    %v1936 = vpack.c.b16 %v1720, %v1716
    %v1937 = vpack.c.b16 %v1721, %v1717
    %v1938 = vpack.c.b16 %v1722, %v1718
    %v1939 = vpack.c.b16 %v1723, %v1719
    %v1940 = vpack.c.b16 %v1728, %v1724
    %v1941 = vpack.c.b16 %v1729, %v1725
    %v1942 = vpack.c.b16 %v1730, %v1726
    %v1943 = vpack.c.b16 %v1731, %v1727
    %v1944 = vpack.c.b16 %v1736, %v1732
    %v1945 = vpack.c.b16 %v1737, %v1733
    %v1946 = vpack.c.b16 %v1738, %v1734
    %v1947 = vpack.c.b16 %v1739, %v1735
    %v1948 = vpack.c.b16 %v1744, %v1740
    %v1949 = vpack.c.b16 %v1745, %v1741
    %v1950 = vpack.c.b16 %v1746, %v1742
    %v1951 = vpack.c.b16 %v1747, %v1743
    %v1952 = vpack.c.b16 %v1752, %v1748
    %v1953 = vpack.c.b16 %v1753, %v1749
    %v1954 = vpack.c.b16 %v1754, %v1750
    %v1955 = vpack.c.b16 %v1755, %v1751
    %v1956 = vpack.c.b16 %v1760, %v1756
    %v1957 = vpack.c.b16 %v1761, %v1757
    %v1958 = vpack.c.b16 %v1762, %v1758
    %v1959 = vpack.c.b16 %v1763, %v1759
    %v1960 = vpack.c.b16 %v1768, %v1764
    %v1961 = vpack.c.b16 %v1769, %v1765
    %v1962 = vpack.c.b16 %v1770, %v1766
    %v1963 = vpack.c.b16 %v1771, %v1767
    %v1964 = vpack.c.b16 %v1776, %v1772
    %v1965 = vpack.c.b16 %v1777, %v1773
    %v1966 = vpack.c.b16 %v1778, %v1774
    %v1967 = vpack.c.b16 %v1779, %v1775
    %v1968 = vpack.c.b16 %v1784, %v1780
    %v1969 = vpack.c.b16 %v1785, %v1781
    %v1970 = vpack.c.b16 %v1786, %v1782
    %v1971 = vpack.c.b16 %v1787, %v1783
    %v1972 = vpack.c.b16 %v1792, %v1788
    %v1973 = vpack.c.b16 %v1793, %v1789
    %v1974 = vpack.c.b16 %v1794, %v1790
    %v1975 = vpack.c.b16 %v1795, %v1791
    %v1976 = vpack.c.b16 %v1800, %v1796
    %v1977 = vpack.c.b16 %v1801, %v1797
    %v1978 = vpack.c.b16 %v1802, %v1798
    %v1979 = vpack.c.b16 %v1803, %v1799
    %v1980 = vpack.c.b16 %v1808, %v1804
    %v1981 = vpack.c.b16 %v1809, %v1805
    %v1982 = vpack.c.b16 %v1810, %v1806
    %v1983 = vpack.c.b16 %v1811, %v1807
    %v1984 = vpack.c.b16 %v1816, %v1812
    %v1985 = vpack.c.b16 %v1817, %v1813
    %v1986 = vpack.c.b16 %v1818, %v1814
    %v1987 = vpack.c.b16 %v1819, %v1815
    %v1988 = vpack.c.b16 %v1824, %v1820
    %v1989 = vpack.c.b16 %v1825, %v1821
    %v1990 = vpack.c.b16 %v1826, %v1822
    %v1991 = vpack.c.b16 %v1827, %v1823
    %v1992 = vpack.c.b16 %v1832, %v1828
    %v1993 = vpack.c.b16 %v1833, %v1829
    %v1994 = vpack.c.b16 %v1834, %v1830
    %v1995 = vpack.c.b16 %v1835, %v1831
    %v1996 = vpack.c.b16 %v1840, %v1836
    %v1997 = vpack.c.b16 %v1841, %v1837
    %v1998 = vpack.c.b16 %v1842, %v1838
    %v1999 = vpack.c.b16 %v1843, %v1839
    %v2000 = vpack.c.b16 %v1848, %v1844
    %v2001 = vpack.c.b16 %v1849, %v1845
    %v2002 = vpack.c.b16 %v1850, %v1846
    %v2003 = vpack.c.b16 %v1851, %v1847
    %v2004 = vpack.c.b16 %v1856, %v1852
    %v2005 = vpack.c.b16 %v1857, %v1853
    %v2006 = vpack.c.b16 %v1858, %v1854
    %v2007 = vpack.c.b16 %v1859, %v1855
    %v2008 = vpack.c.b16 %v1864, %v1860
    %v2009 = vpack.c.b16 %v1865, %v1861
    %v2010 = vpack.c.b16 %v1866, %v1862
    %v2011 = vpack.c.b16 %v1867, %v1863
    %v2012 = vpack.c.b16 %v1872, %v1868
    %v2013 = vpack.c.b16 %v1873, %v1869
    %v2014 = vpack.c.b16 %v1874, %v1870
    %v2015 = vpack.c.b16 %v1875, %v1871
    %v2016 = vpack.c.b16 %v1880, %v1876
    %v2017 = vpack.c.b16 %v1881, %v1877
    %v2018 = vpack.c.b16 %v1882, %v1878
    %v2019 = vpack.c.b16 %v1883, %v1879
    %v2020 = vpack.c.b16 %v1888, %v1884
    %v2021 = vpack.c.b16 %v1889, %v1885
    %v2022 = vpack.c.b16 %v1890, %v1886
    %v2023 = vpack.c.b16 %v1891, %v1887
    %v2024 = vpack.c.b16 %v1896, %v1892
    %v2025 = vpack.c.b16 %v1897, %v1893
    %v2026 = vpack.c.b16 %v1898, %v1894
    %v2027 = vpack.c.b16 %v1899, %v1895
    %2156 = vmatprep.subr.bf16.mxu0 %v1901
    %2157 = vmatpush1.bf16.msra.mxu0 %v1900
    %2158 = vmatprep.subr.bf16.mxu0 %v1905
    %2159 = vmatpush1.bf16.msra.mxu0 %v1904
    %2160 = vmatprep.subr.bf16.mxu0 %v1909
    %2161 = vmatpush1.bf16.msra.mxu0 %v1908
    %2162 = vmatprep.subr.bf16.mxu0 %v1913
    %2163 = vmatpush1.bf16.msra.mxu0 %v1912
    %2164 = vmatprep.subr.bf16.mxu0 %v1917
    %2165 = vmatpush1.bf16.msra.mxu0 %v1916
    %2166 = vmatprep.subr.bf16.mxu0 %v1921
    %2167 = vmatpush1.bf16.msra.mxu0 %v1920
    %2168 = vmatprep.subr.bf16.mxu0 %v1925
    %2169 = vmatpush1.bf16.msra.mxu0 %v1924
    %2170 = vmatprep.subr.bf16.mxu0 %v1929
    %2171 = vmatpush1.bf16.msra.mxu0 %v1928
    %2172 = vmatprep.subr.bf16.mxu0 %v1933
    %2173 = vmatpush1.bf16.msra.mxu0 %v1932
    %2174 = vmatprep.subr.bf16.mxu0 %v1937
    %2175 = vmatpush1.bf16.msra.mxu0 %v1936
    %2176 = vmatprep.subr.bf16.mxu0 %v1941
    %2177 = vmatpush1.bf16.msra.mxu0 %v1940
    %2178 = vmatprep.subr.bf16.mxu0 %v1945
    %2179 = vmatpush1.bf16.msra.mxu0 %v1944
    %2180 = vmatprep.subr.bf16.mxu0 %v1949
    %2181 = vmatpush1.bf16.msra.mxu0 %v1948
    %2182 = vmatprep.subr.bf16.mxu0 %v1953
    %2183 = vmatpush1.bf16.msra.mxu0 %v1952
    %2184 = vmatprep.subr.bf16.mxu0 %v1957
    %2185 = vmatpush1.bf16.msra.mxu0 %v1956
    %2186 = vmatprep.subr.bf16.mxu0 %v1961
    %2187 = vmatpush1.bf16.msra.mxu0 %v1960
    %2188 = vmatprep.mubr.bf16.mxu0 %v277
    %2189 = vmatmul.mubr.bf16.gmra.mrb[0].mxu0 %v276
    %v2190 = vpop.f32.mrb[0].mxu0
    %v2191 = vadd.f32 %v1422, %v2190
    %v2192 = vpop.f32.mrb[0].mxu0
    %v2193 = vadd.f32 %v1424, %v2192
    %v2194 = vpop.f32.mrb[0].mxu0
    %v2195 = vadd.f32 %v1426, %v2194
    %v2196 = vpop.f32.mrb[0].mxu0
    %v2197 = vadd.f32 %v1428, %v2196
    %2198 = vdwg.mxu0
    %2199 = vmatprep.subr.bf16.mxu0 %v1965
    %2200 = vmatpush1.bf16.msra.mxu0 %v1964
    %2201 = vmatprep.subr.bf16.mxu0 %v1969
    %2202 = vmatpush1.bf16.msra.mxu0 %v1968
    %2203 = vmatprep.subr.bf16.mxu0 %v1973
    %2204 = vmatpush1.bf16.msra.mxu0 %v1972
    %2205 = vmatprep.subr.bf16.mxu0 %v1977
    %2206 = vmatpush1.bf16.msra.mxu0 %v1976
    %2207 = vmatprep.subr.bf16.mxu0 %v1981
    %2208 = vmatpush1.bf16.msra.mxu0 %v1980
    %2209 = vmatprep.subr.bf16.mxu0 %v1985
    %2210 = vmatpush1.bf16.msra.mxu0 %v1984
    %2211 = vmatprep.subr.bf16.mxu0 %v1989
    %2212 = vmatpush1.bf16.msra.mxu0 %v1988
    %2213 = vmatprep.subr.bf16.mxu0 %v1993
    %2214 = vmatpush1.bf16.msra.mxu0 %v1992
    %2215 = vmatprep.subr.bf16.mxu0 %v1997
    %2216 = vmatpush1.bf16.msra.mxu0 %v1996
    %2217 = vmatprep.subr.bf16.mxu0 %v2001
    %2218 = vmatpush1.bf16.msra.mxu0 %v2000
    %2219 = vmatprep.subr.bf16.mxu0 %v2005
    %2220 = vmatpush1.bf16.msra.mxu0 %v2004
    %2221 = vmatprep.subr.bf16.mxu0 %v2009
    %2222 = vmatpush1.bf16.msra.mxu0 %v2008
    %2223 = vmatprep.subr.bf16.mxu0 %v2013
    %2224 = vmatpush1.bf16.msra.mxu0 %v2012
    %2225 = vmatprep.subr.bf16.mxu0 %v2017
    %2226 = vmatpush1.bf16.msra.mxu0 %v2016
    %2227 = vmatprep.subr.bf16.mxu0 %v2021
    %2228 = vmatpush1.bf16.msra.mxu0 %v2020
    %2229 = vmatprep.subr.bf16.mxu0 %v2025
    %2230 = vmatpush1.bf16.msra.mxu0 %v2024
    %2231 = vmatprep.mubr.bf16.mxu0 %v279
    %2232 = vmatmul.mubr.bf16.gmra.mrb[0].mxu0 %v278
    %v2233 = vpop.f32.mrb[0].mxu0
    %v2234 = vadd.f32 %v2191, %v2233
    %v2235 = vpop.f32.mrb[0].mxu0
    %v2236 = vadd.f32 %v2193, %v2235
    %v2237 = vpop.f32.mrb[0].mxu0
    %v2238 = vadd.f32 %v2195, %v2237
    %v2239 = vpop.f32.mrb[0].mxu0
    %v2240 = vadd.f32 %v2197, %v2239
    %2241 = vdwg.mxu0
    %2242 = vmatprep.subr.bf16.mxu0 %v1903
    %2243 = vmatpush1.bf16.msra.mxu0 %v1902
    %2244 = vmatprep.subr.bf16.mxu0 %v1907
    %2245 = vmatpush1.bf16.msra.mxu0 %v1906
    %2246 = vmatprep.subr.bf16.mxu0 %v1911
    %2247 = vmatpush1.bf16.msra.mxu0 %v1910
    %2248 = vmatprep.subr.bf16.mxu0 %v1915
    %2249 = vmatpush1.bf16.msra.mxu0 %v1914
    %2250 = vmatprep.subr.bf16.mxu0 %v1919
    %2251 = vmatpush1.bf16.msra.mxu0 %v1918
    %2252 = vmatprep.subr.bf16.mxu0 %v1923
    %2253 = vmatpush1.bf16.msra.mxu0 %v1922
    %2254 = vmatprep.subr.bf16.mxu0 %v1927
    %2255 = vmatpush1.bf16.msra.mxu0 %v1926
    %2256 = vmatprep.subr.bf16.mxu0 %v1931
    %2257 = vmatpush1.bf16.msra.mxu0 %v1930
    %2258 = vmatprep.subr.bf16.mxu0 %v1935
    %2259 = vmatpush1.bf16.msra.mxu0 %v1934
    %2260 = vmatprep.subr.bf16.mxu0 %v1939
    %2261 = vmatpush1.bf16.msra.mxu0 %v1938
    %2262 = vmatprep.subr.bf16.mxu0 %v1943
    %2263 = vmatpush1.bf16.msra.mxu0 %v1942
    %2264 = vmatprep.subr.bf16.mxu0 %v1947
    %2265 = vmatpush1.bf16.msra.mxu0 %v1946
    %2266 = vmatprep.subr.bf16.mxu0 %v1951
    %2267 = vmatpush1.bf16.msra.mxu0 %v1950
    %2268 = vmatprep.subr.bf16.mxu0 %v1955
    %2269 = vmatpush1.bf16.msra.mxu0 %v1954
    %2270 = vmatprep.subr.bf16.mxu0 %v1959
    %2271 = vmatpush1.bf16.msra.mxu0 %v1958
    %2272 = vmatprep.subr.bf16.mxu0 %v1963
    %2273 = vmatpush1.bf16.msra.mxu0 %v1962
    %2274 = vmatprep.mubr.bf16.mxu0 %v277
    %2275 = vmatmul.mubr.bf16.gmra.mrb[0].mxu0 %v276
    %v2276 = vpop.f32.mrb[0].mxu0
    %v2277 = vadd.f32 %v1508, %v2276
    %v2278 = vpop.f32.mrb[0].mxu0
    %v2279 = vadd.f32 %v1510, %v2278
    %v2280 = vpop.f32.mrb[0].mxu0
    %v2281 = vadd.f32 %v1512, %v2280
    %v2282 = vpop.f32.mrb[0].mxu0
    %v2283 = vadd.f32 %v1514, %v2282
    %2284 = vdwg.mxu0
    %2285 = vmatprep.subr.bf16.mxu0 %v1967
    %2286 = vmatpush1.bf16.msra.mxu0 %v1966
    %2287 = vmatprep.subr.bf16.mxu0 %v1971
    %2288 = vmatpush1.bf16.msra.mxu0 %v1970
    %2289 = vmatprep.subr.bf16.mxu0 %v1975
    %2290 = vmatpush1.bf16.msra.mxu0 %v1974
    %2291 = vmatprep.subr.bf16.mxu0 %v1979
    %2292 = vmatpush1.bf16.msra.mxu0 %v1978
    %2293 = vmatprep.subr.bf16.mxu0 %v1983
    %2294 = vmatpush1.bf16.msra.mxu0 %v1982
    %2295 = vmatprep.subr.bf16.mxu0 %v1987
    %2296 = vmatpush1.bf16.msra.mxu0 %v1986
    %2297 = vmatprep.subr.bf16.mxu0 %v1991
    %2298 = vmatpush1.bf16.msra.mxu0 %v1990
    %2299 = vmatprep.subr.bf16.mxu0 %v1995
    %2300 = vmatpush1.bf16.msra.mxu0 %v1994
    %2301 = vmatprep.subr.bf16.mxu0 %v1999
    %2302 = vmatpush1.bf16.msra.mxu0 %v1998
    %2303 = vmatprep.subr.bf16.mxu0 %v2003
    %2304 = vmatpush1.bf16.msra.mxu0 %v2002
    %2305 = vmatprep.subr.bf16.mxu0 %v2007
    %2306 = vmatpush1.bf16.msra.mxu0 %v2006
    %2307 = vmatprep.subr.bf16.mxu0 %v2011
    %2308 = vmatpush1.bf16.msra.mxu0 %v2010
    %2309 = vmatprep.subr.bf16.mxu0 %v2015
    %2310 = vmatpush1.bf16.msra.mxu0 %v2014
    %2311 = vmatprep.subr.bf16.mxu0 %v2019
    %2312 = vmatpush1.bf16.msra.mxu0 %v2018
    %2313 = vmatprep.subr.bf16.mxu0 %v2023
    %2314 = vmatpush1.bf16.msra.mxu0 %v2022
    %2315 = vmatprep.subr.bf16.mxu0 %v2027
    %2316 = vmatpush1.bf16.msra.mxu0 %v2026
    %2317 = vmatprep.mubr.bf16.mxu0 %v279
    %2318 = vmatmul.mubr.bf16.gmra.mrb[0].mxu0 %v278
    %v2319 = vpop.f32.mrb[0].mxu0
    %v2320 = vadd.f32 %v2277, %v2319
    %v2321 = vpop.f32.mrb[0].mxu0
    %v2322 = vadd.f32 %v2279, %v2321
    %v2323 = vpop.f32.mrb[0].mxu0
    %v2324 = vadd.f32 %v2281, %v2323
    %v2325 = vpop.f32.mrb[0].mxu0
    %v2326 = vadd.f32 %v2283, %v2325
    %2327 = vdwg.mxu0
    %v2328 = vld [vmem:[#allocation5 + $0x20] sm:$0xff]
    %v2329 = vld [vmem:[#allocation5 + $0x28] sm:$0xff]
    %v2330 = vld [vmem:[#allocation5 + $0x60] sm:$0xff]
    %v2331 = vld [vmem:[#allocation5 + $0x68] sm:$0xff]
    %v2332 = vld [vmem:[#allocation5 + $0xa0] sm:$0xff]
    %v2333 = vld [vmem:[#allocation5 + $0xa8] sm:$0xff]
    %v2334 = vld [vmem:[#allocation5 + $0xe0] sm:$0xff]
    %v2335 = vld [vmem:[#allocation5 + $0xe8] sm:$0xff]
    %v2336 = vld [vmem:[#allocation7 + $0x8] sm:$0xf]
    %v2338 = vlaneseq
    %v2339 = vshrl.u32 %v2338, 7
    %v2340 = vsub.s32 0, %v2339
    %v2341 = vrot.slane %v2336, %v2340
    %v2342 = vlaneseq
    %v2343 = vshrl.u32 %v2342, 7
    %v2344 = vsub.s32 1, %v2343
    %v2345 = vrot.slane %v2336, %v2344
    %v2346 = vlaneseq
    %v2347 = vshrl.u32 %v2346, 7
    %v2348 = vsub.s32 2, %v2347
    %v2349 = vrot.slane %v2336, %v2348
    %v2350 = vlaneseq
    %v2351 = vshrl.u32 %v2350, 7
    %v2352 = vsub.s32 3, %v2351
    %v2353 = vrot.slane %v2336, %v2352
    %v2366 = vunpack.c.l.b16 %v2328
    %v2367 = vunpack.c.h.b16 %v2328
    %v2368 = vunpack.c.l.b16 %v2329
    %v2369 = vunpack.c.h.b16 %v2329
    %v2370 = vunpack.c.l.b16 %v2330
    %v2371 = vunpack.c.h.b16 %v2330
    %v2372 = vunpack.c.l.b16 %v2331
    %v2373 = vunpack.c.h.b16 %v2331
    %v2374 = vunpack.c.l.b16 %v2332
    %v2375 = vunpack.c.h.b16 %v2332
    %v2376 = vunpack.c.l.b16 %v2333
    %v2377 = vunpack.c.h.b16 %v2333
    %v2378 = vunpack.c.l.b16 %v2334
    %v2379 = vunpack.c.h.b16 %v2334
    %v2380 = vunpack.c.l.b16 %v2335
    %v2381 = vunpack.c.h.b16 %v2335
    %v2382 = vpack.c.b16 %v2370, %v2366
    %v2383 = vpack.c.b16 %v2371, %v2367
    %v2384 = vpack.c.b16 %v2372, %v2368
    %v2385 = vpack.c.b16 %v2373, %v2369
    %v2386 = vpack.c.b16 %v2378, %v2374
    %v2387 = vpack.c.b16 %v2379, %v2375
    %v2388 = vpack.c.b16 %v2380, %v2376
    %v2389 = vpack.c.b16 %v2381, %v2377
    %2398 = vmatprep.subr.bf16.mxu0 %v2383
    %2399 = vmatpush1.bf16.msra.mxu0 %v2382
    %2400 = vmatprep.subr.bf16.mxu0 %v2387
    %2401 = vmatpush1.bf16.msra.mxu0 %v2386
    %2402 = vmatprep.subr.bf16.mxu0 0
    %2403 = vmatpush1.bf16.msra.mxu0 0
    %2404 = vmatprep.subr.bf16.mxu0 0
    %2405 = vmatpush1.bf16.msra.mxu0 0
    %2406 = vmatprep.subr.bf16.mxu0 0
    %2407 = vmatpush1.bf16.msra.mxu0 0
    %2408 = vmatprep.subr.bf16.mxu0 0
    %2409 = vmatpush1.bf16.msra.mxu0 0
    %2410 = vmatprep.subr.bf16.mxu0 0
    %2411 = vmatpush1.bf16.msra.mxu0 0
    %2412 = vmatprep.subr.bf16.mxu0 0
    %2413 = vmatpush1.bf16.msra.mxu0 0
    %2414 = vmatprep.subr.bf16.mxu0 0
    %2415 = vmatpush1.bf16.msra.mxu0 0
    %2416 = vmatprep.subr.bf16.mxu0 0
    %2417 = vmatpush1.bf16.msra.mxu0 0
    %2418 = vmatprep.subr.bf16.mxu0 0
    %2419 = vmatpush1.bf16.msra.mxu0 0
    %2420 = vmatprep.subr.bf16.mxu0 0
    %2421 = vmatpush1.bf16.msra.mxu0 0
    %2422 = vmatprep.subr.bf16.mxu0 0
    %2423 = vmatpush1.bf16.msra.mxu0 0
    %2424 = vmatprep.subr.bf16.mxu0 0
    %2425 = vmatpush1.bf16.msra.mxu0 0
    %2426 = vmatprep.subr.bf16.mxu0 0
    %2427 = vmatpush1.bf16.msra.mxu0 0
    %2428 = vmatprep.subr.bf16.mxu0 0
    %2429 = vmatpush1.bf16.msra.mxu0 0
    %2430 = vmatprep.mubr.bf16.mxu0 0
    %2431 = vmatmul.mubr.bf16.gmra.mrb[0].mxu0 %v180
    %v2432 = vpop.f32.mrb[0].mxu0
    %v2433 = vadd.f32 %v2341, %v2432
    %v2434 = vpop.f32.mrb[0].mxu0
    %v2435 = vadd.f32 %v2345, %v2434
    %v2436 = vpop.f32.mrb[0].mxu0
    %v2437 = vadd.f32 %v2341, %v2436
    %v2438 = vpop.f32.mrb[0].mxu0
    %v2439 = vadd.f32 %v2345, %v2438
    %2440 = vdwg.mxu0
    %2441 = vmatprep.subr.bf16.mxu0 %v2385
    %2442 = vmatpush1.bf16.msra.mxu0 %v2384
    %2443 = vmatprep.subr.bf16.mxu0 %v2389
    %2444 = vmatpush1.bf16.msra.mxu0 %v2388
    %2445 = vmatprep.subr.bf16.mxu0 0
    %2446 = vmatpush1.bf16.msra.mxu0 0
    %2447 = vmatprep.subr.bf16.mxu0 0
    %2448 = vmatpush1.bf16.msra.mxu0 0
    %2449 = vmatprep.subr.bf16.mxu0 0
    %2450 = vmatpush1.bf16.msra.mxu0 0
    %2451 = vmatprep.subr.bf16.mxu0 0
    %2452 = vmatpush1.bf16.msra.mxu0 0
    %2453 = vmatprep.subr.bf16.mxu0 0
    %2454 = vmatpush1.bf16.msra.mxu0 0
    %2455 = vmatprep.subr.bf16.mxu0 0
    %2456 = vmatpush1.bf16.msra.mxu0 0
    %2457 = vmatprep.subr.bf16.mxu0 0
    %2458 = vmatpush1.bf16.msra.mxu0 0
    %2459 = vmatprep.subr.bf16.mxu0 0
    %2460 = vmatpush1.bf16.msra.mxu0 0
    %2461 = vmatprep.subr.bf16.mxu0 0
    %2462 = vmatpush1.bf16.msra.mxu0 0
    %2463 = vmatprep.subr.bf16.mxu0 0
    %2464 = vmatpush1.bf16.msra.mxu0 0
    %2465 = vmatprep.subr.bf16.mxu0 0
    %2466 = vmatpush1.bf16.msra.mxu0 0
    %2467 = vmatprep.subr.bf16.mxu0 0
    %2468 = vmatpush1.bf16.msra.mxu0 0
    %2469 = vmatprep.subr.bf16.mxu0 0
    %2470 = vmatpush1.bf16.msra.mxu0 0
    %2471 = vmatprep.subr.bf16.mxu0 0
    %2472 = vmatpush1.bf16.msra.mxu0 0
    %2473 = vmatprep.mubr.bf16.mxu0 0
    %2474 = vmatmul.mubr.bf16.gmra.mrb[0].mxu0 %v180
    %v2475 = vpop.f32.mrb[0].mxu0
    %v2476 = vadd.f32 %v2349, %v2475
    %v2477 = vpop.f32.mrb[0].mxu0
    %v2478 = vadd.f32 %v2353, %v2477
    %v2479 = vpop.f32.mrb[0].mxu0
    %v2480 = vadd.f32 %v2349, %v2479
    %v2481 = vpop.f32.mrb[0].mxu0
    %v2482 = vadd.f32 %v2353, %v2481
    %2483 = vdwg.mxu0
    %v2484 = vtanh.pop %v2433
    %v2485 = vtanh.pop %v2435
    %v2486 = vtanh.pop %v2476
    %v2487 = vtanh.pop %v2478
    %v2488 = vtanh.pop %v2437
    %v2489 = vtanh.pop %v2439
    %v2490 = vtanh.pop %v2480
    %v2491 = vtanh.pop %v2482
    %v2492 = vpack.c.bf16 %v2488, %v2484
    %v2493 = vpack.c.bf16 %v2489, %v2485
    %v2494 = vpack.c.bf16 %v2490, %v2486
    %v2495 = vpack.c.bf16 %v2491, %v2487
    %v2496 = vld [vmem:[#allocation8 + $0x800] sm:$0xff]
    %v2497 = vld [vmem:[#allocation8 + $0x808] sm:$0xff]
    %v2498 = vld [vmem:[#allocation8 + $0x810] sm:$0xff]
    %v2499 = vld [vmem:[#allocation8 + $0x818] sm:$0xff]
    %v2500 = vld [vmem:[#allocation8 + $0x820] sm:$0xff]
    %v2501 = vld [vmem:[#allocation8 + $0x828] sm:$0xff]
    %v2502 = vld [vmem:[#allocation8 + $0x830] sm:$0xff]
    %v2503 = vld [vmem:[#allocation8 + $0x838] sm:$0xff]
    %v2504 = vld [vmem:[#allocation8 + $0x840] sm:$0xff]
    %v2505 = vld [vmem:[#allocation8 + $0x848] sm:$0xff]
    %v2506 = vld [vmem:[#allocation8 + $0x850] sm:$0xff]
    %v2507 = vld [vmem:[#allocation8 + $0x858] sm:$0xff]
    %v2508 = vld [vmem:[#allocation8 + $0x860] sm:$0xff]
    %v2509 = vld [vmem:[#allocation8 + $0x868] sm:$0xff]
    %v2510 = vld [vmem:[#allocation8 + $0x870] sm:$0xff]
    %v2511 = vld [vmem:[#allocation8 + $0x878] sm:$0xff]
    %v2512 = vld [vmem:[#allocation8 + $0x880] sm:$0xff]
    %v2513 = vld [vmem:[#allocation8 + $0x888] sm:$0xff]
    %v2514 = vld [vmem:[#allocation8 + $0x890] sm:$0xff]
    %v2515 = vld [vmem:[#allocation8 + $0x898] sm:$0xff]
    %v2516 = vld [vmem:[#allocation8 + $0x8a0] sm:$0xff]
    %v2517 = vld [vmem:[#allocation8 + $0x8a8] sm:$0xff]
    %v2518 = vld [vmem:[#allocation8 + $0x8b0] sm:$0xff]
    %v2519 = vld [vmem:[#allocation8 + $0x8b8] sm:$0xff]
    %v2520 = vld [vmem:[#allocation8 + $0x8c0] sm:$0xff]
    %v2521 = vld [vmem:[#allocation8 + $0x8c8] sm:$0xff]
    %v2522 = vld [vmem:[#allocation8 + $0x8d0] sm:$0xff]
    %v2523 = vld [vmem:[#allocation8 + $0x8d8] sm:$0xff]
    %v2524 = vld [vmem:[#allocation8 + $0x8e0] sm:$0xff]
    %v2525 = vld [vmem:[#allocation8 + $0x8e8] sm:$0xff]
    %v2526 = vld [vmem:[#allocation8 + $0x8f0] sm:$0xff]
    %v2527 = vld [vmem:[#allocation8 + $0x8f8] sm:$0xff]
    %v2528 = vld [vmem:[#allocation8 + $0x900] sm:$0xff]
    %v2529 = vld [vmem:[#allocation8 + $0x908] sm:$0xff]
    %v2530 = vld [vmem:[#allocation8 + $0x910] sm:$0xff]
    %v2531 = vld [vmem:[#allocation8 + $0x918] sm:$0xff]
    %v2532 = vld [vmem:[#allocation8 + $0x920] sm:$0xff]
    %v2533 = vld [vmem:[#allocation8 + $0x928] sm:$0xff]
    %v2534 = vld [vmem:[#allocation8 + $0x930] sm:$0xff]
    %v2535 = vld [vmem:[#allocation8 + $0x938] sm:$0xff]
    %v2536 = vld [vmem:[#allocation8 + $0x940] sm:$0xff]
    %v2537 = vld [vmem:[#allocation8 + $0x948] sm:$0xff]
    %v2538 = vld [vmem:[#allocation8 + $0x950] sm:$0xff]
    %v2539 = vld [vmem:[#allocation8 + $0x958] sm:$0xff]
    %v2540 = vld [vmem:[#allocation8 + $0x960] sm:$0xff]
    %v2541 = vld [vmem:[#allocation8 + $0x968] sm:$0xff]
    %v2542 = vld [vmem:[#allocation8 + $0x970] sm:$0xff]
    %v2543 = vld [vmem:[#allocation8 + $0x978] sm:$0xff]
    %v2544 = vld [vmem:[#allocation8 + $0x980] sm:$0xff]
    %v2545 = vld [vmem:[#allocation8 + $0x988] sm:$0xff]
    %v2546 = vld [vmem:[#allocation8 + $0x990] sm:$0xff]
    %v2547 = vld [vmem:[#allocation8 + $0x998] sm:$0xff]
    %v2548 = vld [vmem:[#allocation8 + $0x9a0] sm:$0xff]
    %v2549 = vld [vmem:[#allocation8 + $0x9a8] sm:$0xff]
    %v2550 = vld [vmem:[#allocation8 + $0x9b0] sm:$0xff]
    %v2551 = vld [vmem:[#allocation8 + $0x9b8] sm:$0xff]
    %v2552 = vld [vmem:[#allocation8 + $0x9c0] sm:$0xff]
    %v2553 = vld [vmem:[#allocation8 + $0x9c8] sm:$0xff]
    %v2554 = vld [vmem:[#allocation8 + $0x9d0] sm:$0xff]
    %v2555 = vld [vmem:[#allocation8 + $0x9d8] sm:$0xff]
    %v2556 = vld [vmem:[#allocation8 + $0x9e0] sm:$0xff]
    %v2557 = vld [vmem:[#allocation8 + $0x9e8] sm:$0xff]
    %v2558 = vld [vmem:[#allocation8 + $0x9f0] sm:$0xff]
    %v2559 = vld [vmem:[#allocation8 + $0x9f8] sm:$0xff]
    %v2560 = vld [vmem:[#allocation8 + $0xa00] sm:$0xff]
    %v2561 = vld [vmem:[#allocation8 + $0xa08] sm:$0xff]
    %v2562 = vld [vmem:[#allocation8 + $0xa10] sm:$0xff]
    %v2563 = vld [vmem:[#allocation8 + $0xa18] sm:$0xff]
    %v2564 = vld [vmem:[#allocation8 + $0xa20] sm:$0xff]
    %v2565 = vld [vmem:[#allocation8 + $0xa28] sm:$0xff]
    %v2566 = vld [vmem:[#allocation8 + $0xa30] sm:$0xff]
    %v2567 = vld [vmem:[#allocation8 + $0xa38] sm:$0xff]
    %v2568 = vld [vmem:[#allocation8 + $0xa40] sm:$0xff]
    %v2569 = vld [vmem:[#allocation8 + $0xa48] sm:$0xff]
    %v2570 = vld [vmem:[#allocation8 + $0xa50] sm:$0xff]
    %v2571 = vld [vmem:[#allocation8 + $0xa58] sm:$0xff]
    %v2572 = vld [vmem:[#allocation8 + $0xa60] sm:$0xff]
    %v2573 = vld [vmem:[#allocation8 + $0xa68] sm:$0xff]
    %v2574 = vld [vmem:[#allocation8 + $0xa70] sm:$0xff]
    %v2575 = vld [vmem:[#allocation8 + $0xa78] sm:$0xff]
    %v2576 = vld [vmem:[#allocation8 + $0xa80] sm:$0xff]
    %v2577 = vld [vmem:[#allocation8 + $0xa88] sm:$0xff]
    %v2578 = vld [vmem:[#allocation8 + $0xa90] sm:$0xff]
    %v2579 = vld [vmem:[#allocation8 + $0xa98] sm:$0xff]
    %v2580 = vld [vmem:[#allocation8 + $0xaa0] sm:$0xff]
    %v2581 = vld [vmem:[#allocation8 + $0xaa8] sm:$0xff]
    %v2582 = vld [vmem:[#allocation8 + $0xab0] sm:$0xff]
    %v2583 = vld [vmem:[#allocation8 + $0xab8] sm:$0xff]
    %v2584 = vld [vmem:[#allocation8 + $0xac0] sm:$0xff]
    %v2585 = vld [vmem:[#allocation8 + $0xac8] sm:$0xff]
    %v2586 = vld [vmem:[#allocation8 + $0xad0] sm:$0xff]
    %v2587 = vld [vmem:[#allocation8 + $0xad8] sm:$0xff]
    %v2588 = vld [vmem:[#allocation8 + $0xae0] sm:$0xff]
    %v2589 = vld [vmem:[#allocation8 + $0xae8] sm:$0xff]
    %v2590 = vld [vmem:[#allocation8 + $0xaf0] sm:$0xff]
    %v2591 = vld [vmem:[#allocation8 + $0xaf8] sm:$0xff]
    %v2592 = vld [vmem:[#allocation8 + $0xb00] sm:$0xff]
    %v2593 = vld [vmem:[#allocation8 + $0xb08] sm:$0xff]
    %v2594 = vld [vmem:[#allocation8 + $0xb10] sm:$0xff]
    %v2595 = vld [vmem:[#allocation8 + $0xb18] sm:$0xff]
    %v2596 = vld [vmem:[#allocation8 + $0xb20] sm:$0xff]
    %v2597 = vld [vmem:[#allocation8 + $0xb28] sm:$0xff]
    %v2598 = vld [vmem:[#allocation8 + $0xb30] sm:$0xff]
    %v2599 = vld [vmem:[#allocation8 + $0xb38] sm:$0xff]
    %v2600 = vld [vmem:[#allocation8 + $0xb40] sm:$0xff]
    %v2601 = vld [vmem:[#allocation8 + $0xb48] sm:$0xff]
    %v2602 = vld [vmem:[#allocation8 + $0xb50] sm:$0xff]
    %v2603 = vld [vmem:[#allocation8 + $0xb58] sm:$0xff]
    %v2604 = vld [vmem:[#allocation8 + $0xb60] sm:$0xff]
    %v2605 = vld [vmem:[#allocation8 + $0xb68] sm:$0xff]
    %v2606 = vld [vmem:[#allocation8 + $0xb70] sm:$0xff]
    %v2607 = vld [vmem:[#allocation8 + $0xb78] sm:$0xff]
    %v2608 = vld [vmem:[#allocation8 + $0xb80] sm:$0xff]
    %v2609 = vld [vmem:[#allocation8 + $0xb88] sm:$0xff]
    %v2610 = vld [vmem:[#allocation8 + $0xb90] sm:$0xff]
    %v2611 = vld [vmem:[#allocation8 + $0xb98] sm:$0xff]
    %v2612 = vld [vmem:[#allocation8 + $0xba0] sm:$0xff]
    %v2613 = vld [vmem:[#allocation8 + $0xba8] sm:$0xff]
    %v2614 = vld [vmem:[#allocation8 + $0xbb0] sm:$0xff]
    %v2615 = vld [vmem:[#allocation8 + $0xbb8] sm:$0xff]
    %v2616 = vld [vmem:[#allocation8 + $0xbc0] sm:$0xff]
    %v2617 = vld [vmem:[#allocation8 + $0xbc8] sm:$0xff]
    %v2618 = vld [vmem:[#allocation8 + $0xbd0] sm:$0xff]
    %v2619 = vld [vmem:[#allocation8 + $0xbd8] sm:$0xff]
    %v2620 = vld [vmem:[#allocation8 + $0xbe0] sm:$0xff]
    %v2621 = vld [vmem:[#allocation8 + $0xbe8] sm:$0xff]
    %v2622 = vld [vmem:[#allocation8 + $0xbf0] sm:$0xff]
    %v2623 = vld [vmem:[#allocation8 + $0xbf8] sm:$0xff]
    %v2752 = vunpack.c.l.b16 %v2496
    %v2753 = vunpack.c.h.b16 %v2496
    %v2754 = vunpack.c.l.b16 %v2497
    %v2755 = vunpack.c.h.b16 %v2497
    %v2756 = vunpack.c.l.b16 %v2498
    %v2757 = vunpack.c.h.b16 %v2498
    %v2758 = vunpack.c.l.b16 %v2499
    %v2759 = vunpack.c.h.b16 %v2499
    %v2760 = vunpack.c.l.b16 %v2500
    %v2761 = vunpack.c.h.b16 %v2500
    %v2762 = vunpack.c.l.b16 %v2501
    %v2763 = vunpack.c.h.b16 %v2501
    %v2764 = vunpack.c.l.b16 %v2502
    %v2765 = vunpack.c.h.b16 %v2502
    %v2766 = vunpack.c.l.b16 %v2503
    %v2767 = vunpack.c.h.b16 %v2503
    %v2768 = vunpack.c.l.b16 %v2504
    %v2769 = vunpack.c.h.b16 %v2504
    %v2770 = vunpack.c.l.b16 %v2505
    %v2771 = vunpack.c.h.b16 %v2505
    %v2772 = vunpack.c.l.b16 %v2506
    %v2773 = vunpack.c.h.b16 %v2506
    %v2774 = vunpack.c.l.b16 %v2507
    %v2775 = vunpack.c.h.b16 %v2507
    %v2776 = vunpack.c.l.b16 %v2508
    %v2777 = vunpack.c.h.b16 %v2508
    %v2778 = vunpack.c.l.b16 %v2509
    %v2779 = vunpack.c.h.b16 %v2509
    %v2780 = vunpack.c.l.b16 %v2510
    %v2781 = vunpack.c.h.b16 %v2510
    %v2782 = vunpack.c.l.b16 %v2511
    %v2783 = vunpack.c.h.b16 %v2511
    %v2784 = vunpack.c.l.b16 %v2512
    %v2785 = vunpack.c.h.b16 %v2512
    %v2786 = vunpack.c.l.b16 %v2513
    %v2787 = vunpack.c.h.b16 %v2513
    %v2788 = vunpack.c.l.b16 %v2514
    %v2789 = vunpack.c.h.b16 %v2514
    %v2790 = vunpack.c.l.b16 %v2515
    %v2791 = vunpack.c.h.b16 %v2515
    %v2792 = vunpack.c.l.b16 %v2516
    %v2793 = vunpack.c.h.b16 %v2516
    %v2794 = vunpack.c.l.b16 %v2517
    %v2795 = vunpack.c.h.b16 %v2517
    %v2796 = vunpack.c.l.b16 %v2518
    %v2797 = vunpack.c.h.b16 %v2518
    %v2798 = vunpack.c.l.b16 %v2519
    %v2799 = vunpack.c.h.b16 %v2519
    %v2800 = vunpack.c.l.b16 %v2520
    %v2801 = vunpack.c.h.b16 %v2520
    %v2802 = vunpack.c.l.b16 %v2521
    %v2803 = vunpack.c.h.b16 %v2521
    %v2804 = vunpack.c.l.b16 %v2522
    %v2805 = vunpack.c.h.b16 %v2522
    %v2806 = vunpack.c.l.b16 %v2523
    %v2807 = vunpack.c.h.b16 %v2523
    %v2808 = vunpack.c.l.b16 %v2524
    %v2809 = vunpack.c.h.b16 %v2524
    %v2810 = vunpack.c.l.b16 %v2525
    %v2811 = vunpack.c.h.b16 %v2525
    %v2812 = vunpack.c.l.b16 %v2526
    %v2813 = vunpack.c.h.b16 %v2526
    %v2814 = vunpack.c.l.b16 %v2527
    %v2815 = vunpack.c.h.b16 %v2527
    %v2816 = vunpack.c.l.b16 %v2528
    %v2817 = vunpack.c.h.b16 %v2528
    %v2818 = vunpack.c.l.b16 %v2529
    %v2819 = vunpack.c.h.b16 %v2529
    %v2820 = vunpack.c.l.b16 %v2530
    %v2821 = vunpack.c.h.b16 %v2530
    %v2822 = vunpack.c.l.b16 %v2531
    %v2823 = vunpack.c.h.b16 %v2531
    %v2824 = vunpack.c.l.b16 %v2532
    %v2825 = vunpack.c.h.b16 %v2532
    %v2826 = vunpack.c.l.b16 %v2533
    %v2827 = vunpack.c.h.b16 %v2533
    %v2828 = vunpack.c.l.b16 %v2534
    %v2829 = vunpack.c.h.b16 %v2534
    %v2830 = vunpack.c.l.b16 %v2535
    %v2831 = vunpack.c.h.b16 %v2535
    %v2832 = vunpack.c.l.b16 %v2536
    %v2833 = vunpack.c.h.b16 %v2536
    %v2834 = vunpack.c.l.b16 %v2537
    %v2835 = vunpack.c.h.b16 %v2537
    %v2836 = vunpack.c.l.b16 %v2538
    %v2837 = vunpack.c.h.b16 %v2538
    %v2838 = vunpack.c.l.b16 %v2539
    %v2839 = vunpack.c.h.b16 %v2539
    %v2840 = vunpack.c.l.b16 %v2540
    %v2841 = vunpack.c.h.b16 %v2540
    %v2842 = vunpack.c.l.b16 %v2541
    %v2843 = vunpack.c.h.b16 %v2541
    %v2844 = vunpack.c.l.b16 %v2542
    %v2845 = vunpack.c.h.b16 %v2542
    %v2846 = vunpack.c.l.b16 %v2543
    %v2847 = vunpack.c.h.b16 %v2543
    %v2848 = vunpack.c.l.b16 %v2544
    %v2849 = vunpack.c.h.b16 %v2544
    %v2850 = vunpack.c.l.b16 %v2545
    %v2851 = vunpack.c.h.b16 %v2545
    %v2852 = vunpack.c.l.b16 %v2546
    %v2853 = vunpack.c.h.b16 %v2546
    %v2854 = vunpack.c.l.b16 %v2547
    %v2855 = vunpack.c.h.b16 %v2547
    %v2856 = vunpack.c.l.b16 %v2548
    %v2857 = vunpack.c.h.b16 %v2548
    %v2858 = vunpack.c.l.b16 %v2549
    %v2859 = vunpack.c.h.b16 %v2549
    %v2860 = vunpack.c.l.b16 %v2550
    %v2861 = vunpack.c.h.b16 %v2550
    %v2862 = vunpack.c.l.b16 %v2551
    %v2863 = vunpack.c.h.b16 %v2551
    %v2864 = vunpack.c.l.b16 %v2552
    %v2865 = vunpack.c.h.b16 %v2552
    %v2866 = vunpack.c.l.b16 %v2553
    %v2867 = vunpack.c.h.b16 %v2553
    %v2868 = vunpack.c.l.b16 %v2554
    %v2869 = vunpack.c.h.b16 %v2554
    %v2870 = vunpack.c.l.b16 %v2555
    %v2871 = vunpack.c.h.b16 %v2555
    %v2872 = vunpack.c.l.b16 %v2556
    %v2873 = vunpack.c.h.b16 %v2556
    %v2874 = vunpack.c.l.b16 %v2557
    %v2875 = vunpack.c.h.b16 %v2557
    %v2876 = vunpack.c.l.b16 %v2558
    %v2877 = vunpack.c.h.b16 %v2558
    %v2878 = vunpack.c.l.b16 %v2559
    %v2879 = vunpack.c.h.b16 %v2559
    %v2880 = vunpack.c.l.b16 %v2560
    %v2881 = vunpack.c.h.b16 %v2560
    %v2882 = vunpack.c.l.b16 %v2561
    %v2883 = vunpack.c.h.b16 %v2561
    %v2884 = vunpack.c.l.b16 %v2562
    %v2885 = vunpack.c.h.b16 %v2562
    %v2886 = vunpack.c.l.b16 %v2563
    %v2887 = vunpack.c.h.b16 %v2563
    %v2888 = vunpack.c.l.b16 %v2564
    %v2889 = vunpack.c.h.b16 %v2564
    %v2890 = vunpack.c.l.b16 %v2565
    %v2891 = vunpack.c.h.b16 %v2565
    %v2892 = vunpack.c.l.b16 %v2566
    %v2893 = vunpack.c.h.b16 %v2566
    %v2894 = vunpack.c.l.b16 %v2567
    %v2895 = vunpack.c.h.b16 %v2567
    %v2896 = vunpack.c.l.b16 %v2568
    %v2897 = vunpack.c.h.b16 %v2568
    %v2898 = vunpack.c.l.b16 %v2569
    %v2899 = vunpack.c.h.b16 %v2569
    %v2900 = vunpack.c.l.b16 %v2570
    %v2901 = vunpack.c.h.b16 %v2570
    %v2902 = vunpack.c.l.b16 %v2571
    %v2903 = vunpack.c.h.b16 %v2571
    %v2904 = vunpack.c.l.b16 %v2572
    %v2905 = vunpack.c.h.b16 %v2572
    %v2906 = vunpack.c.l.b16 %v2573
    %v2907 = vunpack.c.h.b16 %v2573
    %v2908 = vunpack.c.l.b16 %v2574
    %v2909 = vunpack.c.h.b16 %v2574
    %v2910 = vunpack.c.l.b16 %v2575
    %v2911 = vunpack.c.h.b16 %v2575
    %v2912 = vunpack.c.l.b16 %v2576
    %v2913 = vunpack.c.h.b16 %v2576
    %v2914 = vunpack.c.l.b16 %v2577
    %v2915 = vunpack.c.h.b16 %v2577
    %v2916 = vunpack.c.l.b16 %v2578
    %v2917 = vunpack.c.h.b16 %v2578
    %v2918 = vunpack.c.l.b16 %v2579
    %v2919 = vunpack.c.h.b16 %v2579
    %v2920 = vunpack.c.l.b16 %v2580
    %v2921 = vunpack.c.h.b16 %v2580
    %v2922 = vunpack.c.l.b16 %v2581
    %v2923 = vunpack.c.h.b16 %v2581
    %v2924 = vunpack.c.l.b16 %v2582
    %v2925 = vunpack.c.h.b16 %v2582
    %v2926 = vunpack.c.l.b16 %v2583
    %v2927 = vunpack.c.h.b16 %v2583
    %v2928 = vunpack.c.l.b16 %v2584
    %v2929 = vunpack.c.h.b16 %v2584
    %v2930 = vunpack.c.l.b16 %v2585
    %v2931 = vunpack.c.h.b16 %v2585
    %v2932 = vunpack.c.l.b16 %v2586
    %v2933 = vunpack.c.h.b16 %v2586
    %v2934 = vunpack.c.l.b16 %v2587
    %v2935 = vunpack.c.h.b16 %v2587
    %v2936 = vunpack.c.l.b16 %v2588
    %v2937 = vunpack.c.h.b16 %v2588
    %v2938 = vunpack.c.l.b16 %v2589
    %v2939 = vunpack.c.h.b16 %v2589
    %v2940 = vunpack.c.l.b16 %v2590
    %v2941 = vunpack.c.h.b16 %v2590
    %v2942 = vunpack.c.l.b16 %v2591
    %v2943 = vunpack.c.h.b16 %v2591
    %v2944 = vunpack.c.l.b16 %v2592
    %v2945 = vunpack.c.h.b16 %v2592
    %v2946 = vunpack.c.l.b16 %v2593
    %v2947 = vunpack.c.h.b16 %v2593
    %v2948 = vunpack.c.l.b16 %v2594
    %v2949 = vunpack.c.h.b16 %v2594
    %v2950 = vunpack.c.l.b16 %v2595
    %v2951 = vunpack.c.h.b16 %v2595
    %v2952 = vunpack.c.l.b16 %v2596
    %v2953 = vunpack.c.h.b16 %v2596
    %v2954 = vunpack.c.l.b16 %v2597
    %v2955 = vunpack.c.h.b16 %v2597
    %v2956 = vunpack.c.l.b16 %v2598
    %v2957 = vunpack.c.h.b16 %v2598
    %v2958 = vunpack.c.l.b16 %v2599
    %v2959 = vunpack.c.h.b16 %v2599
    %v2960 = vunpack.c.l.b16 %v2600
    %v2961 = vunpack.c.h.b16 %v2600
    %v2962 = vunpack.c.l.b16 %v2601
    %v2963 = vunpack.c.h.b16 %v2601
    %v2964 = vunpack.c.l.b16 %v2602
    %v2965 = vunpack.c.h.b16 %v2602
    %v2966 = vunpack.c.l.b16 %v2603
    %v2967 = vunpack.c.h.b16 %v2603
    %v2968 = vunpack.c.l.b16 %v2604
    %v2969 = vunpack.c.h.b16 %v2604
    %v2970 = vunpack.c.l.b16 %v2605
    %v2971 = vunpack.c.h.b16 %v2605
    %v2972 = vunpack.c.l.b16 %v2606
    %v2973 = vunpack.c.h.b16 %v2606
    %v2974 = vunpack.c.l.b16 %v2607
    %v2975 = vunpack.c.h.b16 %v2607
    %v2976 = vunpack.c.l.b16 %v2608
    %v2977 = vunpack.c.h.b16 %v2608
    %v2978 = vunpack.c.l.b16 %v2609
    %v2979 = vunpack.c.h.b16 %v2609
    %v2980 = vunpack.c.l.b16 %v2610
    %v2981 = vunpack.c.h.b16 %v2610
    %v2982 = vunpack.c.l.b16 %v2611
    %v2983 = vunpack.c.h.b16 %v2611
    %v2984 = vunpack.c.l.b16 %v2612
    %v2985 = vunpack.c.h.b16 %v2612
    %v2986 = vunpack.c.l.b16 %v2613
    %v2987 = vunpack.c.h.b16 %v2613
    %v2988 = vunpack.c.l.b16 %v2614
    %v2989 = vunpack.c.h.b16 %v2614
    %v2990 = vunpack.c.l.b16 %v2615
    %v2991 = vunpack.c.h.b16 %v2615
    %v2992 = vunpack.c.l.b16 %v2616
    %v2993 = vunpack.c.h.b16 %v2616
    %v2994 = vunpack.c.l.b16 %v2617
    %v2995 = vunpack.c.h.b16 %v2617
    %v2996 = vunpack.c.l.b16 %v2618
    %v2997 = vunpack.c.h.b16 %v2618
    %v2998 = vunpack.c.l.b16 %v2619
    %v2999 = vunpack.c.h.b16 %v2619
    %v3000 = vunpack.c.l.b16 %v2620
    %v3001 = vunpack.c.h.b16 %v2620
    %v3002 = vunpack.c.l.b16 %v2621
    %v3003 = vunpack.c.h.b16 %v2621
    %v3004 = vunpack.c.l.b16 %v2622
    %v3005 = vunpack.c.h.b16 %v2622
    %v3006 = vunpack.c.l.b16 %v2623
    %v3007 = vunpack.c.h.b16 %v2623
    %v3008 = vpack.c.b16 %v2756, %v2752
    %v3009 = vpack.c.b16 %v2757, %v2753
    %v3010 = vpack.c.b16 %v2758, %v2754
    %v3011 = vpack.c.b16 %v2759, %v2755
    %v3012 = vpack.c.b16 %v2764, %v2760
    %v3013 = vpack.c.b16 %v2765, %v2761
    %v3014 = vpack.c.b16 %v2766, %v2762
    %v3015 = vpack.c.b16 %v2767, %v2763
    %v3016 = vpack.c.b16 %v2772, %v2768
    %v3017 = vpack.c.b16 %v2773, %v2769
    %v3018 = vpack.c.b16 %v2774, %v2770
    %v3019 = vpack.c.b16 %v2775, %v2771
    %v3020 = vpack.c.b16 %v2780, %v2776
    %v3021 = vpack.c.b16 %v2781, %v2777
    %v3022 = vpack.c.b16 %v2782, %v2778
    %v3023 = vpack.c.b16 %v2783, %v2779
    %v3024 = vpack.c.b16 %v2788, %v2784
    %v3025 = vpack.c.b16 %v2789, %v2785
    %v3026 = vpack.c.b16 %v2790, %v2786
    %v3027 = vpack.c.b16 %v2791, %v2787
    %v3028 = vpack.c.b16 %v2796, %v2792
    %v3029 = vpack.c.b16 %v2797, %v2793
    %v3030 = vpack.c.b16 %v2798, %v2794
    %v3031 = vpack.c.b16 %v2799, %v2795
    %v3032 = vpack.c.b16 %v2804, %v2800
    %v3033 = vpack.c.b16 %v2805, %v2801
    %v3034 = vpack.c.b16 %v2806, %v2802
    %v3035 = vpack.c.b16 %v2807, %v2803
    %v3036 = vpack.c.b16 %v2812, %v2808
    %v3037 = vpack.c.b16 %v2813, %v2809
    %v3038 = vpack.c.b16 %v2814, %v2810
    %v3039 = vpack.c.b16 %v2815, %v2811
    %v3040 = vpack.c.b16 %v2820, %v2816
    %v3041 = vpack.c.b16 %v2821, %v2817
    %v3042 = vpack.c.b16 %v2822, %v2818
    %v3043 = vpack.c.b16 %v2823, %v2819
    %v3044 = vpack.c.b16 %v2828, %v2824
    %v3045 = vpack.c.b16 %v2829, %v2825
    %v3046 = vpack.c.b16 %v2830, %v2826
    %v3047 = vpack.c.b16 %v2831, %v2827
    %v3048 = vpack.c.b16 %v2836, %v2832
    %v3049 = vpack.c.b16 %v2837, %v2833
    %v3050 = vpack.c.b16 %v2838, %v2834
    %v3051 = vpack.c.b16 %v2839, %v2835
    %v3052 = vpack.c.b16 %v2844, %v2840
    %v3053 = vpack.c.b16 %v2845, %v2841
    %v3054 = vpack.c.b16 %v2846, %v2842
    %v3055 = vpack.c.b16 %v2847, %v2843
    %v3056 = vpack.c.b16 %v2852, %v2848
    %v3057 = vpack.c.b16 %v2853, %v2849
    %v3058 = vpack.c.b16 %v2854, %v2850
    %v3059 = vpack.c.b16 %v2855, %v2851
    %v3060 = vpack.c.b16 %v2860, %v2856
    %v3061 = vpack.c.b16 %v2861, %v2857
    %v3062 = vpack.c.b16 %v2862, %v2858
    %v3063 = vpack.c.b16 %v2863, %v2859
    %v3064 = vpack.c.b16 %v2868, %v2864
    %v3065 = vpack.c.b16 %v2869, %v2865
    %v3066 = vpack.c.b16 %v2870, %v2866
    %v3067 = vpack.c.b16 %v2871, %v2867
    %v3068 = vpack.c.b16 %v2876, %v2872
    %v3069 = vpack.c.b16 %v2877, %v2873
    %v3070 = vpack.c.b16 %v2878, %v2874
    %v3071 = vpack.c.b16 %v2879, %v2875
    %v3072 = vpack.c.b16 %v2884, %v2880
    %v3073 = vpack.c.b16 %v2885, %v2881
    %v3074 = vpack.c.b16 %v2886, %v2882
    %v3075 = vpack.c.b16 %v2887, %v2883
    %v3076 = vpack.c.b16 %v2892, %v2888
    %v3077 = vpack.c.b16 %v2893, %v2889
    %v3078 = vpack.c.b16 %v2894, %v2890
    %v3079 = vpack.c.b16 %v2895, %v2891
    %v3080 = vpack.c.b16 %v2900, %v2896
    %v3081 = vpack.c.b16 %v2901, %v2897
    %v3082 = vpack.c.b16 %v2902, %v2898
    %v3083 = vpack.c.b16 %v2903, %v2899
    %v3084 = vpack.c.b16 %v2908, %v2904
    %v3085 = vpack.c.b16 %v2909, %v2905
    %v3086 = vpack.c.b16 %v2910, %v2906
    %v3087 = vpack.c.b16 %v2911, %v2907
    %v3088 = vpack.c.b16 %v2916, %v2912
    %v3089 = vpack.c.b16 %v2917, %v2913
    %v3090 = vpack.c.b16 %v2918, %v2914
    %v3091 = vpack.c.b16 %v2919, %v2915
    %v3092 = vpack.c.b16 %v2924, %v2920
    %v3093 = vpack.c.b16 %v2925, %v2921
    %v3094 = vpack.c.b16 %v2926, %v2922
    %v3095 = vpack.c.b16 %v2927, %v2923
    %v3096 = vpack.c.b16 %v2932, %v2928
    %v3097 = vpack.c.b16 %v2933, %v2929
    %v3098 = vpack.c.b16 %v2934, %v2930
    %v3099 = vpack.c.b16 %v2935, %v2931
    %v3100 = vpack.c.b16 %v2940, %v2936
    %v3101 = vpack.c.b16 %v2941, %v2937
    %v3102 = vpack.c.b16 %v2942, %v2938
    %v3103 = vpack.c.b16 %v2943, %v2939
    %v3104 = vpack.c.b16 %v2948, %v2944
    %v3105 = vpack.c.b16 %v2949, %v2945
    %v3106 = vpack.c.b16 %v2950, %v2946
    %v3107 = vpack.c.b16 %v2951, %v2947
    %v3108 = vpack.c.b16 %v2956, %v2952
    %v3109 = vpack.c.b16 %v2957, %v2953
    %v3110 = vpack.c.b16 %v2958, %v2954
    %v3111 = vpack.c.b16 %v2959, %v2955
    %v3112 = vpack.c.b16 %v2964, %v2960
    %v3113 = vpack.c.b16 %v2965, %v2961
    %v3114 = vpack.c.b16 %v2966, %v2962
    %v3115 = vpack.c.b16 %v2967, %v2963
    %v3116 = vpack.c.b16 %v2972, %v2968
    %v3117 = vpack.c.b16 %v2973, %v2969
    %v3118 = vpack.c.b16 %v2974, %v2970
    %v3119 = vpack.c.b16 %v2975, %v2971
    %v3120 = vpack.c.b16 %v2980, %v2976
    %v3121 = vpack.c.b16 %v2981, %v2977
    %v3122 = vpack.c.b16 %v2982, %v2978
    %v3123 = vpack.c.b16 %v2983, %v2979
    %v3124 = vpack.c.b16 %v2988, %v2984
    %v3125 = vpack.c.b16 %v2989, %v2985
    %v3126 = vpack.c.b16 %v2990, %v2986
    %v3127 = vpack.c.b16 %v2991, %v2987
    %v3128 = vpack.c.b16 %v2996, %v2992
    %v3129 = vpack.c.b16 %v2997, %v2993
    %v3130 = vpack.c.b16 %v2998, %v2994
    %v3131 = vpack.c.b16 %v2999, %v2995
    %v3132 = vpack.c.b16 %v3004, %v3000
    %v3133 = vpack.c.b16 %v3005, %v3001
    %v3134 = vpack.c.b16 %v3006, %v3002
    %v3135 = vpack.c.b16 %v3007, %v3003
    %3264 = vmatprep.subr.bf16.mxu0 %v3009
    %3265 = vmatpush1.bf16.msra.mxu0 %v3008
    %3266 = vmatprep.subr.bf16.mxu0 %v3013
    %3267 = vmatpush1.bf16.msra.mxu0 %v3012
    %3268 = vmatprep.subr.bf16.mxu0 %v3017
    %3269 = vmatpush1.bf16.msra.mxu0 %v3016
    %3270 = vmatprep.subr.bf16.mxu0 %v3021
    %3271 = vmatpush1.bf16.msra.mxu0 %v3020
    %3272 = vmatprep.subr.bf16.mxu0 %v3025
    %3273 = vmatpush1.bf16.msra.mxu0 %v3024
    %3274 = vmatprep.subr.bf16.mxu0 %v3029
    %3275 = vmatpush1.bf16.msra.mxu0 %v3028
    %3276 = vmatprep.subr.bf16.mxu0 %v3033
    %3277 = vmatpush1.bf16.msra.mxu0 %v3032
    %3278 = vmatprep.subr.bf16.mxu0 %v3037
    %3279 = vmatpush1.bf16.msra.mxu0 %v3036
    %3280 = vmatprep.subr.bf16.mxu0 %v3041
    %3281 = vmatpush1.bf16.msra.mxu0 %v3040
    %3282 = vmatprep.subr.bf16.mxu0 %v3045
    %3283 = vmatpush1.bf16.msra.mxu0 %v3044
    %3284 = vmatprep.subr.bf16.mxu0 %v3049
    %3285 = vmatpush1.bf16.msra.mxu0 %v3048
    %3286 = vmatprep.subr.bf16.mxu0 %v3053
    %3287 = vmatpush1.bf16.msra.mxu0 %v3052
    %3288 = vmatprep.subr.bf16.mxu0 %v3057
    %3289 = vmatpush1.bf16.msra.mxu0 %v3056
    %3290 = vmatprep.subr.bf16.mxu0 %v3061
    %3291 = vmatpush1.bf16.msra.mxu0 %v3060
    %3292 = vmatprep.subr.bf16.mxu0 %v3065
    %3293 = vmatpush1.bf16.msra.mxu0 %v3064
    %3294 = vmatprep.subr.bf16.mxu0 %v3069
    %3295 = vmatpush1.bf16.msra.mxu0 %v3068
    %3296 = vmatprep.mubr.bf16.mxu0 %v2493
    %3297 = vmatmul.mubr.bf16.gmra.mrb[0].mxu0 %v2492
    %v3298 = vpop.f32.mrb[0].mxu0
    %v3299 = vadd.f32 0.0, %v3298
    %v3300 = vpop.f32.mrb[0].mxu0
    %v3301 = vadd.f32 0.0, %v3300
    %v3302 = vpop.f32.mrb[0].mxu0
    %v3303 = vadd.f32 0.0, %v3302
    %v3304 = vpop.f32.mrb[0].mxu0
    %v3305 = vadd.f32 0.0, %v3304
    %3306 = vdwg.mxu0
    %3307 = vmatprep.subr.bf16.mxu0 %v3073
    %3308 = vmatpush1.bf16.msra.mxu0 %v3072
    %3309 = vmatprep.subr.bf16.mxu0 %v3077
    %3310 = vmatpush1.bf16.msra.mxu0 %v3076
    %3311 = vmatprep.subr.bf16.mxu0 %v3081
    %3312 = vmatpush1.bf16.msra.mxu0 %v3080
    %3313 = vmatprep.subr.bf16.mxu0 %v3085
    %3314 = vmatpush1.bf16.msra.mxu0 %v3084
    %3315 = vmatprep.subr.bf16.mxu0 %v3089
    %3316 = vmatpush1.bf16.msra.mxu0 %v3088
    %3317 = vmatprep.subr.bf16.mxu0 %v3093
    %3318 = vmatpush1.bf16.msra.mxu0 %v3092
    %3319 = vmatprep.subr.bf16.mxu0 %v3097
    %3320 = vmatpush1.bf16.msra.mxu0 %v3096
    %3321 = vmatprep.subr.bf16.mxu0 %v3101
    %3322 = vmatpush1.bf16.msra.mxu0 %v3100
    %3323 = vmatprep.subr.bf16.mxu0 %v3105
    %3324 = vmatpush1.bf16.msra.mxu0 %v3104
    %3325 = vmatprep.subr.bf16.mxu0 %v3109
    %3326 = vmatpush1.bf16.msra.mxu0 %v3108
    %3327 = vmatprep.subr.bf16.mxu0 %v3113
    %3328 = vmatpush1.bf16.msra.mxu0 %v3112
    %3329 = vmatprep.subr.bf16.mxu0 %v3117
    %3330 = vmatpush1.bf16.msra.mxu0 %v3116
    %3331 = vmatprep.subr.bf16.mxu0 %v3121
    %3332 = vmatpush1.bf16.msra.mxu0 %v3120
    %3333 = vmatprep.subr.bf16.mxu0 %v3125
    %3334 = vmatpush1.bf16.msra.mxu0 %v3124
    %3335 = vmatprep.subr.bf16.mxu0 %v3129
    %3336 = vmatpush1.bf16.msra.mxu0 %v3128
    %3337 = vmatprep.subr.bf16.mxu0 %v3133
    %3338 = vmatpush1.bf16.msra.mxu0 %v3132
    %3339 = vmatprep.mubr.bf16.mxu0 %v2495
    %3340 = vmatmul.mubr.bf16.gmra.mrb[0].mxu0 %v2494
    %v3341 = vpop.f32.mrb[0].mxu0
    %v3342 = vadd.f32 %v3299, %v3341
    %v3343 = vpop.f32.mrb[0].mxu0
    %v3344 = vadd.f32 %v3301, %v3343
    %v3345 = vpop.f32.mrb[0].mxu0
    %v3346 = vadd.f32 %v3303, %v3345
    %v3347 = vpop.f32.mrb[0].mxu0
    %v3348 = vadd.f32 %v3305, %v3347
    %3349 = vdwg.mxu0
    %3350 = vmatprep.subr.bf16.mxu0 %v3011
    %3351 = vmatpush1.bf16.msra.mxu0 %v3010
    %3352 = vmatprep.subr.bf16.mxu0 %v3015
    %3353 = vmatpush1.bf16.msra.mxu0 %v3014
    %3354 = vmatprep.subr.bf16.mxu0 %v3019
    %3355 = vmatpush1.bf16.msra.mxu0 %v3018
    %3356 = vmatprep.subr.bf16.mxu0 %v3023
    %3357 = vmatpush1.bf16.msra.mxu0 %v3022
    %3358 = vmatprep.subr.bf16.mxu0 %v3027
    %3359 = vmatpush1.bf16.msra.mxu0 %v3026
    %3360 = vmatprep.subr.bf16.mxu0 %v3031
    %3361 = vmatpush1.bf16.msra.mxu0 %v3030
    %3362 = vmatprep.subr.bf16.mxu0 %v3035
    %3363 = vmatpush1.bf16.msra.mxu0 %v3034
    %3364 = vmatprep.subr.bf16.mxu0 %v3039
    %3365 = vmatpush1.bf16.msra.mxu0 %v3038
    %3366 = vmatprep.subr.bf16.mxu0 %v3043
    %3367 = vmatpush1.bf16.msra.mxu0 %v3042
    %3368 = vmatprep.subr.bf16.mxu0 %v3047
    %3369 = vmatpush1.bf16.msra.mxu0 %v3046
    %3370 = vmatprep.subr.bf16.mxu0 %v3051
    %3371 = vmatpush1.bf16.msra.mxu0 %v3050
    %3372 = vmatprep.subr.bf16.mxu0 %v3055
    %3373 = vmatpush1.bf16.msra.mxu0 %v3054
    %3374 = vmatprep.subr.bf16.mxu0 %v3059
    %3375 = vmatpush1.bf16.msra.mxu0 %v3058
    %3376 = vmatprep.subr.bf16.mxu0 %v3063
    %3377 = vmatpush1.bf16.msra.mxu0 %v3062
    %3378 = vmatprep.subr.bf16.mxu0 %v3067
    %3379 = vmatpush1.bf16.msra.mxu0 %v3066
    %3380 = vmatprep.subr.bf16.mxu0 %v3071
    %3381 = vmatpush1.bf16.msra.mxu0 %v3070
    %3382 = vmatprep.mubr.bf16.mxu0 %v2493
    %3383 = vmatmul.mubr.bf16.gmra.mrb[0].mxu0 %v2492
    %v3384 = vpop.f32.mrb[0].mxu0
    %v3385 = vadd.f32 0.0, %v3384
    %v3386 = vpop.f32.mrb[0].mxu0
    %v3387 = vadd.f32 0.0, %v3386
    %v3388 = vpop.f32.mrb[0].mxu0
    %v3389 = vadd.f32 0.0, %v3388
    %v3390 = vpop.f32.mrb[0].mxu0
    %v3391 = vadd.f32 0.0, %v3390
    %3392 = vdwg.mxu0
    %3393 = vmatprep.subr.bf16.mxu0 %v3075
    %3394 = vmatpush1.bf16.msra.mxu0 %v3074
    %3395 = vmatprep.subr.bf16.mxu0 %v3079
    %3396 = vmatpush1.bf16.msra.mxu0 %v3078
    %3397 = vmatprep.subr.bf16.mxu0 %v3083
    %3398 = vmatpush1.bf16.msra.mxu0 %v3082
    %3399 = vmatprep.subr.bf16.mxu0 %v3087
    %3400 = vmatpush1.bf16.msra.mxu0 %v3086
    %3401 = vmatprep.subr.bf16.mxu0 %v3091
    %3402 = vmatpush1.bf16.msra.mxu0 %v3090
    %3403 = vmatprep.subr.bf16.mxu0 %v3095
    %3404 = vmatpush1.bf16.msra.mxu0 %v3094
    %3405 = vmatprep.subr.bf16.mxu0 %v3099
    %3406 = vmatpush1.bf16.msra.mxu0 %v3098
    %3407 = vmatprep.subr.bf16.mxu0 %v3103
    %3408 = vmatpush1.bf16.msra.mxu0 %v3102
    %3409 = vmatprep.subr.bf16.mxu0 %v3107
    %3410 = vmatpush1.bf16.msra.mxu0 %v3106
    %3411 = vmatprep.subr.bf16.mxu0 %v3111
    %3412 = vmatpush1.bf16.msra.mxu0 %v3110
    %3413 = vmatprep.subr.bf16.mxu0 %v3115
    %3414 = vmatpush1.bf16.msra.mxu0 %v3114
    %3415 = vmatprep.subr.bf16.mxu0 %v3119
    %3416 = vmatpush1.bf16.msra.mxu0 %v3118
    %3417 = vmatprep.subr.bf16.mxu0 %v3123
    %3418 = vmatpush1.bf16.msra.mxu0 %v3122
    %3419 = vmatprep.subr.bf16.mxu0 %v3127
    %3420 = vmatpush1.bf16.msra.mxu0 %v3126
    %3421 = vmatprep.subr.bf16.mxu0 %v3131
    %3422 = vmatpush1.bf16.msra.mxu0 %v3130
    %3423 = vmatprep.subr.bf16.mxu0 %v3135
    %3424 = vmatpush1.bf16.msra.mxu0 %v3134
    %3425 = vmatprep.mubr.bf16.mxu0 %v2495
    %3426 = vmatmul.mubr.bf16.gmra.mrb[0].mxu0 %v2494
    %v3427 = vpop.f32.mrb[0].mxu0
    %v3428 = vadd.f32 %v3385, %v3427
    %v3429 = vpop.f32.mrb[0].mxu0
    %v3430 = vadd.f32 %v3387, %v3429
    %v3431 = vpop.f32.mrb[0].mxu0
    %v3432 = vadd.f32 %v3389, %v3431
    %v3433 = vpop.f32.mrb[0].mxu0
    %v3434 = vadd.f32 %v3391, %v3433
    %3435 = vdwg.mxu0
    %v3436 = vadd.f32 %v2234, %v3342
    %v3437 = vadd.f32 %v2236, %v3344
    %v3438 = vadd.f32 %v2320, %v3428
    %v3439 = vadd.f32 %v2322, %v3430
    %v3440 = vadd.f32 %v2238, %v3346
    %v3441 = vadd.f32 %v2240, %v3348
    %v3442 = vadd.f32 %v2324, %v3432
    %v3443 = vadd.f32 %v2326, %v3434
    %v3444 = vld [vmem:[#allocation5 + $0x30] sm:$0xff]
    %v3445 = vld [vmem:[#allocation5 + $0x38] sm:$0xff]
    %v3446 = vld [vmem:[#allocation5 + $0x70] sm:$0xff]
    %v3447 = vld [vmem:[#allocation5 + $0x78] sm:$0xff]
    %v3448 = vld [vmem:[#allocation5 + $0xb0] sm:$0xff]
    %v3449 = vld [vmem:[#allocation5 + $0xb8] sm:$0xff]
    %v3450 = vld [vmem:[#allocation5 + $0xf0] sm:$0xff]
    %v3451 = vld [vmem:[#allocation5 + $0xf8] sm:$0xff]
    %v3452 = vld [vmem:[#allocation7 + $0xc] sm:$0xf]
    %v3454 = vlaneseq
    %v3455 = vshrl.u32 %v3454, 7
    %v3456 = vsub.s32 0, %v3455
    %v3457 = vrot.slane %v3452, %v3456
    %v3458 = vlaneseq
    %v3459 = vshrl.u32 %v3458, 7
    %v3460 = vsub.s32 1, %v3459
    %v3461 = vrot.slane %v3452, %v3460
    %v3462 = vlaneseq
    %v3463 = vshrl.u32 %v3462, 7
    %v3464 = vsub.s32 2, %v3463
    %v3465 = vrot.slane %v3452, %v3464
    %v3466 = vlaneseq
    %v3467 = vshrl.u32 %v3466, 7
    %v3468 = vsub.s32 3, %v3467
    %v3469 = vrot.slane %v3452, %v3468
    %v3482 = vunpack.c.l.b16 %v3444
    %v3483 = vunpack.c.h.b16 %v3444
    %v3484 = vunpack.c.l.b16 %v3445
    %v3485 = vunpack.c.h.b16 %v3445
    %v3486 = vunpack.c.l.b16 %v3446
    %v3487 = vunpack.c.h.b16 %v3446
    %v3488 = vunpack.c.l.b16 %v3447
    %v3489 = vunpack.c.h.b16 %v3447
    %v3490 = vunpack.c.l.b16 %v3448
    %v3491 = vunpack.c.h.b16 %v3448
    %v3492 = vunpack.c.l.b16 %v3449
    %v3493 = vunpack.c.h.b16 %v3449
    %v3494 = vunpack.c.l.b16 %v3450
    %v3495 = vunpack.c.h.b16 %v3450
    %v3496 = vunpack.c.l.b16 %v3451
    %v3497 = vunpack.c.h.b16 %v3451
    %v3498 = vpack.c.b16 %v3486, %v3482
    %v3499 = vpack.c.b16 %v3487, %v3483
    %v3500 = vpack.c.b16 %v3488, %v3484
    %v3501 = vpack.c.b16 %v3489, %v3485
    %v3502 = vpack.c.b16 %v3494, %v3490
    %v3503 = vpack.c.b16 %v3495, %v3491
    %v3504 = vpack.c.b16 %v3496, %v3492
    %v3505 = vpack.c.b16 %v3497, %v3493
    %3514 = vmatprep.subr.bf16.mxu0 %v3499
    %3515 = vmatpush1.bf16.msra.mxu0 %v3498
    %3516 = vmatprep.subr.bf16.mxu0 %v3503
    %3517 = vmatpush1.bf16.msra.mxu0 %v3502
    %3518 = vmatprep.subr.bf16.mxu0 0
    %3519 = vmatpush1.bf16.msra.mxu0 0
    %3520 = vmatprep.subr.bf16.mxu0 0
    %3521 = vmatpush1.bf16.msra.mxu0 0
    %3522 = vmatprep.subr.bf16.mxu0 0
    %3523 = vmatpush1.bf16.msra.mxu0 0
    %3524 = vmatprep.subr.bf16.mxu0 0
    %3525 = vmatpush1.bf16.msra.mxu0 0
    %3526 = vmatprep.subr.bf16.mxu0 0
    %3527 = vmatpush1.bf16.msra.mxu0 0
    %3528 = vmatprep.subr.bf16.mxu0 0
    %3529 = vmatpush1.bf16.msra.mxu0 0
    %3530 = vmatprep.subr.bf16.mxu0 0
    %3531 = vmatpush1.bf16.msra.mxu0 0
    %3532 = vmatprep.subr.bf16.mxu0 0
    %3533 = vmatpush1.bf16.msra.mxu0 0
    %3534 = vmatprep.subr.bf16.mxu0 0
    %3535 = vmatpush1.bf16.msra.mxu0 0
    %3536 = vmatprep.subr.bf16.mxu0 0
    %3537 = vmatpush1.bf16.msra.mxu0 0
    %3538 = vmatprep.subr.bf16.mxu0 0
    %3539 = vmatpush1.bf16.msra.mxu0 0
    %3540 = vmatprep.subr.bf16.mxu0 0
    %3541 = vmatpush1.bf16.msra.mxu0 0
    %3542 = vmatprep.subr.bf16.mxu0 0
    %3543 = vmatpush1.bf16.msra.mxu0 0
    %3544 = vmatprep.subr.bf16.mxu0 0
    %3545 = vmatpush1.bf16.msra.mxu0 0
    %3546 = vmatprep.mubr.bf16.mxu0 0
    %3547 = vmatmul.mubr.bf16.gmra.mrb[0].mxu0 %v180
    %v3548 = vpop.f32.mrb[0].mxu0
    %v3549 = vadd.f32 %v3457, %v3548
    %v3550 = vpop.f32.mrb[0].mxu0
    %v3551 = vadd.f32 %v3461, %v3550
    %v3552 = vpop.f32.mrb[0].mxu0
    %v3553 = vadd.f32 %v3457, %v3552
    %v3554 = vpop.f32.mrb[0].mxu0
    %v3555 = vadd.f32 %v3461, %v3554
    %3556 = vdwg.mxu0
    %3557 = vmatprep.subr.bf16.mxu0 %v3501
    %3558 = vmatpush1.bf16.msra.mxu0 %v3500
    %3559 = vmatprep.subr.bf16.mxu0 %v3505
    %3560 = vmatpush1.bf16.msra.mxu0 %v3504
    %3561 = vmatprep.subr.bf16.mxu0 0
    %3562 = vmatpush1.bf16.msra.mxu0 0
    %3563 = vmatprep.subr.bf16.mxu0 0
    %3564 = vmatpush1.bf16.msra.mxu0 0
    %3565 = vmatprep.subr.bf16.mxu0 0
    %3566 = vmatpush1.bf16.msra.mxu0 0
    %3567 = vmatprep.subr.bf16.mxu0 0
    %3568 = vmatpush1.bf16.msra.mxu0 0
    %3569 = vmatprep.subr.bf16.mxu0 0
    %3570 = vmatpush1.bf16.msra.mxu0 0
    %3571 = vmatprep.subr.bf16.mxu0 0
    %3572 = vmatpush1.bf16.msra.mxu0 0
    %3573 = vmatprep.subr.bf16.mxu0 0
    %3574 = vmatpush1.bf16.msra.mxu0 0
    %3575 = vmatprep.subr.bf16.mxu0 0
    %3576 = vmatpush1.bf16.msra.mxu0 0
    %3577 = vmatprep.subr.bf16.mxu0 0
    %3578 = vmatpush1.bf16.msra.mxu0 0
    %3579 = vmatprep.subr.bf16.mxu0 0
    %3580 = vmatpush1.bf16.msra.mxu0 0
    %3581 = vmatprep.subr.bf16.mxu0 0
    %3582 = vmatpush1.bf16.msra.mxu0 0
    %3583 = vmatprep.subr.bf16.mxu0 0
    %3584 = vmatpush1.bf16.msra.mxu0 0
    %3585 = vmatprep.subr.bf16.mxu0 0
    %3586 = vmatpush1.bf16.msra.mxu0 0
    %3587 = vmatprep.subr.bf16.mxu0 0
    %3588 = vmatpush1.bf16.msra.mxu0 0
    %3589 = vmatprep.mubr.bf16.mxu0 0
    %3590 = vmatmul.mubr.bf16.gmra.mrb[0].mxu0 %v180
    %v3591 = vpop.f32.mrb[0].mxu0
    %v3592 = vadd.f32 %v3465, %v3591
    %v3593 = vpop.f32.mrb[0].mxu0
    %v3594 = vadd.f32 %v3469, %v3593
    %v3595 = vpop.f32.mrb[0].mxu0
    %v3596 = vadd.f32 %v3465, %v3595
    %v3597 = vpop.f32.mrb[0].mxu0
    %v3598 = vadd.f32 %v3469, %v3597
    %3599 = vdwg.mxu0
    %v3600 = vtanh.pop %v3549
    %v3601 = vtanh.pop %v3551
    %v3602 = vtanh.pop %v3592
    %v3603 = vtanh.pop %v3594
    %v3604 = vtanh.pop %v3553
    %v3605 = vtanh.pop %v3555
    %v3606 = vtanh.pop %v3596
    %v3607 = vtanh.pop %v3598
    %v3608 = vpack.c.bf16 %v3604, %v3600
    %v3609 = vpack.c.bf16 %v3605, %v3601
    %v3610 = vpack.c.bf16 %v3606, %v3602
    %v3611 = vpack.c.bf16 %v3607, %v3603
    %v3612 = vld [vmem:[#allocation8 + $0xc00] sm:$0xff]
    %v3613 = vld [vmem:[#allocation8 + $0xc08] sm:$0xff]
    %v3614 = vld [vmem:[#allocation8 + $0xc10] sm:$0xff]
    %v3615 = vld [vmem:[#allocation8 + $0xc18] sm:$0xff]
    %v3616 = vld [vmem:[#allocation8 + $0xc20] sm:$0xff]
    %v3617 = vld [vmem:[#allocation8 + $0xc28] sm:$0xff]
    %v3618 = vld [vmem:[#allocation8 + $0xc30] sm:$0xff]
    %v3619 = vld [vmem:[#allocation8 + $0xc38] sm:$0xff]
    %v3620 = vld [vmem:[#allocation8 + $0xc40] sm:$0xff]
    %v3621 = vld [vmem:[#allocation8 + $0xc48] sm:$0xff]
    %v3622 = vld [vmem:[#allocation8 + $0xc50] sm:$0xff]
    %v3623 = vld [vmem:[#allocation8 + $0xc58] sm:$0xff]
    %v3624 = vld [vmem:[#allocation8 + $0xc60] sm:$0xff]
    %v3625 = vld [vmem:[#allocation8 + $0xc68] sm:$0xff]
    %v3626 = vld [vmem:[#allocation8 + $0xc70] sm:$0xff]
    %v3627 = vld [vmem:[#allocation8 + $0xc78] sm:$0xff]
    %v3628 = vld [vmem:[#allocation8 + $0xc80] sm:$0xff]
    %v3629 = vld [vmem:[#allocation8 + $0xc88] sm:$0xff]
    %v3630 = vld [vmem:[#allocation8 + $0xc90] sm:$0xff]
    %v3631 = vld [vmem:[#allocation8 + $0xc98] sm:$0xff]
    %v3632 = vld [vmem:[#allocation8 + $0xca0] sm:$0xff]
    %v3633 = vld [vmem:[#allocation8 + $0xca8] sm:$0xff]
    %v3634 = vld [vmem:[#allocation8 + $0xcb0] sm:$0xff]
    %v3635 = vld [vmem:[#allocation8 + $0xcb8] sm:$0xff]
    %v3636 = vld [vmem:[#allocation8 + $0xcc0] sm:$0xff]
    %v3637 = vld [vmem:[#allocation8 + $0xcc8] sm:$0xff]
    %v3638 = vld [vmem:[#allocation8 + $0xcd0] sm:$0xff]
    %v3639 = vld [vmem:[#allocation8 + $0xcd8] sm:$0xff]
    %v3640 = vld [vmem:[#allocation8 + $0xce0] sm:$0xff]
    %v3641 = vld [vmem:[#allocation8 + $0xce8] sm:$0xff]
    %v3642 = vld [vmem:[#allocation8 + $0xcf0] sm:$0xff]
    %v3643 = vld [vmem:[#allocation8 + $0xcf8] sm:$0xff]
    %v3644 = vld [vmem:[#allocation8 + $0xd00] sm:$0xff]
    %v3645 = vld [vmem:[#allocation8 + $0xd08] sm:$0xff]
    %v3646 = vld [vmem:[#allocation8 + $0xd10] sm:$0xff]
    %v3647 = vld [vmem:[#allocation8 + $0xd18] sm:$0xff]
    %v3648 = vld [vmem:[#allocation8 + $0xd20] sm:$0xff]
    %v3649 = vld [vmem:[#allocation8 + $0xd28] sm:$0xff]
    %v3650 = vld [vmem:[#allocation8 + $0xd30] sm:$0xff]
    %v3651 = vld [vmem:[#allocation8 + $0xd38] sm:$0xff]
    %v3652 = vld [vmem:[#allocation8 + $0xd40] sm:$0xff]
    %v3653 = vld [vmem:[#allocation8 + $0xd48] sm:$0xff]
    %v3654 = vld [vmem:[#allocation8 + $0xd50] sm:$0xff]
    %v3655 = vld [vmem:[#allocation8 + $0xd58] sm:$0xff]
    %v3656 = vld [vmem:[#allocation8 + $0xd60] sm:$0xff]
    %v3657 = vld [vmem:[#allocation8 + $0xd68] sm:$0xff]
    %v3658 = vld [vmem:[#allocation8 + $0xd70] sm:$0xff]
    %v3659 = vld [vmem:[#allocation8 + $0xd78] sm:$0xff]
    %v3660 = vld [vmem:[#allocation8 + $0xd80] sm:$0xff]
    %v3661 = vld [vmem:[#allocation8 + $0xd88] sm:$0xff]
    %v3662 = vld [vmem:[#allocation8 + $0xd90] sm:$0xff]
    %v3663 = vld [vmem:[#allocation8 + $0xd98] sm:$0xff]
    %v3664 = vld [vmem:[#allocation8 + $0xda0] sm:$0xff]
    %v3665 = vld [vmem:[#allocation8 + $0xda8] sm:$0xff]
    %v3666 = vld [vmem:[#allocation8 + $0xdb0] sm:$0xff]
    %v3667 = vld [vmem:[#allocation8 + $0xdb8] sm:$0xff]
    %v3668 = vld [vmem:[#allocation8 + $0xdc0] sm:$0xff]
    %v3669 = vld [vmem:[#allocation8 + $0xdc8] sm:$0xff]
    %v3670 = vld [vmem:[#allocation8 + $0xdd0] sm:$0xff]
    %v3671 = vld [vmem:[#allocation8 + $0xdd8] sm:$0xff]
    %v3672 = vld [vmem:[#allocation8 + $0xde0] sm:$0xff]
    %v3673 = vld [vmem:[#allocation8 + $0xde8] sm:$0xff]
    %v3674 = vld [vmem:[#allocation8 + $0xdf0] sm:$0xff]
    %v3675 = vld [vmem:[#allocation8 + $0xdf8] sm:$0xff]
    %v3676 = vld [vmem:[#allocation8 + $0xe00] sm:$0xff]
    %v3677 = vld [vmem:[#allocation8 + $0xe08] sm:$0xff]
    %v3678 = vld [vmem:[#allocation8 + $0xe10] sm:$0xff]
    %v3679 = vld [vmem:[#allocation8 + $0xe18] sm:$0xff]
    %v3680 = vld [vmem:[#allocation8 + $0xe20] sm:$0xff]
    %v3681 = vld [vmem:[#allocation8 + $0xe28] sm:$0xff]
    %v3682 = vld [vmem:[#allocation8 + $0xe30] sm:$0xff]
    %v3683 = vld [vmem:[#allocation8 + $0xe38] sm:$0xff]
    %v3684 = vld [vmem:[#allocation8 + $0xe40] sm:$0xff]
    %v3685 = vld [vmem:[#allocation8 + $0xe48] sm:$0xff]
    %v3686 = vld [vmem:[#allocation8 + $0xe50] sm:$0xff]
    %v3687 = vld [vmem:[#allocation8 + $0xe58] sm:$0xff]
    %v3688 = vld [vmem:[#allocation8 + $0xe60] sm:$0xff]
    %v3689 = vld [vmem:[#allocation8 + $0xe68] sm:$0xff]
    %v3690 = vld [vmem:[#allocation8 + $0xe70] sm:$0xff]
    %v3691 = vld [vmem:[#allocation8 + $0xe78] sm:$0xff]
    %v3692 = vld [vmem:[#allocation8 + $0xe80] sm:$0xff]
    %v3693 = vld [vmem:[#allocation8 + $0xe88] sm:$0xff]
    %v3694 = vld [vmem:[#allocation8 + $0xe90] sm:$0xff]
    %v3695 = vld [vmem:[#allocation8 + $0xe98] sm:$0xff]
    %v3696 = vld [vmem:[#allocation8 + $0xea0] sm:$0xff]
    %v3697 = vld [vmem:[#allocation8 + $0xea8] sm:$0xff]
    %v3698 = vld [vmem:[#allocation8 + $0xeb0] sm:$0xff]
    %v3699 = vld [vmem:[#allocation8 + $0xeb8] sm:$0xff]
    %v3700 = vld [vmem:[#allocation8 + $0xec0] sm:$0xff]
    %v3701 = vld [vmem:[#allocation8 + $0xec8] sm:$0xff]
    %v3702 = vld [vmem:[#allocation8 + $0xed0] sm:$0xff]
    %v3703 = vld [vmem:[#allocation8 + $0xed8] sm:$0xff]
    %v3704 = vld [vmem:[#allocation8 + $0xee0] sm:$0xff]
    %v3705 = vld [vmem:[#allocation8 + $0xee8] sm:$0xff]
    %v3706 = vld [vmem:[#allocation8 + $0xef0] sm:$0xff]
    %v3707 = vld [vmem:[#allocation8 + $0xef8] sm:$0xff]
    %v3708 = vld [vmem:[#allocation8 + $0xf00] sm:$0xff]
    %v3709 = vld [vmem:[#allocation8 + $0xf08] sm:$0xff]
    %v3710 = vld [vmem:[#allocation8 + $0xf10] sm:$0xff]
    %v3711 = vld [vmem:[#allocation8 + $0xf18] sm:$0xff]
    %v3712 = vld [vmem:[#allocation8 + $0xf20] sm:$0xff]
    %v3713 = vld [vmem:[#allocation8 + $0xf28] sm:$0xff]
    %v3714 = vld [vmem:[#allocation8 + $0xf30] sm:$0xff]
    %v3715 = vld [vmem:[#allocation8 + $0xf38] sm:$0xff]
    %v3716 = vld [vmem:[#allocation8 + $0xf40] sm:$0xff]
    %v3717 = vld [vmem:[#allocation8 + $0xf48] sm:$0xff]
    %v3718 = vld [vmem:[#allocation8 + $0xf50] sm:$0xff]
    %v3719 = vld [vmem:[#allocation8 + $0xf58] sm:$0xff]
    %v3720 = vld [vmem:[#allocation8 + $0xf60] sm:$0xff]
    %v3721 = vld [vmem:[#allocation8 + $0xf68] sm:$0xff]
    %v3722 = vld [vmem:[#allocation8 + $0xf70] sm:$0xff]
    %v3723 = vld [vmem:[#allocation8 + $0xf78] sm:$0xff]
    %v3724 = vld [vmem:[#allocation8 + $0xf80] sm:$0xff]
    %v3725 = vld [vmem:[#allocation8 + $0xf88] sm:$0xff]
    %v3726 = vld [vmem:[#allocation8 + $0xf90] sm:$0xff]
    %v3727 = vld [vmem:[#allocation8 + $0xf98] sm:$0xff]
    %v3728 = vld [vmem:[#allocation8 + $0xfa0] sm:$0xff]
    %v3729 = vld [vmem:[#allocation8 + $0xfa8] sm:$0xff]
    %v3730 = vld [vmem:[#allocation8 + $0xfb0] sm:$0xff]
    %v3731 = vld [vmem:[#allocation8 + $0xfb8] sm:$0xff]
    %v3732 = vld [vmem:[#allocation8 + $0xfc0] sm:$0xff]
    %v3733 = vld [vmem:[#allocation8 + $0xfc8] sm:$0xff]
    %v3734 = vld [vmem:[#allocation8 + $0xfd0] sm:$0xff]
    %v3735 = vld [vmem:[#allocation8 + $0xfd8] sm:$0xff]
    %v3736 = vld [vmem:[#allocation8 + $0xfe0] sm:$0xff]
    %v3737 = vld [vmem:[#allocation8 + $0xfe8] sm:$0xff]
    %v3738 = vld [vmem:[#allocation8 + $0xff0] sm:$0xff]
    %v3739 = vld [vmem:[#allocation8 + $0xff8] sm:$0xff]
    %v3868 = vunpack.c.l.b16 %v3612
    %v3869 = vunpack.c.h.b16 %v3612
    %v3870 = vunpack.c.l.b16 %v3613
    %v3871 = vunpack.c.h.b16 %v3613
    %v3872 = vunpack.c.l.b16 %v3614
    %v3873 = vunpack.c.h.b16 %v3614
    %v3874 = vunpack.c.l.b16 %v3615
    %v3875 = vunpack.c.h.b16 %v3615
    %v3876 = vunpack.c.l.b16 %v3616
    %v3877 = vunpack.c.h.b16 %v3616
    %v3878 = vunpack.c.l.b16 %v3617
    %v3879 = vunpack.c.h.b16 %v3617
    %v3880 = vunpack.c.l.b16 %v3618
    %v3881 = vunpack.c.h.b16 %v3618
    %v3882 = vunpack.c.l.b16 %v3619
    %v3883 = vunpack.c.h.b16 %v3619
    %v3884 = vunpack.c.l.b16 %v3620
    %v3885 = vunpack.c.h.b16 %v3620
    %v3886 = vunpack.c.l.b16 %v3621
    %v3887 = vunpack.c.h.b16 %v3621
    %v3888 = vunpack.c.l.b16 %v3622
    %v3889 = vunpack.c.h.b16 %v3622
    %v3890 = vunpack.c.l.b16 %v3623
    %v3891 = vunpack.c.h.b16 %v3623
    %v3892 = vunpack.c.l.b16 %v3624
    %v3893 = vunpack.c.h.b16 %v3624
    %v3894 = vunpack.c.l.b16 %v3625
    %v3895 = vunpack.c.h.b16 %v3625
    %v3896 = vunpack.c.l.b16 %v3626
    %v3897 = vunpack.c.h.b16 %v3626
    %v3898 = vunpack.c.l.b16 %v3627
    %v3899 = vunpack.c.h.b16 %v3627
    %v3900 = vunpack.c.l.b16 %v3628
    %v3901 = vunpack.c.h.b16 %v3628
    %v3902 = vunpack.c.l.b16 %v3629
    %v3903 = vunpack.c.h.b16 %v3629
    %v3904 = vunpack.c.l.b16 %v3630
    %v3905 = vunpack.c.h.b16 %v3630
    %v3906 = vunpack.c.l.b16 %v3631
    %v3907 = vunpack.c.h.b16 %v3631
    %v3908 = vunpack.c.l.b16 %v3632
    %v3909 = vunpack.c.h.b16 %v3632
    %v3910 = vunpack.c.l.b16 %v3633
    %v3911 = vunpack.c.h.b16 %v3633
    %v3912 = vunpack.c.l.b16 %v3634
    %v3913 = vunpack.c.h.b16 %v3634
    %v3914 = vunpack.c.l.b16 %v3635
    %v3915 = vunpack.c.h.b16 %v3635
    %v3916 = vunpack.c.l.b16 %v3636
    %v3917 = vunpack.c.h.b16 %v3636
    %v3918 = vunpack.c.l.b16 %v3637
    %v3919 = vunpack.c.h.b16 %v3637
    %v3920 = vunpack.c.l.b16 %v3638
    %v3921 = vunpack.c.h.b16 %v3638
    %v3922 = vunpack.c.l.b16 %v3639
    %v3923 = vunpack.c.h.b16 %v3639
    %v3924 = vunpack.c.l.b16 %v3640
    %v3925 = vunpack.c.h.b16 %v3640
    %v3926 = vunpack.c.l.b16 %v3641
    %v3927 = vunpack.c.h.b16 %v3641
    %v3928 = vunpack.c.l.b16 %v3642
    %v3929 = vunpack.c.h.b16 %v3642
    %v3930 = vunpack.c.l.b16 %v3643
    %v3931 = vunpack.c.h.b16 %v3643
    %v3932 = vunpack.c.l.b16 %v3644
    %v3933 = vunpack.c.h.b16 %v3644
    %v3934 = vunpack.c.l.b16 %v3645
    %v3935 = vunpack.c.h.b16 %v3645
    %v3936 = vunpack.c.l.b16 %v3646
    %v3937 = vunpack.c.h.b16 %v3646
    %v3938 = vunpack.c.l.b16 %v3647
    %v3939 = vunpack.c.h.b16 %v3647
    %v3940 = vunpack.c.l.b16 %v3648
    %v3941 = vunpack.c.h.b16 %v3648
    %v3942 = vunpack.c.l.b16 %v3649
    %v3943 = vunpack.c.h.b16 %v3649
    %v3944 = vunpack.c.l.b16 %v3650
    %v3945 = vunpack.c.h.b16 %v3650
    %v3946 = vunpack.c.l.b16 %v3651
    %v3947 = vunpack.c.h.b16 %v3651
    %v3948 = vunpack.c.l.b16 %v3652
    %v3949 = vunpack.c.h.b16 %v3652
    %v3950 = vunpack.c.l.b16 %v3653
    %v3951 = vunpack.c.h.b16 %v3653
    %v3952 = vunpack.c.l.b16 %v3654
    %v3953 = vunpack.c.h.b16 %v3654
    %v3954 = vunpack.c.l.b16 %v3655
    %v3955 = vunpack.c.h.b16 %v3655
    %v3956 = vunpack.c.l.b16 %v3656
    %v3957 = vunpack.c.h.b16 %v3656
    %v3958 = vunpack.c.l.b16 %v3657
    %v3959 = vunpack.c.h.b16 %v3657
    %v3960 = vunpack.c.l.b16 %v3658
    %v3961 = vunpack.c.h.b16 %v3658
    %v3962 = vunpack.c.l.b16 %v3659
    %v3963 = vunpack.c.h.b16 %v3659
    %v3964 = vunpack.c.l.b16 %v3660
    %v3965 = vunpack.c.h.b16 %v3660
    %v3966 = vunpack.c.l.b16 %v3661
    %v3967 = vunpack.c.h.b16 %v3661
    %v3968 = vunpack.c.l.b16 %v3662
    %v3969 = vunpack.c.h.b16 %v3662
    %v3970 = vunpack.c.l.b16 %v3663
    %v3971 = vunpack.c.h.b16 %v3663
    %v3972 = vunpack.c.l.b16 %v3664
    %v3973 = vunpack.c.h.b16 %v3664
    %v3974 = vunpack.c.l.b16 %v3665
    %v3975 = vunpack.c.h.b16 %v3665
    %v3976 = vunpack.c.l.b16 %v3666
    %v3977 = vunpack.c.h.b16 %v3666
    %v3978 = vunpack.c.l.b16 %v3667
    %v3979 = vunpack.c.h.b16 %v3667
    %v3980 = vunpack.c.l.b16 %v3668
    %v3981 = vunpack.c.h.b16 %v3668
    %v3982 = vunpack.c.l.b16 %v3669
    %v3983 = vunpack.c.h.b16 %v3669
    %v3984 = vunpack.c.l.b16 %v3670
    %v3985 = vunpack.c.h.b16 %v3670
    %v3986 = vunpack.c.l.b16 %v3671
    %v3987 = vunpack.c.h.b16 %v3671
    %v3988 = vunpack.c.l.b16 %v3672
    %v3989 = vunpack.c.h.b16 %v3672
    %v3990 = vunpack.c.l.b16 %v3673
    %v3991 = vunpack.c.h.b16 %v3673
    %v3992 = vunpack.c.l.b16 %v3674
    %v3993 = vunpack.c.h.b16 %v3674
    %v3994 = vunpack.c.l.b16 %v3675
    %v3995 = vunpack.c.h.b16 %v3675
    %v3996 = vunpack.c.l.b16 %v3676
    %v3997 = vunpack.c.h.b16 %v3676
    %v3998 = vunpack.c.l.b16 %v3677
    %v3999 = vunpack.c.h.b16 %v3677
    %v4000 = vunpack.c.l.b16 %v3678
    %v4001 = vunpack.c.h.b16 %v3678
    %v4002 = vunpack.c.l.b16 %v3679
    %v4003 = vunpack.c.h.b16 %v3679
    %v4004 = vunpack.c.l.b16 %v3680
    %v4005 = vunpack.c.h.b16 %v3680
    %v4006 = vunpack.c.l.b16 %v3681
    %v4007 = vunpack.c.h.b16 %v3681
    %v4008 = vunpack.c.l.b16 %v3682
    %v4009 = vunpack.c.h.b16 %v3682
    %v4010 = vunpack.c.l.b16 %v3683
    %v4011 = vunpack.c.h.b16 %v3683
    %v4012 = vunpack.c.l.b16 %v3684
    %v4013 = vunpack.c.h.b16 %v3684
    %v4014 = vunpack.c.l.b16 %v3685
    %v4015 = vunpack.c.h.b16 %v3685
    %v4016 = vunpack.c.l.b16 %v3686
    %v4017 = vunpack.c.h.b16 %v3686
    %v4018 = vunpack.c.l.b16 %v3687
    %v4019 = vunpack.c.h.b16 %v3687
    %v4020 = vunpack.c.l.b16 %v3688
    %v4021 = vunpack.c.h.b16 %v3688
    %v4022 = vunpack.c.l.b16 %v3689
    %v4023 = vunpack.c.h.b16 %v3689
    %v4024 = vunpack.c.l.b16 %v3690
    %v4025 = vunpack.c.h.b16 %v3690
    %v4026 = vunpack.c.l.b16 %v3691
    %v4027 = vunpack.c.h.b16 %v3691
    %v4028 = vunpack.c.l.b16 %v3692
    %v4029 = vunpack.c.h.b16 %v3692
    %v4030 = vunpack.c.l.b16 %v3693
    %v4031 = vunpack.c.h.b16 %v3693
    %v4032 = vunpack.c.l.b16 %v3694
    %v4033 = vunpack.c.h.b16 %v3694
    %v4034 = vunpack.c.l.b16 %v3695
    %v4035 = vunpack.c.h.b16 %v3695
    %v4036 = vunpack.c.l.b16 %v3696
    %v4037 = vunpack.c.h.b16 %v3696
    %v4038 = vunpack.c.l.b16 %v3697
    %v4039 = vunpack.c.h.b16 %v3697
    %v4040 = vunpack.c.l.b16 %v3698
    %v4041 = vunpack.c.h.b16 %v3698
    %v4042 = vunpack.c.l.b16 %v3699
    %v4043 = vunpack.c.h.b16 %v3699
    %v4044 = vunpack.c.l.b16 %v3700
    %v4045 = vunpack.c.h.b16 %v3700
    %v4046 = vunpack.c.l.b16 %v3701
    %v4047 = vunpack.c.h.b16 %v3701
    %v4048 = vunpack.c.l.b16 %v3702
    %v4049 = vunpack.c.h.b16 %v3702
    %v4050 = vunpack.c.l.b16 %v3703
    %v4051 = vunpack.c.h.b16 %v3703
    %v4052 = vunpack.c.l.b16 %v3704
    %v4053 = vunpack.c.h.b16 %v3704
    %v4054 = vunpack.c.l.b16 %v3705
    %v4055 = vunpack.c.h.b16 %v3705
    %v4056 = vunpack.c.l.b16 %v3706
    %v4057 = vunpack.c.h.b16 %v3706
    %v4058 = vunpack.c.l.b16 %v3707
    %v4059 = vunpack.c.h.b16 %v3707
    %v4060 = vunpack.c.l.b16 %v3708
    %v4061 = vunpack.c.h.b16 %v3708
    %v4062 = vunpack.c.l.b16 %v3709
    %v4063 = vunpack.c.h.b16 %v3709
    %v4064 = vunpack.c.l.b16 %v3710
    %v4065 = vunpack.c.h.b16 %v3710
    %v4066 = vunpack.c.l.b16 %v3711
    %v4067 = vunpack.c.h.b16 %v3711
    %v4068 = vunpack.c.l.b16 %v3712
    %v4069 = vunpack.c.h.b16 %v3712
    %v4070 = vunpack.c.l.b16 %v3713
    %v4071 = vunpack.c.h.b16 %v3713
    %v4072 = vunpack.c.l.b16 %v3714
    %v4073 = vunpack.c.h.b16 %v3714
    %v4074 = vunpack.c.l.b16 %v3715
    %v4075 = vunpack.c.h.b16 %v3715
    %v4076 = vunpack.c.l.b16 %v3716
    %v4077 = vunpack.c.h.b16 %v3716
    %v4078 = vunpack.c.l.b16 %v3717
    %v4079 = vunpack.c.h.b16 %v3717
    %v4080 = vunpack.c.l.b16 %v3718
    %v4081 = vunpack.c.h.b16 %v3718
    %v4082 = vunpack.c.l.b16 %v3719
    %v4083 = vunpack.c.h.b16 %v3719
    %v4084 = vunpack.c.l.b16 %v3720
    %v4085 = vunpack.c.h.b16 %v3720
    %v4086 = vunpack.c.l.b16 %v3721
    %v4087 = vunpack.c.h.b16 %v3721
    %v4088 = vunpack.c.l.b16 %v3722
    %v4089 = vunpack.c.h.b16 %v3722
    %v4090 = vunpack.c.l.b16 %v3723
    %v4091 = vunpack.c.h.b16 %v3723
    %v4092 = vunpack.c.l.b16 %v3724
    %v4093 = vunpack.c.h.b16 %v3724
    %v4094 = vunpack.c.l.b16 %v3725
    %v4095 = vunpack.c.h.b16 %v3725
    %v4096 = vunpack.c.l.b16 %v3726
    %v4097 = vunpack.c.h.b16 %v3726
    %v4098 = vunpack.c.l.b16 %v3727
    %v4099 = vunpack.c.h.b16 %v3727
    %v4100 = vunpack.c.l.b16 %v3728
    %v4101 = vunpack.c.h.b16 %v3728
    %v4102 = vunpack.c.l.b16 %v3729
    %v4103 = vunpack.c.h.b16 %v3729
    %v4104 = vunpack.c.l.b16 %v3730
    %v4105 = vunpack.c.h.b16 %v3730
    %v4106 = vunpack.c.l.b16 %v3731
    %v4107 = vunpack.c.h.b16 %v3731
    %v4108 = vunpack.c.l.b16 %v3732
    %v4109 = vunpack.c.h.b16 %v3732
    %v4110 = vunpack.c.l.b16 %v3733
    %v4111 = vunpack.c.h.b16 %v3733
    %v4112 = vunpack.c.l.b16 %v3734
    %v4113 = vunpack.c.h.b16 %v3734
    %v4114 = vunpack.c.l.b16 %v3735
    %v4115 = vunpack.c.h.b16 %v3735
    %v4116 = vunpack.c.l.b16 %v3736
    %v4117 = vunpack.c.h.b16 %v3736
    %v4118 = vunpack.c.l.b16 %v3737
    %v4119 = vunpack.c.h.b16 %v3737
    %v4120 = vunpack.c.l.b16 %v3738
    %v4121 = vunpack.c.h.b16 %v3738
    %v4122 = vunpack.c.l.b16 %v3739
    %v4123 = vunpack.c.h.b16 %v3739
    %v4124 = vpack.c.b16 %v3872, %v3868
    %v4125 = vpack.c.b16 %v3873, %v3869
    %v4126 = vpack.c.b16 %v3874, %v3870
    %v4127 = vpack.c.b16 %v3875, %v3871
    %v4128 = vpack.c.b16 %v3880, %v3876
    %v4129 = vpack.c.b16 %v3881, %v3877
    %v4130 = vpack.c.b16 %v3882, %v3878
    %v4131 = vpack.c.b16 %v3883, %v3879
    %v4132 = vpack.c.b16 %v3888, %v3884
    %v4133 = vpack.c.b16 %v3889, %v3885
    %v4134 = vpack.c.b16 %v3890, %v3886
    %v4135 = vpack.c.b16 %v3891, %v3887
    %v4136 = vpack.c.b16 %v3896, %v3892
    %v4137 = vpack.c.b16 %v3897, %v3893
    %v4138 = vpack.c.b16 %v3898, %v3894
    %v4139 = vpack.c.b16 %v3899, %v3895
    %v4140 = vpack.c.b16 %v3904, %v3900
    %v4141 = vpack.c.b16 %v3905, %v3901
    %v4142 = vpack.c.b16 %v3906, %v3902
    %v4143 = vpack.c.b16 %v3907, %v3903
    %v4144 = vpack.c.b16 %v3912, %v3908
    %v4145 = vpack.c.b16 %v3913, %v3909
    %v4146 = vpack.c.b16 %v3914, %v3910
    %v4147 = vpack.c.b16 %v3915, %v3911
    %v4148 = vpack.c.b16 %v3920, %v3916
    %v4149 = vpack.c.b16 %v3921, %v3917
    %v4150 = vpack.c.b16 %v3922, %v3918
    %v4151 = vpack.c.b16 %v3923, %v3919
    %v4152 = vpack.c.b16 %v3928, %v3924
    %v4153 = vpack.c.b16 %v3929, %v3925
    %v4154 = vpack.c.b16 %v3930, %v3926
    %v4155 = vpack.c.b16 %v3931, %v3927
    %v4156 = vpack.c.b16 %v3936, %v3932
    %v4157 = vpack.c.b16 %v3937, %v3933
    %v4158 = vpack.c.b16 %v3938, %v3934
    %v4159 = vpack.c.b16 %v3939, %v3935
    %v4160 = vpack.c.b16 %v3944, %v3940
    %v4161 = vpack.c.b16 %v3945, %v3941
    %v4162 = vpack.c.b16 %v3946, %v3942
    %v4163 = vpack.c.b16 %v3947, %v3943
    %v4164 = vpack.c.b16 %v3952, %v3948
    %v4165 = vpack.c.b16 %v3953, %v3949
    %v4166 = vpack.c.b16 %v3954, %v3950
    %v4167 = vpack.c.b16 %v3955, %v3951
    %v4168 = vpack.c.b16 %v3960, %v3956
    %v4169 = vpack.c.b16 %v3961, %v3957
    %v4170 = vpack.c.b16 %v3962, %v3958
    %v4171 = vpack.c.b16 %v3963, %v3959
    %v4172 = vpack.c.b16 %v3968, %v3964
    %v4173 = vpack.c.b16 %v3969, %v3965
    %v4174 = vpack.c.b16 %v3970, %v3966
    %v4175 = vpack.c.b16 %v3971, %v3967
    %v4176 = vpack.c.b16 %v3976, %v3972
    %v4177 = vpack.c.b16 %v3977, %v3973
    %v4178 = vpack.c.b16 %v3978, %v3974
    %v4179 = vpack.c.b16 %v3979, %v3975
    %v4180 = vpack.c.b16 %v3984, %v3980
    %v4181 = vpack.c.b16 %v3985, %v3981
    %v4182 = vpack.c.b16 %v3986, %v3982
    %v4183 = vpack.c.b16 %v3987, %v3983
    %v4184 = vpack.c.b16 %v3992, %v3988
    %v4185 = vpack.c.b16 %v3993, %v3989
    %v4186 = vpack.c.b16 %v3994, %v3990
    %v4187 = vpack.c.b16 %v3995, %v3991
    %v4188 = vpack.c.b16 %v4000, %v3996
    %v4189 = vpack.c.b16 %v4001, %v3997
    %v4190 = vpack.c.b16 %v4002, %v3998
    %v4191 = vpack.c.b16 %v4003, %v3999
    %v4192 = vpack.c.b16 %v4008, %v4004
    %v4193 = vpack.c.b16 %v4009, %v4005
    %v4194 = vpack.c.b16 %v4010, %v4006
    %v4195 = vpack.c.b16 %v4011, %v4007
    %v4196 = vpack.c.b16 %v4016, %v4012
    %v4197 = vpack.c.b16 %v4017, %v4013
    %v4198 = vpack.c.b16 %v4018, %v4014
    %v4199 = vpack.c.b16 %v4019, %v4015
    %v4200 = vpack.c.b16 %v4024, %v4020
    %v4201 = vpack.c.b16 %v4025, %v4021
    %v4202 = vpack.c.b16 %v4026, %v4022
    %v4203 = vpack.c.b16 %v4027, %v4023
    %v4204 = vpack.c.b16 %v4032, %v4028
    %v4205 = vpack.c.b16 %v4033, %v4029
    %v4206 = vpack.c.b16 %v4034, %v4030
    %v4207 = vpack.c.b16 %v4035, %v4031
    %v4208 = vpack.c.b16 %v4040, %v4036
    %v4209 = vpack.c.b16 %v4041, %v4037
    %v4210 = vpack.c.b16 %v4042, %v4038
    %v4211 = vpack.c.b16 %v4043, %v4039
    %v4212 = vpack.c.b16 %v4048, %v4044
    %v4213 = vpack.c.b16 %v4049, %v4045
    %v4214 = vpack.c.b16 %v4050, %v4046
    %v4215 = vpack.c.b16 %v4051, %v4047
    %v4216 = vpack.c.b16 %v4056, %v4052
    %v4217 = vpack.c.b16 %v4057, %v4053
    %v4218 = vpack.c.b16 %v4058, %v4054
    %v4219 = vpack.c.b16 %v4059, %v4055
    %v4220 = vpack.c.b16 %v4064, %v4060
    %v4221 = vpack.c.b16 %v4065, %v4061
    %v4222 = vpack.c.b16 %v4066, %v4062
    %v4223 = vpack.c.b16 %v4067, %v4063
    %v4224 = vpack.c.b16 %v4072, %v4068
    %v4225 = vpack.c.b16 %v4073, %v4069
    %v4226 = vpack.c.b16 %v4074, %v4070
    %v4227 = vpack.c.b16 %v4075, %v4071
    %v4228 = vpack.c.b16 %v4080, %v4076
    %v4229 = vpack.c.b16 %v4081, %v4077
    %v4230 = vpack.c.b16 %v4082, %v4078
    %v4231 = vpack.c.b16 %v4083, %v4079
    %v4232 = vpack.c.b16 %v4088, %v4084
    %v4233 = vpack.c.b16 %v4089, %v4085
    %v4234 = vpack.c.b16 %v4090, %v4086
    %v4235 = vpack.c.b16 %v4091, %v4087
    %v4236 = vpack.c.b16 %v4096, %v4092
    %v4237 = vpack.c.b16 %v4097, %v4093
    %v4238 = vpack.c.b16 %v4098, %v4094
    %v4239 = vpack.c.b16 %v4099, %v4095
    %v4240 = vpack.c.b16 %v4104, %v4100
    %v4241 = vpack.c.b16 %v4105, %v4101
    %v4242 = vpack.c.b16 %v4106, %v4102
    %v4243 = vpack.c.b16 %v4107, %v4103
    %v4244 = vpack.c.b16 %v4112, %v4108
    %v4245 = vpack.c.b16 %v4113, %v4109
    %v4246 = vpack.c.b16 %v4114, %v4110
    %v4247 = vpack.c.b16 %v4115, %v4111
    %v4248 = vpack.c.b16 %v4120, %v4116
    %v4249 = vpack.c.b16 %v4121, %v4117
    %v4250 = vpack.c.b16 %v4122, %v4118
    %v4251 = vpack.c.b16 %v4123, %v4119
    %4380 = vmatprep.subr.bf16.mxu0 %v4125
    %4381 = vmatpush1.bf16.msra.mxu0 %v4124
    %4382 = vmatprep.subr.bf16.mxu0 %v4129
    %4383 = vmatpush1.bf16.msra.mxu0 %v4128
    %4384 = vmatprep.subr.bf16.mxu0 %v4133
    %4385 = vmatpush1.bf16.msra.mxu0 %v4132
    %4386 = vmatprep.subr.bf16.mxu0 %v4137
    %4387 = vmatpush1.bf16.msra.mxu0 %v4136
    %4388 = vmatprep.subr.bf16.mxu0 %v4141
    %4389 = vmatpush1.bf16.msra.mxu0 %v4140
    %4390 = vmatprep.subr.bf16.mxu0 %v4145
    %4391 = vmatpush1.bf16.msra.mxu0 %v4144
    %4392 = vmatprep.subr.bf16.mxu0 %v4149
    %4393 = vmatpush1.bf16.msra.mxu0 %v4148
    %4394 = vmatprep.subr.bf16.mxu0 %v4153
    %4395 = vmatpush1.bf16.msra.mxu0 %v4152
    %4396 = vmatprep.subr.bf16.mxu0 %v4157
    %4397 = vmatpush1.bf16.msra.mxu0 %v4156
    %4398 = vmatprep.subr.bf16.mxu0 %v4161
    %4399 = vmatpush1.bf16.msra.mxu0 %v4160
    %4400 = vmatprep.subr.bf16.mxu0 %v4165
    %4401 = vmatpush1.bf16.msra.mxu0 %v4164
    %4402 = vmatprep.subr.bf16.mxu0 %v4169
    %4403 = vmatpush1.bf16.msra.mxu0 %v4168
    %4404 = vmatprep.subr.bf16.mxu0 %v4173
    %4405 = vmatpush1.bf16.msra.mxu0 %v4172
    %4406 = vmatprep.subr.bf16.mxu0 %v4177
    %4407 = vmatpush1.bf16.msra.mxu0 %v4176
    %4408 = vmatprep.subr.bf16.mxu0 %v4181
    %4409 = vmatpush1.bf16.msra.mxu0 %v4180
    %4410 = vmatprep.subr.bf16.mxu0 %v4185
    %4411 = vmatpush1.bf16.msra.mxu0 %v4184
    %4412 = vmatprep.mubr.bf16.mxu0 %v3609
    %4413 = vmatmul.mubr.bf16.gmra.mrb[0].mxu0 %v3608
    %v4414 = vpop.f32.mrb[0].mxu0
    %v4415 = vadd.f32 0.0, %v4414
    %v4416 = vpop.f32.mrb[0].mxu0
    %v4417 = vadd.f32 0.0, %v4416
    %v4418 = vpop.f32.mrb[0].mxu0
    %v4419 = vadd.f32 0.0, %v4418
    %v4420 = vpop.f32.mrb[0].mxu0
    %v4421 = vadd.f32 0.0, %v4420
    %4422 = vdwg.mxu0
    %4423 = vmatprep.subr.bf16.mxu0 %v4189
    %4424 = vmatpush1.bf16.msra.mxu0 %v4188
    %4425 = vmatprep.subr.bf16.mxu0 %v4193
    %4426 = vmatpush1.bf16.msra.mxu0 %v4192
    %4427 = vmatprep.subr.bf16.mxu0 %v4197
    %4428 = vmatpush1.bf16.msra.mxu0 %v4196
    %4429 = vmatprep.subr.bf16.mxu0 %v4201
    %4430 = vmatpush1.bf16.msra.mxu0 %v4200
    %4431 = vmatprep.subr.bf16.mxu0 %v4205
    %4432 = vmatpush1.bf16.msra.mxu0 %v4204
    %4433 = vmatprep.subr.bf16.mxu0 %v4209
    %4434 = vmatpush1.bf16.msra.mxu0 %v4208
    %4435 = vmatprep.subr.bf16.mxu0 %v4213
    %4436 = vmatpush1.bf16.msra.mxu0 %v4212
    %4437 = vmatprep.subr.bf16.mxu0 %v4217
    %4438 = vmatpush1.bf16.msra.mxu0 %v4216
    %4439 = vmatprep.subr.bf16.mxu0 %v4221
    %4440 = vmatpush1.bf16.msra.mxu0 %v4220
    %4441 = vmatprep.subr.bf16.mxu0 %v4225
    %4442 = vmatpush1.bf16.msra.mxu0 %v4224
    %4443 = vmatprep.subr.bf16.mxu0 %v4229
    %4444 = vmatpush1.bf16.msra.mxu0 %v4228
    %4445 = vmatprep.subr.bf16.mxu0 %v4233
    %4446 = vmatpush1.bf16.msra.mxu0 %v4232
    %4447 = vmatprep.subr.bf16.mxu0 %v4237
    %4448 = vmatpush1.bf16.msra.mxu0 %v4236
    %4449 = vmatprep.subr.bf16.mxu0 %v4241
    %4450 = vmatpush1.bf16.msra.mxu0 %v4240
    %4451 = vmatprep.subr.bf16.mxu0 %v4245
    %4452 = vmatpush1.bf16.msra.mxu0 %v4244
    %4453 = vmatprep.subr.bf16.mxu0 %v4249
    %4454 = vmatpush1.bf16.msra.mxu0 %v4248
    %4455 = vmatprep.mubr.bf16.mxu0 %v3611
    %4456 = vmatmul.mubr.bf16.gmra.mrb[0].mxu0 %v3610
    %v4457 = vpop.f32.mrb[0].mxu0
    %v4458 = vadd.f32 %v4415, %v4457
    %v4459 = vpop.f32.mrb[0].mxu0
    %v4460 = vadd.f32 %v4417, %v4459
    %v4461 = vpop.f32.mrb[0].mxu0
    %v4462 = vadd.f32 %v4419, %v4461
    %v4463 = vpop.f32.mrb[0].mxu0
    %v4464 = vadd.f32 %v4421, %v4463
    %4465 = vdwg.mxu0
    %4466 = vmatprep.subr.bf16.mxu0 %v4127
    %4467 = vmatpush1.bf16.msra.mxu0 %v4126
    %4468 = vmatprep.subr.bf16.mxu0 %v4131
    %4469 = vmatpush1.bf16.msra.mxu0 %v4130
    %4470 = vmatprep.subr.bf16.mxu0 %v4135
    %4471 = vmatpush1.bf16.msra.mxu0 %v4134
    %4472 = vmatprep.subr.bf16.mxu0 %v4139
    %4473 = vmatpush1.bf16.msra.mxu0 %v4138
    %4474 = vmatprep.subr.bf16.mxu0 %v4143
    %4475 = vmatpush1.bf16.msra.mxu0 %v4142
    %4476 = vmatprep.subr.bf16.mxu0 %v4147
    %4477 = vmatpush1.bf16.msra.mxu0 %v4146
    %4478 = vmatprep.subr.bf16.mxu0 %v4151
    %4479 = vmatpush1.bf16.msra.mxu0 %v4150
    %4480 = vmatprep.subr.bf16.mxu0 %v4155
    %4481 = vmatpush1.bf16.msra.mxu0 %v4154
    %4482 = vmatprep.subr.bf16.mxu0 %v4159
    %4483 = vmatpush1.bf16.msra.mxu0 %v4158
    %4484 = vmatprep.subr.bf16.mxu0 %v4163
    %4485 = vmatpush1.bf16.msra.mxu0 %v4162
    %4486 = vmatprep.subr.bf16.mxu0 %v4167
    %4487 = vmatpush1.bf16.msra.mxu0 %v4166
    %4488 = vmatprep.subr.bf16.mxu0 %v4171
    %4489 = vmatpush1.bf16.msra.mxu0 %v4170
    %4490 = vmatprep.subr.bf16.mxu0 %v4175
    %4491 = vmatpush1.bf16.msra.mxu0 %v4174
    %4492 = vmatprep.subr.bf16.mxu0 %v4179
    %4493 = vmatpush1.bf16.msra.mxu0 %v4178
    %4494 = vmatprep.subr.bf16.mxu0 %v4183
    %4495 = vmatpush1.bf16.msra.mxu0 %v4182
    %4496 = vmatprep.subr.bf16.mxu0 %v4187
    %4497 = vmatpush1.bf16.msra.mxu0 %v4186
    %4498 = vmatprep.mubr.bf16.mxu0 %v3609
    %4499 = vmatmul.mubr.bf16.gmra.mrb[0].mxu0 %v3608
    %v4500 = vpop.f32.mrb[0].mxu0
    %v4501 = vadd.f32 0.0, %v4500
    %v4502 = vpop.f32.mrb[0].mxu0
    %v4503 = vadd.f32 0.0, %v4502
    %v4504 = vpop.f32.mrb[0].mxu0
    %v4505 = vadd.f32 0.0, %v4504
    %v4506 = vpop.f32.mrb[0].mxu0
    %v4507 = vadd.f32 0.0, %v4506
    %4508 = vdwg.mxu0
    %4509 = vmatprep.subr.bf16.mxu0 %v4191
    %4510 = vmatpush1.bf16.msra.mxu0 %v4190
    %4511 = vmatprep.subr.bf16.mxu0 %v4195
    %4512 = vmatpush1.bf16.msra.mxu0 %v4194
    %4513 = vmatprep.subr.bf16.mxu0 %v4199
    %4514 = vmatpush1.bf16.msra.mxu0 %v4198
    %4515 = vmatprep.subr.bf16.mxu0 %v4203
    %4516 = vmatpush1.bf16.msra.mxu0 %v4202
    %4517 = vmatprep.subr.bf16.mxu0 %v4207
    %4518 = vmatpush1.bf16.msra.mxu0 %v4206
    %4519 = vmatprep.subr.bf16.mxu0 %v4211
    %4520 = vmatpush1.bf16.msra.mxu0 %v4210
    %4521 = vmatprep.subr.bf16.mxu0 %v4215
    %4522 = vmatpush1.bf16.msra.mxu0 %v4214
    %4523 = vmatprep.subr.bf16.mxu0 %v4219
    %4524 = vmatpush1.bf16.msra.mxu0 %v4218
    %4525 = vmatprep.subr.bf16.mxu0 %v4223
    %4526 = vmatpush1.bf16.msra.mxu0 %v4222
    %4527 = vmatprep.subr.bf16.mxu0 %v4227
    %4528 = vmatpush1.bf16.msra.mxu0 %v4226
    %4529 = vmatprep.subr.bf16.mxu0 %v4231
    %4530 = vmatpush1.bf16.msra.mxu0 %v4230
    %4531 = vmatprep.subr.bf16.mxu0 %v4235
    %4532 = vmatpush1.bf16.msra.mxu0 %v4234
    %4533 = vmatprep.subr.bf16.mxu0 %v4239
    %4534 = vmatpush1.bf16.msra.mxu0 %v4238
    %4535 = vmatprep.subr.bf16.mxu0 %v4243
    %4536 = vmatpush1.bf16.msra.mxu0 %v4242
    %4537 = vmatprep.subr.bf16.mxu0 %v4247
    %4538 = vmatpush1.bf16.msra.mxu0 %v4246
    %4539 = vmatprep.subr.bf16.mxu0 %v4251
    %4540 = vmatpush1.bf16.msra.mxu0 %v4250
    %4541 = vmatprep.mubr.bf16.mxu0 %v3611
    %4542 = vmatmul.mubr.bf16.gmra.mrb[0].mxu0 %v3610
    %v4543 = vpop.f32.mrb[0].mxu0
    %v4544 = vadd.f32 %v4501, %v4543
    %v4545 = vpop.f32.mrb[0].mxu0
    %v4546 = vadd.f32 %v4503, %v4545
    %v4547 = vpop.f32.mrb[0].mxu0
    %v4548 = vadd.f32 %v4505, %v4547
    %v4549 = vpop.f32.mrb[0].mxu0
    %v4550 = vadd.f32 %v4507, %v4549
    %4551 = vdwg.mxu0
    %v4552 = vadd.f32 %v3436, %v4458
    %v4553 = vadd.f32 %v3437, %v4460
    %v4554 = vadd.f32 %v3438, %v4544
    %v4555 = vadd.f32 %v3439, %v4546
    %v4556 = vadd.f32 %v3440, %v4462
    %v4557 = vadd.f32 %v3441, %v4464
    %v4558 = vadd.f32 %v3442, %v4548
    %v4559 = vadd.f32 %v3443, %v4550
    %v4560 = vld [vmem:[#allocation10] sm:$0xf]
    %v4562 = vlaneseq
    %v4563 = vshrl.u32 %v4562, 7
    %v4564 = vsub.s32 0, %v4563
    %v4565 = vrot.slane %v4560, %v4564
    %v4566 = vlaneseq
    %v4567 = vshrl.u32 %v4566, 7
    %v4568 = vsub.s32 1, %v4567
    %v4569 = vrot.slane %v4560, %v4568
    %v4570 = vlaneseq
    %v4571 = vshrl.u32 %v4570, 7
    %v4572 = vsub.s32 2, %v4571
    %v4573 = vrot.slane %v4560, %v4572
    %v4574 = vlaneseq
    %v4575 = vshrl.u32 %v4574, 7
    %v4576 = vsub.s32 3, %v4575
    %v4577 = vrot.slane %v4560, %v4576
    %v4582 = vadd.f32 %v4552, %v4565
    %v4583 = vadd.f32 %v4553, %v4569
    %v4584 = vadd.f32 %v4554, %v4573
    %v4585 = vadd.f32 %v4555, %v4577
    %v4586 = vadd.f32 %v4556, %v4565
    %v4587 = vadd.f32 %v4557, %v4569
    %v4588 = vadd.f32 %v4558, %v4573
    %v4589 = vadd.f32 %v4559, %v4577
    %v4590 = vtanh.pop %v4582
    %v4591 = vtanh.pop %v4583
    %v4592 = vtanh.pop %v4584
    %v4593 = vtanh.pop %v4585
    %v4594 = vtanh.pop %v4586
    %v4595 = vtanh.pop %v4587
    %v4596 = vtanh.pop %v4588
    %v4597 = vtanh.pop %v4589
    %v4598 = vld [vmem:[#allocation11] sm:$0xf]
    %v4600 = vlaneseq
    %v4601 = vshrl.u32 %v4600, 7
    %v4602 = vsub.s32 0, %v4601
    %v4603 = vrot.slane %v4598, %v4602
    %v4604 = vlaneseq
    %v4605 = vshrl.u32 %v4604, 7
    %v4606 = vsub.s32 1, %v4605
    %v4607 = vrot.slane %v4598, %v4606
    %v4608 = vlaneseq
    %v4609 = vshrl.u32 %v4608, 7
    %v4610 = vsub.s32 2, %v4609
    %v4611 = vrot.slane %v4598, %v4610
    %v4612 = vlaneseq
    %v4613 = vshrl.u32 %v4612, 7
    %v4614 = vsub.s32 3, %v4613
    %v4615 = vrot.slane %v4598, %v4614
    %v4620 = vmul.f32 %v4590, %v4603
    %v4621 = vmul.f32 %v4591, %v4607
    %v4622 = vmul.f32 %v4592, %v4611
    %v4623 = vmul.f32 %v4593, %v4615
    %v4624 = vmul.f32 %v4594, %v4603
    %v4625 = vmul.f32 %v4595, %v4607
    %v4626 = vmul.f32 %v4596, %v4611
    %v4627 = vmul.f32 %v4597, %v4615
    %v4628 = vadd.f32 %v4620, %v4621
    %v4629 = vadd.f32 %v4628, %v4622
    %v4630 = vadd.f32 %v4629, %v4623
    %4631 = vadd.xlane.f32.xlu0 %v4630
    %v4632 = vpop.xlane.xlu0 %4631
    %v4633 = vadd.f32 %v4624, %v4625
    %v4634 = vadd.f32 %v4633, %v4626
    %v4635 = vadd.f32 %v4634, %v4627
    %4636 = vadd.xlane.f32.xlu0 %v4635
    %v4637 = vpop.xlane.xlu0 %4636
    %v4638 = vld [vmem:[#allocation2] sm:$0x1]
    %v4640 = vlaneseq
    %v4641 = vshrl.u32 %v4640, 7
    %v4642 = vsub.s32 0, %v4641
    %v4643 = vrot.slane %v4638, %v4642
    %v4645 = vadd.f32 %v4632, %v4643
    %v4646 = vadd.f32 %v4637, %v4643
    %vm4647 = vcmask 7168
    %4648 = vst.msk [vmem:[%s7] sm:$0xff] %vm4647, %v4645
    %4649 = vst.msk [vmem:[%s7 + $0x8] sm:$0xff] %vm4647, %v4646
    // Predicated region
    $region54: #{tpu_custom_call.1} parent=1 // pred_check
      _
    $region55: #{tpu_custom_call.1} parent=1 // pred_check_branch
      %4651 = sbr.rel (0) target = $region57
    $region56: #{tpu_custom_call.1} parent=1 // pred_region
      _
    $region57: #{tpu_custom_call.1} parent=1 // pred_fallthru
      _
    // Predicated region
    $region58: #{tpu_custom_call.1} parent=1 // pred_check
      _
    $region59: #{tpu_custom_call.1} parent=1 // pred_check_branch
      %4653 = sbr.rel (0) target = $region61
    $region60: #{tpu_custom_call.1} parent=1 // pred_region
      _
    $region61: #{tpu_custom_call.1} parent=1 // pred_fallthru
      _
    %4654 = vsyncpa [#allocation4], 1
    %4655 = vsyncpa [#allocation6], 1
    %4656 = vsyncpa [#allocation9], 1
    %4657 = vsyncpa [#allocation12], 1

</llo_original>
